<compile_context>
chip_gen: v7x
topology: tpu7x:2x2x1
jax: 0.10.0
libtpu: 0.0.40
codegen_flags: <defaults>
</compile_context>

<pallas_src>
import functools

import jax
import jax.numpy as jnp
from jax.experimental import pallas as pl
from jax.experimental.pallas import tpu as pltpu

NEG_SLOPE = 0.01  # nn.LeakyReLU default negative_slope


def _leaky(t):
    return jnp.where(t >= 0, t, NEG_SLOPE * t)


def _round_up(n, m):
    return ((n + m - 1) // m) * m


def _device_kind():
    try:
        return jax.devices()[0].device_kind.lower()
    except Exception:
        return ""


def _has_256_mxu():
    k = _device_kind()
    return ("v6" in k) or ("v7" in k)


# ----------------------------- shared per-layer math -----------------------------
def _layer_step(e, wc, wrt, aknn_t, appi, bc_col, br_row, cd):
    """One encoder layer on the un-transposed embedding E (f32 in, f32 out).

    cd = parameter compute dtype (f32 or bf16).  The first matmul of each chain emits
    `cd` directly (bf16 on the fast path, no extra full-tile cast); the second matmul
    accumulates in f32 on the MXU.
    """
    # cols GCN, transpose-folded:  E <- LeakyReLU( Wc @ E @ Â_knn^T + bc[:, None] )
    t = jnp.dot(wc, e.astype(cd), preferred_element_type=cd)
    t = jnp.dot(t, aknn_t, preferred_element_type=jnp.float32) + bc_col
    e = _leaky(t)
    # rows GCN:                    E <- LeakyReLU( Â_ppi @ (E @ Wr^T) + br[None, :] )
    t = jnp.dot(e.astype(cd), wrt, preferred_element_type=cd)
    t = jnp.dot(appi, t, preferred_element_type=jnp.float32) + br_row
    return _leaky(t)


# ----------------------------- fused kernel (no grid) -----------------------------
def _fused_kernel(x_ref, aknn_ref, appi_ref, wc_ref, wrt_ref, bc_ref, br_ref, o_ref,
                  *, num_layers):
    """Single invocation; all layers' parameters are VMEM-resident."""
    cd = wc_ref.dtype
    aknn_t = aknn_ref[...]                 # (Rp, Rp)  Â_knn^T
    appi = appi_ref[...]                   # (Pp, Pp)  Â_ppi
    e = x_ref[...]                         # (Pp, Rp)  f32
    for l in range(num_layers):            # L is small & static -> fully unrolled
        e = _layer_step(e, wc_ref[l], wrt_ref[l], aknn_t, appi,
                        bc_ref[l], br_ref[l], cd)
    o_ref[...] = e                         # f32, lane-dense unmasked store


# ------------------------- streamed kernel (grid over layers) ----------------------
def _streamed_kernel(x_ref, aknn_ref, appi_ref, wc_ref, wrt_ref, bc_ref, br_ref, o_ref):
    """One grid step == one layer; weights are streamed, E lives in the resident
    output block, biases/adjacencies are resident (constant index maps)."""
    layer = pl.program_id(0)

    @pl.when(layer == 0)
    def _init():
        o_ref[...] = x_ref[...]            # seed E with the (padded) input features

    cd = wc_ref.dtype
    o_ref[...] = _layer_step(o_ref[...],
                             wc_ref[0],            # (Pp, Pp)   this layer's Wc
                             wrt_ref[0],           # (Rp, Rp)   this layer's Wr^T
                             aknn_ref[...],        # (Rp, Rp)   Â_knn^T (resident)
                             appi_ref[...],        # (Pp, Pp)   Â_ppi   (resident)
                             bc_ref[layer],        # (Pp, 1)    resident, dyn-indexed
                             br_ref[layer],        # (1, Rp)
                             cd)


# ----------------------------------- wrapper ---------------------------------------
def mutael_encoder(x, a_knn, a_ppi, wc, wr, bc, br, *,
                   param_dtype=None, lane=None, force_streamed=False):
    """x: (P, R). a_knn: (R,R). a_ppi: (P,P). wc: (L,P,P). wr: (L,R,R).
    bc: (L,P). br: (L,R). Returns the (P, R) f32 embedding."""
    P, R = x.shape
    L = wc.shape[0]

    if param_dtype is None:
        # bf16 weights/adjacencies (f32 accumulation) on v6e/v7x 256x256 MXUs.
        param_dtype = jnp.bfloat16 if _has_256_mxu() else jnp.float32
    if lane is None:
        # 256-multiple tiles feed the v6e/v7x MXU fully; 128 is enough for tiny shapes
        # (where the fused single-invocation path dominates anyway) and for v5e.
        lane = 256 if (_has_256_mxu() and max(P, R) > 512) else 128

    Pp, Rp = _round_up(P, lane), _round_up(R, lane)

    # Zero-pad to lane-dense shapes (exact; see header comment).  Â_knn is transposed
    # here so the in-kernel fold is correct for asymmetric adjacencies too.
    xp = jnp.pad(x.astype(jnp.float32), ((0, Pp - P), (0, Rp - R)))
    aknn_t = jnp.pad(a_knn.T, ((0, Rp - R), (0, Rp - R))).astype(param_dtype)
    appi = jnp.pad(a_ppi, ((0, Pp - P), (0, Pp - P))).astype(param_dtype)
    wcp = jnp.pad(wc, ((0, 0), (0, Pp - P), (0, Pp - P))).astype(param_dtype)
    wrtp = jnp.pad(jnp.transpose(wr, (0, 2, 1)),
                   ((0, 0), (0, Rp - R), (0, Rp - R))).astype(param_dtype)
    bcp = jnp.pad(bc, ((0, 0), (0, Pp - P)))[:, :, None].astype(jnp.float32)  # (L,Pp,1)
    brp = jnp.pad(br, ((0, 0), (0, Rp - R)))[:, None, :].astype(jnp.float32)  # (L,1,Rp)

    # ----- VMEM budget, capped to this generation's physical VMEM -----
    itp = jnp.dtype(param_dtype).itemsize
    bias_bytes = L * Pp * 128 * 4 + L * 8 * Rp * 4          # with VMEM tile padding
    adj_bytes = (Rp * Rp + Pp * Pp) * itp
    emb_bytes = 2 * Pp * Rp * 4                              # x block + output/E block
    tmp_bytes = 3 * Pp * Rp * 4                              # live layer intermediates
    fused_bytes = emb_bytes + adj_bytes + L * (Pp * Pp + Rp * Rp) * itp \
        + bias_bytes + tmp_bytes                             # single-buffered (no grid)
    streamed_blocks = emb_bytes + adj_bytes + (Pp * Pp + Rp * Rp) * itp + bias_bytes
    streamed_bytes = 2 * streamed_blocks + tmp_bytes         # pipeline double-buffering

    try:
        vmem_cap = int(pltpu.get_tpu_info().vmem_capacity_bytes)
    except Exception:
        vmem_cap = 64 * 2 ** 20          # conservative default: v7x per-TC VMEM
    budget = int(0.85 * vmem_cap)
    margin = 4 << 20                      # compiler scratch / spill headroom

    use_fused = (not force_streamed) and (fused_bytes + margin <= budget)

    flops = 4 * L * Pp * Rp * (Pp + Rp)   # 4 matmuls/layer, 2 flops per MAC
    operands = (xp, aknn_t, appi, wcp, wrtp, bcp, brp)
    bytes_accessed = int(sum(o.nbytes for o in operands) + Pp * Rp * 4)
    cost = pl.CostEstimate(flops=flops, transcendentals=0,
                           bytes_accessed=bytes_accessed)

    if use_fused:
        vmem_limit = int(min(budget, max(fused_bytes + margin, 32 << 20)))
        out = pl.pallas_call(
            functools.partial(_fused_kernel, num_layers=L),
            out_shape=jax.ShapeDtypeStruct((Pp, Rp), jnp.float32),
            compiler_params=pltpu.CompilerParams(vmem_limit_bytes=vmem_limit),
            cost_estimate=cost,
        )(*operands)
    else:
        vmem_limit = int(min(budget, max(streamed_bytes + margin, 32 << 20)))
        out = pl.pallas_call(
            _streamed_kernel,
            out_shape=jax.ShapeDtypeStruct((Pp, Rp), jnp.float32),
            grid_spec=pltpu.PrefetchScalarGridSpec(
                num_scalar_prefetch=0,
                grid=(L,),
                in_specs=[
                    pl.BlockSpec((Pp, Rp), lambda l: (0, 0)),        # x (read at l==0)
                    pl.BlockSpec((Rp, Rp), lambda l: (0, 0)),        # Â_knn^T resident
                    pl.BlockSpec((Pp, Pp), lambda l: (0, 0)),        # Â_ppi resident
                    pl.BlockSpec((1, Pp, Pp), lambda l: (l, 0, 0)),  # Wc[l] streamed
                    pl.BlockSpec((1, Rp, Rp), lambda l: (l, 0, 0)),  # Wr[l]^T streamed
                    pl.BlockSpec((L, Pp, 1), lambda l: (0, 0, 0)),   # bc resident
                    pl.BlockSpec((L, 1, Rp), lambda l: (0, 0, 0)),   # br resident
                ],
                out_specs=pl.BlockSpec((Pp, Rp), lambda l: (0, 0)),  # persistent E
            ),
            compiler_params=pltpu.CompilerParams(
                dimension_semantics=("arbitrary",),      # layers are sequential
                vmem_limit_bytes=vmem_limit),
            cost_estimate=cost,
        )(*operands)
    return out[:P, :R]


# ---------------- glue: dense GCN-normalized adjacency from an edge_index ----------------
def gcn_norm_adj(edge_index, n):
    """Dense Â = D^-1/2 (A + I_remaining) D^-1/2, mirroring PyG gcn_norm defaults
    (messages flow src->dst, self-loops added only where missing, no symmetrization)."""
    src, dst = edge_index[0], edge_index[1]
    a = jnp.zeros((n, n), jnp.float32).at[dst, src].add(1.0)
    has_loop = jnp.diag(a) > 0
    a = a + jnp.diag(jnp.where(has_loop, 0.0, 1.0))          # add_remaining_self_loops
    deg = a.sum(axis=1)
    dinv = jnp.where(deg > 0, jax.lax.rsqrt(deg), 0.0)
    return a * dinv[:, None] * dinv[None, :]


# ---------------- pure-JAX reference mirroring the PyTorch forward ----------------
def reference(x, a_knn, a_ppi, wc, wr, bc, br):
    hp = jax.lax.Precision.HIGHEST
    e = x
    for i in range(wc.shape[0]):
        # cols_layers[i](e.T, knn).T : GCNConv -> LeakyReLU -> Dropout(eval=id)
        out_t = jnp.dot(a_knn, jnp.dot(e.T, wc[i].T, precision=hp), precision=hp) \
            + bc[i][None, :]
        e = _leaky(out_t).T
        # rows_layers[i](e, ppi)     : GCNConv -> Dropout(eval=id) -> LeakyReLU
        out = jnp.dot(a_ppi, jnp.dot(e, wr[i].T, precision=hp), precision=hp) \
            + br[i][None, :]
        e = _leaky(out)
    return e


if __name__ == "__main__":
    col_dim, row_dim, num_layers = 32, 16, 4   # P = ppi nodes, R = knn nodes

    key = jax.random.PRNGKey(0)
    ks = jax.random.split(key, 9)

    x = jax.random.normal(ks[0], (col_dim, row_dim), jnp.float32)

    knn_edge_index = jnp.stack([jax.random.randint(ks[1], (48,), 0, row_dim),
                                jax.random.randint(ks[2], (48,), 0, row_dim)])
    ppi_edge_index = jnp.stack([jax.random.randint(ks[3], (96,), 0, col_dim),
                                jax.random.randint(ks[4], (96,), 0, col_dim)])

    a_knn = gcn_norm_adj(knn_edge_index, row_dim)   # (R, R)
    a_ppi = gcn_norm_adj(ppi_edge_index, col_dim)   # (P, P)

    # deterministic synthetic GCNConv parameters (glorot-ish scale, random bias)
    wc = jax.random.normal(ks[5], (num_layers, col_dim, col_dim), jnp.float32) / jnp.sqrt(col_dim)
    wr = jax.random.normal(ks[6], (num_layers, row_dim, row_dim), jnp.float32) / jnp.sqrt(row_dim)
    bc = 0.1 * jax.random.normal(ks[7], (num_layers, col_dim), jnp.float32)
    br = 0.1 * jax.random.normal(ks[8], (num_layers, row_dim), jnp.float32)

    ref = reference(x, a_knn, a_ppi, wc, wr, bc, br)

    # 1) fused single-invocation path, f32 parameters: tight check.
    out = jax.block_until_ready(
        mutael_encoder(x, a_knn, a_ppi, wc, wr, bc, br, param_dtype=jnp.float32))
    assert out.shape == (col_dim, row_dim), out.shape
    assert bool(jnp.all(jnp.isfinite(out)))
    assert bool(jnp.allclose(out, ref, rtol=2e-2, atol=2e-2)), \
        float(jnp.max(jnp.abs(out - ref)))

    # 2) fused path, bf16 parameters + f32 accumulation (v6e/v7x fast path): loose check.
    out_bf = jax.block_until_ready(
        mutael_encoder(x, a_knn, a_ppi, wc, wr, bc, br, param_dtype=jnp.bfloat16))
    assert out_bf.shape == (col_dim, row_dim), out_bf.shape
    assert bool(jnp.all(jnp.isfinite(out_bf)))
    assert bool(jnp.allclose(out_bf, ref, rtol=2e-1, atol=2e-1)), \
        float(jnp.max(jnp.abs(out_bf - ref)))

    # 3) streamed large-shape fallback path (forced at small shapes as a correctness check).
    out_st = jax.block_until_ready(
        mutael_encoder(x, a_knn, a_ppi, wc, wr, bc, br,
                       param_dtype=jnp.float32, force_streamed=True))
    assert out_st.shape == (col_dim, row_dim), out_st.shape
    assert bool(jnp.all(jnp.isfinite(out_st)))
    assert bool(jnp.allclose(out_st, ref, rtol=2e-2, atol=2e-2)), \
        float(jnp.max(jnp.abs(out_st - ref)))

    print("KERNEL_OK")
</pallas_src>

<mosaic_0001>
module attributes {stable_mosaic.version = 11 : i64} {
  func.func @_fused_kernel(%arg0: memref<128x128xf32, #tpu.memory_space<vmem>>, %arg1: memref<128x128xf32, #tpu.memory_space<vmem>>, %arg2: memref<128x128xf32, #tpu.memory_space<vmem>>, %arg3: memref<4x128x128xf32, #tpu.memory_space<vmem>>, %arg4: memref<4x128x128xf32, #tpu.memory_space<vmem>>, %arg5: memref<4x128x1xf32, #tpu.memory_space<vmem>>, %arg6: memref<4x1x128xf32, #tpu.memory_space<vmem>>, %arg7: memref<128x128xf32, #tpu.memory_space<vmem>>) attributes {dimension_semantics = [], scalar_prefetch = 0 : i64, scratch_operands = 0 : i64, tpu.core_type = #tpu.core_type<tc>} {
    %c0 = arith.constant 0 : index
    %c0_0 = arith.constant 0 : index
    %0 = vector.load %arg1[%c0, %c0_0] : memref<128x128xf32, #tpu.memory_space<vmem>>, vector<128x128xf32>
    %c0_1 = arith.constant 0 : index
    %c0_2 = arith.constant 0 : index
    %1 = vector.load %arg2[%c0_1, %c0_2] : memref<128x128xf32, #tpu.memory_space<vmem>>, vector<128x128xf32>
    %c0_3 = arith.constant 0 : index
    %c0_4 = arith.constant 0 : index
    %2 = vector.load %arg0[%c0_3, %c0_4] : memref<128x128xf32, #tpu.memory_space<vmem>>, vector<128x128xf32>
    %c0_5 = arith.constant 0 : index
    %c0_6 = arith.constant 0 : index
    %c0_7 = arith.constant 0 : index
    %3 = vector.load %arg3[%c0_5, %c0_6, %c0_7] : memref<4x128x128xf32, #tpu.memory_space<vmem>>, vector<1x128x128xf32>
    %4 = vector.shape_cast %3 : vector<1x128x128xf32> to vector<128x128xf32>
    %c0_8 = arith.constant 0 : index
    %c0_9 = arith.constant 0 : index
    %c0_10 = arith.constant 0 : index
    %5 = vector.load %arg4[%c0_8, %c0_9, %c0_10] : memref<4x128x128xf32, #tpu.memory_space<vmem>>, vector<1x128x128xf32>
    %6 = vector.shape_cast %5 : vector<1x128x128xf32> to vector<128x128xf32>
    %c0_11 = arith.constant 0 : index
    %c0_12 = arith.constant 0 : index
    %c0_13 = arith.constant 0 : index
    %7 = vector.load %arg5[%c0_11, %c0_12, %c0_13] : memref<4x128x1xf32, #tpu.memory_space<vmem>>, vector<1x128x1xf32>
    %8 = vector.shape_cast %7 : vector<1x128x1xf32> to vector<128x1xf32>
    %c0_14 = arith.constant 0 : index
    %c0_15 = arith.constant 0 : index
    %c0_16 = arith.constant 0 : index
    %9 = vector.load %arg6[%c0_14, %c0_15, %c0_16] : memref<4x1x128xf32, #tpu.memory_space<vmem>>, vector<1x1x128xf32>
    %10 = vector.shape_cast %9 : vector<1x1x128xf32> to vector<1x128xf32>
    %cst = arith.constant dense<0.000000e+00> : vector<128x128xf32>
    %11 = tpu.matmul %4, %2, %cst {dimension_numbers = #tpu.dot_dimension_numbers<[1], [0], [0], [1], [0, 0, 1, 1], [], []>} : vector<128x128xf32>, vector<128x128xf32>, vector<128x128xf32> -> vector<128x128xf32>
    %cst_17 = arith.constant dense<0.000000e+00> : vector<128x128xf32>
    %12 = tpu.matmul %11, %0, %cst_17 {dimension_numbers = #tpu.dot_dimension_numbers<[1], [0], [0], [1], [0, 0, 1, 1], [], []>} : vector<128x128xf32>, vector<128x128xf32>, vector<128x128xf32> -> vector<128x128xf32>
    %13 = vector.broadcast %8 : vector<128x1xf32> to vector<128x128xf32>
    %14 = arith.addf %12, %13 : vector<128x128xf32>
    %cst_18 = arith.constant 0.000000e+00 : f32
    %15 = vector.broadcast %cst_18 : f32 to vector<128x128xf32>
    %16 = arith.cmpf oge, %14, %15 : vector<128x128xf32>
    %cst_19 = arith.constant 0.00999999977 : f32
    %17 = vector.broadcast %cst_19 : f32 to vector<128x128xf32>
    %18 = arith.mulf %17, %14 : vector<128x128xf32>
    %19 = arith.select %16, %14, %18 : vector<128x128xi1>, vector<128x128xf32>
    %cst_20 = arith.constant dense<0.000000e+00> : vector<128x128xf32>
    %20 = tpu.matmul %19, %6, %cst_20 {dimension_numbers = #tpu.dot_dimension_numbers<[1], [0], [0], [1], [0, 0, 1, 1], [], []>} : vector<128x128xf32>, vector<128x128xf32>, vector<128x128xf32> -> vector<128x128xf32>
    %cst_21 = arith.constant dense<0.000000e+00> : vector<128x128xf32>
    %21 = tpu.matmul %1, %20, %cst_21 {dimension_numbers = #tpu.dot_dimension_numbers<[1], [0], [0], [1], [0, 0, 1, 1], [], []>} : vector<128x128xf32>, vector<128x128xf32>, vector<128x128xf32> -> vector<128x128xf32>
    %22 = vector.broadcast %10 : vector<1x128xf32> to vector<128x128xf32>
    %23 = arith.addf %21, %22 : vector<128x128xf32>
    %cst_22 = arith.constant 0.000000e+00 : f32
    %24 = vector.broadcast %cst_22 : f32 to vector<128x128xf32>
    %25 = arith.cmpf oge, %23, %24 : vector<128x128xf32>
    %cst_23 = arith.constant 0.00999999977 : f32
    %26 = vector.broadcast %cst_23 : f32 to vector<128x128xf32>
    %27 = arith.mulf %26, %23 : vector<128x128xf32>
    %28 = arith.select %25, %23, %27 : vector<128x128xi1>, vector<128x128xf32>
    %c1 = arith.constant 1 : index
    %c0_24 = arith.constant 0 : index
    %c0_25 = arith.constant 0 : index
    %29 = vector.load %arg3[%c1, %c0_24, %c0_25] : memref<4x128x128xf32, #tpu.memory_space<vmem>>, vector<1x128x128xf32>
    %30 = vector.shape_cast %29 : vector<1x128x128xf32> to vector<128x128xf32>
    %c1_26 = arith.constant 1 : index
    %c0_27 = arith.constant 0 : index
    %c0_28 = arith.constant 0 : index
    %31 = vector.load %arg4[%c1_26, %c0_27, %c0_28] : memref<4x128x128xf32, #tpu.memory_space<vmem>>, vector<1x128x128xf32>
    %32 = vector.shape_cast %31 : vector<1x128x128xf32> to vector<128x128xf32>
    %c1_29 = arith.constant 1 : index
    %c0_30 = arith.constant 0 : index
    %c0_31 = arith.constant 0 : index
    %33 = vector.load %arg5[%c1_29, %c0_30, %c0_31] : memref<4x128x1xf32, #tpu.memory_space<vmem>>, vector<1x128x1xf32>
    %34 = vector.shape_cast %33 : vector<1x128x1xf32> to vector<128x1xf32>
    %c1_32 = arith.constant 1 : index
    %c0_33 = arith.constant 0 : index
    %c0_34 = arith.constant 0 : index
    %35 = vector.load %arg6[%c1_32, %c0_33, %c0_34] : memref<4x1x128xf32, #tpu.memory_space<vmem>>, vector<1x1x128xf32>
    %36 = vector.shape_cast %35 : vector<1x1x128xf32> to vector<1x128xf32>
    %cst_35 = arith.constant dense<0.000000e+00> : vector<128x128xf32>
    %37 = tpu.matmul %30, %28, %cst_35 {dimension_numbers = #tpu.dot_dimension_numbers<[1], [0], [0], [1], [0, 0, 1, 1], [], []>} : vector<128x128xf32>, vector<128x128xf32>, vector<128x128xf32> -> vector<128x128xf32>
    %cst_36 = arith.constant dense<0.000000e+00> : vector<128x128xf32>
    %38 = tpu.matmul %37, %0, %cst_36 {dimension_numbers = #tpu.dot_dimension_numbers<[1], [0], [0], [1], [0, 0, 1, 1], [], []>} : vector<128x128xf32>, vector<128x128xf32>, vector<128x128xf32> -> vector<128x128xf32>
    %39 = vector.broadcast %34 : vector<128x1xf32> to vector<128x128xf32>
    %40 = arith.addf %38, %39 : vector<128x128xf32>
    %cst_37 = arith.constant 0.000000e+00 : f32
    %41 = vector.broadcast %cst_37 : f32 to vector<128x128xf32>
    %42 = arith.cmpf oge, %40, %41 : vector<128x128xf32>
    %cst_38 = arith.constant 0.00999999977 : f32
    %43 = vector.broadcast %cst_38 : f32 to vector<128x128xf32>
    %44 = arith.mulf %43, %40 : vector<128x128xf32>
    %45 = arith.select %42, %40, %44 : vector<128x128xi1>, vector<128x128xf32>
    %cst_39 = arith.constant dense<0.000000e+00> : vector<128x128xf32>
    %46 = tpu.matmul %45, %32, %cst_39 {dimension_numbers = #tpu.dot_dimension_numbers<[1], [0], [0], [1], [0, 0, 1, 1], [], []>} : vector<128x128xf32>, vector<128x128xf32>, vector<128x128xf32> -> vector<128x128xf32>
    %cst_40 = arith.constant dense<0.000000e+00> : vector<128x128xf32>
    %47 = tpu.matmul %1, %46, %cst_40 {dimension_numbers = #tpu.dot_dimension_numbers<[1], [0], [0], [1], [0, 0, 1, 1], [], []>} : vector<128x128xf32>, vector<128x128xf32>, vector<128x128xf32> -> vector<128x128xf32>
    %48 = vector.broadcast %36 : vector<1x128xf32> to vector<128x128xf32>
    %49 = arith.addf %47, %48 : vector<128x128xf32>
    %cst_41 = arith.constant 0.000000e+00 : f32
    %50 = vector.broadcast %cst_41 : f32 to vector<128x128xf32>
    %51 = arith.cmpf oge, %49, %50 : vector<128x128xf32>
    %cst_42 = arith.constant 0.00999999977 : f32
    %52 = vector.broadcast %cst_42 : f32 to vector<128x128xf32>
    %53 = arith.mulf %52, %49 : vector<128x128xf32>
    %54 = arith.select %51, %49, %53 : vector<128x128xi1>, vector<128x128xf32>
    %c2 = arith.constant 2 : index
    %c0_43 = arith.constant 0 : index
    %c0_44 = arith.constant 0 : index
    %55 = vector.load %arg3[%c2, %c0_43, %c0_44] : memref<4x128x128xf32, #tpu.memory_space<vmem>>, vector<1x128x128xf32>
    %56 = vector.shape_cast %55 : vector<1x128x128xf32> to vector<128x128xf32>
    %c2_45 = arith.constant 2 : index
    %c0_46 = arith.constant 0 : index
    %c0_47 = arith.constant 0 : index
    %57 = vector.load %arg4[%c2_45, %c0_46, %c0_47] : memref<4x128x128xf32, #tpu.memory_space<vmem>>, vector<1x128x128xf32>
    %58 = vector.shape_cast %57 : vector<1x128x128xf32> to vector<128x128xf32>
    %c2_48 = arith.constant 2 : index
    %c0_49 = arith.constant 0 : index
    %c0_50 = arith.constant 0 : index
    %59 = vector.load %arg5[%c2_48, %c0_49, %c0_50] : memref<4x128x1xf32, #tpu.memory_space<vmem>>, vector<1x128x1xf32>
    %60 = vector.shape_cast %59 : vector<1x128x1xf32> to vector<128x1xf32>
    %c2_51 = arith.constant 2 : index
    %c0_52 = arith.constant 0 : index
    %c0_53 = arith.constant 0 : index
    %61 = vector.load %arg6[%c2_51, %c0_52, %c0_53] : memref<4x1x128xf32, #tpu.memory_space<vmem>>, vector<1x1x128xf32>
    %62 = vector.shape_cast %61 : vector<1x1x128xf32> to vector<1x128xf32>
    %cst_54 = arith.constant dense<0.000000e+00> : vector<128x128xf32>
    %63 = tpu.matmul %56, %54, %cst_54 {dimension_numbers = #tpu.dot_dimension_numbers<[1], [0], [0], [1], [0, 0, 1, 1], [], []>} : vector<128x128xf32>, vector<128x128xf32>, vector<128x128xf32> -> vector<128x128xf32>
    %cst_55 = arith.constant dense<0.000000e+00> : vector<128x128xf32>
    %64 = tpu.matmul %63, %0, %cst_55 {dimension_numbers = #tpu.dot_dimension_numbers<[1], [0], [0], [1], [0, 0, 1, 1], [], []>} : vector<128x128xf32>, vector<128x128xf32>, vector<128x128xf32> -> vector<128x128xf32>
    %65 = vector.broadcast %60 : vector<128x1xf32> to vector<128x128xf32>
    %66 = arith.addf %64, %65 : vector<128x128xf32>
    %cst_56 = arith.constant 0.000000e+00 : f32
    %67 = vector.broadcast %cst_56 : f32 to vector<128x128xf32>
    %68 = arith.cmpf oge, %66, %67 : vector<128x128xf32>
    %cst_57 = arith.constant 0.00999999977 : f32
    %69 = vector.broadcast %cst_57 : f32 to vector<128x128xf32>
    %70 = arith.mulf %69, %66 : vector<128x128xf32>
    %71 = arith.select %68, %66, %70 : vector<128x128xi1>, vector<128x128xf32>
    %cst_58 = arith.constant dense<0.000000e+00> : vector<128x128xf32>
    %72 = tpu.matmul %71, %58, %cst_58 {dimension_numbers = #tpu.dot_dimension_numbers<[1], [0], [0], [1], [0, 0, 1, 1], [], []>} : vector<128x128xf32>, vector<128x128xf32>, vector<128x128xf32> -> vector<128x128xf32>
    %cst_59 = arith.constant dense<0.000000e+00> : vector<128x128xf32>
    %73 = tpu.matmul %1, %72, %cst_59 {dimension_numbers = #tpu.dot_dimension_numbers<[1], [0], [0], [1], [0, 0, 1, 1], [], []>} : vector<128x128xf32>, vector<128x128xf32>, vector<128x128xf32> -> vector<128x128xf32>
    %74 = vector.broadcast %62 : vector<1x128xf32> to vector<128x128xf32>
    %75 = arith.addf %73, %74 : vector<128x128xf32>
    %cst_60 = arith.constant 0.000000e+00 : f32
    %76 = vector.broadcast %cst_60 : f32 to vector<128x128xf32>
    %77 = arith.cmpf oge, %75, %76 : vector<128x128xf32>
    %cst_61 = arith.constant 0.00999999977 : f32
    %78 = vector.broadcast %cst_61 : f32 to vector<128x128xf32>
    %79 = arith.mulf %78, %75 : vector<128x128xf32>
    %80 = arith.select %77, %75, %79 : vector<128x128xi1>, vector<128x128xf32>
    %c3 = arith.constant 3 : index
    %c0_62 = arith.constant 0 : index
    %c0_63 = arith.constant 0 : index
    %81 = vector.load %arg3[%c3, %c0_62, %c0_63] : memref<4x128x128xf32, #tpu.memory_space<vmem>>, vector<1x128x128xf32>
    %82 = vector.shape_cast %81 : vector<1x128x128xf32> to vector<128x128xf32>
    %c3_64 = arith.constant 3 : index
    %c0_65 = arith.constant 0 : index
    %c0_66 = arith.constant 0 : index
    %83 = vector.load %arg4[%c3_64, %c0_65, %c0_66] : memref<4x128x128xf32, #tpu.memory_space<vmem>>, vector<1x128x128xf32>
    %84 = vector.shape_cast %83 : vector<1x128x128xf32> to vector<128x128xf32>
    %c3_67 = arith.constant 3 : index
    %c0_68 = arith.constant 0 : index
    %c0_69 = arith.constant 0 : index
    %85 = vector.load %arg5[%c3_67, %c0_68, %c0_69] : memref<4x128x1xf32, #tpu.memory_space<vmem>>, vector<1x128x1xf32>
    %86 = vector.shape_cast %85 : vector<1x128x1xf32> to vector<128x1xf32>
    %c3_70 = arith.constant 3 : index
    %c0_71 = arith.constant 0 : index
    %c0_72 = arith.constant 0 : index
    %87 = vector.load %arg6[%c3_70, %c0_71, %c0_72] : memref<4x1x128xf32, #tpu.memory_space<vmem>>, vector<1x1x128xf32>
    %88 = vector.shape_cast %87 : vector<1x1x128xf32> to vector<1x128xf32>
    %cst_73 = arith.constant dense<0.000000e+00> : vector<128x128xf32>
    %89 = tpu.matmul %82, %80, %cst_73 {dimension_numbers = #tpu.dot_dimension_numbers<[1], [0], [0], [1], [0, 0, 1, 1], [], []>} : vector<128x128xf32>, vector<128x128xf32>, vector<128x128xf32> -> vector<128x128xf32>
    %cst_74 = arith.constant dense<0.000000e+00> : vector<128x128xf32>
    %90 = tpu.matmul %89, %0, %cst_74 {dimension_numbers = #tpu.dot_dimension_numbers<[1], [0], [0], [1], [0, 0, 1, 1], [], []>} : vector<128x128xf32>, vector<128x128xf32>, vector<128x128xf32> -> vector<128x128xf32>
    %91 = vector.broadcast %86 : vector<128x1xf32> to vector<128x128xf32>
    %92 = arith.addf %90, %91 : vector<128x128xf32>
    %cst_75 = arith.constant 0.000000e+00 : f32
    %93 = vector.broadcast %cst_75 : f32 to vector<128x128xf32>
    %94 = arith.cmpf oge, %92, %93 : vector<128x128xf32>
    %cst_76 = arith.constant 0.00999999977 : f32
    %95 = vector.broadcast %cst_76 : f32 to vector<128x128xf32>
    %96 = arith.mulf %95, %92 : vector<128x128xf32>
    %97 = arith.select %94, %92, %96 : vector<128x128xi1>, vector<128x128xf32>
    %cst_77 = arith.constant dense<0.000000e+00> : vector<128x128xf32>
    %98 = tpu.matmul %97, %84, %cst_77 {dimension_numbers = #tpu.dot_dimension_numbers<[1], [0], [0], [1], [0, 0, 1, 1], [], []>} : vector<128x128xf32>, vector<128x128xf32>, vector<128x128xf32> -> vector<128x128xf32>
    %cst_78 = arith.constant dense<0.000000e+00> : vector<128x128xf32>
    %99 = tpu.matmul %1, %98, %cst_78 {dimension_numbers = #tpu.dot_dimension_numbers<[1], [0], [0], [1], [0, 0, 1, 1], [], []>} : vector<128x128xf32>, vector<128x128xf32>, vector<128x128xf32> -> vector<128x128xf32>
    %100 = vector.broadcast %88 : vector<1x128xf32> to vector<128x128xf32>
    %101 = arith.addf %99, %100 : vector<128x128xf32>
    %cst_79 = arith.constant 0.000000e+00 : f32
    %102 = vector.broadcast %cst_79 : f32 to vector<128x128xf32>
    %103 = arith.cmpf oge, %101, %102 : vector<128x128xf32>
    %cst_80 = arith.constant 0.00999999977 : f32
    %104 = vector.broadcast %cst_80 : f32 to vector<128x128xf32>
    %105 = arith.mulf %104, %101 : vector<128x128xf32>
    %106 = arith.select %103, %101, %105 : vector<128x128xi1>, vector<128x128xf32>
    %c0_81 = arith.constant 0 : index
    %c0_82 = arith.constant 0 : index
    %107 = vector.load %arg7[%c0_81, %c0_82] : memref<128x128xf32, #tpu.memory_space<vmem>>, vector<128x128xf32>
    tpu.vector_store %arg7[%c0_81, %c0_82], %106 {strides = array<i32>} : memref<128x128xf32, #tpu.memory_space<vmem>>, vector<128x128xf32>,
    return
  }
}

</mosaic_0001>

<llo_original>
// kernel: tpu_custom_call.1
$region0: #{tpu_custom_call.1}
  #allocation0 [shape = 'u32[]', space=smem, size = 0x4, offset = 0x4, fixed_abs, tag = 'smem constant byte address 0x4 - core index']
  #allocation1 [shape = 'u32[144,128]{1,0:T(1,128)}', space=vmem, size = 0x12000, scoped, tag = 'internal scratch']
  %s0 = inlined_call_operand.hbm [shape: f32[128,128], index: 0, kind: input, shape index: {}]
  %s1 = inlined_call_operand.hbm [shape: f32[128,128], index: 1, kind: input, shape index: {}]
  %s2 = inlined_call_operand.hbm [shape: f32[128,128], index: 2, kind: input, shape index: {}]
  %s3 = inlined_call_operand.vmem [shape: f32[4,128,128], index: 3, kind: input, shape index: {}]
  %s4 = inlined_call_operand.hbm [shape: f32[4,128,128], index: 4, kind: input, shape index: {}]
  %s5 = inlined_call_operand.vmem [shape: f32[4,128,1], index: 5, kind: input, shape index: {}]
  %s6 = inlined_call_operand.vmem [shape: f32[4,1,128], index: 6, kind: input, shape index: {}]
  %s7 = inlined_call_operand.hbm [shape: f32[128,128], index: 7, kind: output, shape index: {}]
  %s8 = sld [smem:[#allocation0]]
  $region54: #{tpu_custom_call.1} parent=0
    _
  %s10 = ssub.s32 1, %s8
  %s11 = scalar_select 0, %s10, %s8
  $region1: #{tpu_custom_call.1} parent=0
    #allocation2 [shape = 'u8[65536]{0}', space=vmem, size = 0x10000, scoped, tag = 'input window, operand 0, single buffered']
    #allocation3 [shape = 's32[1]{0}', space=sflag, size = 0x4, scoped, tag = 'scoped memory for tpu_custom_call.1']
    #allocation4 [shape = 's32[1]{0}', space=sflag, size = 0x4, scoped, tag = 'scoped memory for tpu_custom_call.1']
    #allocation5 [shape = 'u8[65536]{0}', space=vmem, size = 0x10000, scoped, tag = 'input window, operand 1, single buffered']
    #allocation6 [shape = 's32[1]{0}', space=sflag, size = 0x4, scoped, tag = 'scoped memory for tpu_custom_call.1']
    #allocation7 [shape = 'u8[65536]{0}', space=vmem, size = 0x10000, scoped, tag = 'input window, operand 2, single buffered']
    #allocation8 [shape = 'u8[262144]{0}', space=vmem, size = 0x40000, scoped, tag = 'input window, operand 4, single buffered']
    #allocation9 [shape = 's32[1]{0}', space=sflag, size = 0x4, scoped, tag = 'scoped memory for tpu_custom_call.1']
    #allocation10 [shape = 'u8[65536]{0}', space=vmem, size = 0x10000, scoped, tag = 'output window, operand 0, single buffered']
    %12 = vsyncpa [#allocation3], 0
    %13 = vsyncpa [#allocation6], 0
    %14 = vsyncpa [#allocation9], 0
    %15 = vsyncpa [#allocation4], 0
    // Predicated region
    $region2: #{tpu_custom_call.1} parent=1 // pred_check
      _
    $region3: #{tpu_custom_call.1} parent=1 // pred_check_branch
      %17 = sbr.rel (0) target = $region5
    $region4: #{tpu_custom_call.1} parent=1 // pred_region
      %s19 = ssub.s32 2048, 2048
      %20 = vsyncadd [#allocation3], %s19
      %s21 = sshll.u32 [#allocation2], 4
      %s22 = int_to_ptr.vmem [resolvable:$true] %s21
      %27 = dma.hbm_to_vmem [thread:$0]  %s0, 2048, %s22, [#allocation3], 128, 128, 8
    $region5: #{tpu_custom_call.1} parent=1 // pred_fallthru
      _
    // Predicated region
    $region6: #{tpu_custom_call.1} parent=1 // pred_check
      _
    $region7: #{tpu_custom_call.1} parent=1 // pred_check_branch
      %29 = sbr.rel (0) target = $region9
    $region8: #{tpu_custom_call.1} parent=1 // pred_region
      %s31 = ssub.s32 2048, 2048
      %32 = vsyncadd [#allocation6], %s31
      %s33 = sshll.u32 [#allocation5], 4
      %s34 = int_to_ptr.vmem [resolvable:$true] %s33
      %39 = dma.hbm_to_vmem [thread:$0]  %s1, 2048, %s34, [#allocation6], 128, 128, 8
    $region9: #{tpu_custom_call.1} parent=1 // pred_fallthru
      _
    // Predicated region
    $region10: #{tpu_custom_call.1} parent=1 // pred_check
      _
    $region11: #{tpu_custom_call.1} parent=1 // pred_check_branch
      %41 = sbr.rel (0) target = $region13
    $region12: #{tpu_custom_call.1} parent=1 // pred_region
      %s43 = ssub.s32 2048, 2048
      %44 = vsyncadd [#allocation6], %s43
      %s45 = sshll.u32 [#allocation7], 4
      %s46 = int_to_ptr.vmem [resolvable:$true] %s45
      %51 = dma.hbm_to_vmem [thread:$0]  %s2, 2048, %s46, [#allocation6], 128, 128, 8
    $region13: #{tpu_custom_call.1} parent=1 // pred_fallthru
      _
    // Predicated region
    $region14: #{tpu_custom_call.1} parent=1 // pred_check
      _
    $region15: #{tpu_custom_call.1} parent=1 // pred_check_branch
      %53 = sbr.rel (0) target = $region17
    $region16: #{tpu_custom_call.1} parent=1 // pred_region
      _
    $region17: #{tpu_custom_call.1} parent=1 // pred_fallthru
      _
    // Predicated region
    $region18: #{tpu_custom_call.1} parent=1 // pred_check
      _
    $region19: #{tpu_custom_call.1} parent=1 // pred_check_branch
      %55 = sbr.rel (0) target = $region21
    $region20: #{tpu_custom_call.1} parent=1 // pred_region
      %s57 = ssub.s32 8192, 8192
      %58 = vsyncadd [#allocation9], %s57
      %s59 = sshll.u32 [#allocation8], 4
      %s60 = int_to_ptr.vmem [resolvable:$true] %s59
      %65 = dma.hbm_to_vmem [thread:$0]  %s4, 8192, %s60, [#allocation9], 128, 128, 8
    $region21: #{tpu_custom_call.1} parent=1 // pred_fallthru
      _
    // Predicated region
    $region22: #{tpu_custom_call.1} parent=1 // pred_check
      _
    $region23: #{tpu_custom_call.1} parent=1 // pred_check_branch
      %67 = sbr.rel (0) target = $region25
    $region24: #{tpu_custom_call.1} parent=1 // pred_region
      _
    $region25: #{tpu_custom_call.1} parent=1 // pred_fallthru
      _
    // Predicated region
    $region26: #{tpu_custom_call.1} parent=1 // pred_check
      _
    $region27: #{tpu_custom_call.1} parent=1 // pred_check_branch
      %69 = sbr.rel (0) target = $region29
    $region28: #{tpu_custom_call.1} parent=1 // pred_region
      _
    $region29: #{tpu_custom_call.1} parent=1 // pred_fallthru
      _
    // Predicated region
    $region30: #{tpu_custom_call.1} parent=1 // pred_check
      _
    $region31: #{tpu_custom_call.1} parent=1 // pred_check_branch
      %71 = sbr.rel (0) target = $region33
    $region32: #{tpu_custom_call.1} parent=1 // pred_region
      %72 = dma.done [#allocation3], 2048
    $region33: #{tpu_custom_call.1} parent=1 // pred_fallthru
      _
    // Predicated region
    $region34: #{tpu_custom_call.1} parent=1 // pred_check
      _
    $region35: #{tpu_custom_call.1} parent=1 // pred_check_branch
      %74 = sbr.rel (0) target = $region37
    $region36: #{tpu_custom_call.1} parent=1 // pred_region
      %75 = dma.done [#allocation6], 2048
    $region37: #{tpu_custom_call.1} parent=1 // pred_fallthru
      _
    // Predicated region
    $region38: #{tpu_custom_call.1} parent=1 // pred_check
      _
    $region39: #{tpu_custom_call.1} parent=1 // pred_check_branch
      %77 = sbr.rel (0) target = $region41
    $region40: #{tpu_custom_call.1} parent=1 // pred_region
      %78 = dma.done [#allocation6], 2048
    $region41: #{tpu_custom_call.1} parent=1 // pred_fallthru
      _
    // Predicated region
    $region42: #{tpu_custom_call.1} parent=1 // pred_check
      _
    $region43: #{tpu_custom_call.1} parent=1 // pred_check_branch
      %80 = sbr.rel (0) target = $region45
    $region44: #{tpu_custom_call.1} parent=1 // pred_region
      %81 = dma.done [#allocation9], 8192
    $region45: #{tpu_custom_call.1} parent=1 // pred_fallthru
      _
    %v82 = vld [vmem:[#allocation5] sm:$0xff]
    %v83 = vld [vmem:[#allocation5 + $0x8] sm:$0xff]
    %v84 = vld [vmem:[#allocation5 + $0x10] sm:$0xff]
    %v85 = vld [vmem:[#allocation5 + $0x18] sm:$0xff]
    %v86 = vld [vmem:[#allocation5 + $0x20] sm:$0xff]
    %v87 = vld [vmem:[#allocation5 + $0x28] sm:$0xff]
    %v88 = vld [vmem:[#allocation5 + $0x30] sm:$0xff]
    %v89 = vld [vmem:[#allocation5 + $0x38] sm:$0xff]
    %v90 = vld [vmem:[#allocation5 + $0x40] sm:$0xff]
    %v91 = vld [vmem:[#allocation5 + $0x48] sm:$0xff]
    %v92 = vld [vmem:[#allocation5 + $0x50] sm:$0xff]
    %v93 = vld [vmem:[#allocation5 + $0x58] sm:$0xff]
    %v94 = vld [vmem:[#allocation5 + $0x60] sm:$0xff]
    %v95 = vld [vmem:[#allocation5 + $0x68] sm:$0xff]
    %v96 = vld [vmem:[#allocation5 + $0x70] sm:$0xff]
    %v97 = vld [vmem:[#allocation5 + $0x78] sm:$0xff]
    %v98 = vld [vmem:[#allocation7] sm:$0xff]
    %v99 = vld [vmem:[#allocation7 + $0x8] sm:$0xff]
    %v100 = vld [vmem:[#allocation7 + $0x10] sm:$0xff]
    %v101 = vld [vmem:[#allocation7 + $0x18] sm:$0xff]
    %v102 = vld [vmem:[#allocation7 + $0x20] sm:$0xff]
    %v103 = vld [vmem:[#allocation7 + $0x28] sm:$0xff]
    %v104 = vld [vmem:[#allocation7 + $0x30] sm:$0xff]
    %v105 = vld [vmem:[#allocation7 + $0x38] sm:$0xff]
    %v106 = vld [vmem:[#allocation7 + $0x40] sm:$0xff]
    %v107 = vld [vmem:[#allocation7 + $0x48] sm:$0xff]
    %v108 = vld [vmem:[#allocation7 + $0x50] sm:$0xff]
    %v109 = vld [vmem:[#allocation7 + $0x58] sm:$0xff]
    %v110 = vld [vmem:[#allocation7 + $0x60] sm:$0xff]
    %v111 = vld [vmem:[#allocation7 + $0x68] sm:$0xff]
    %v112 = vld [vmem:[#allocation7 + $0x70] sm:$0xff]
    %v113 = vld [vmem:[#allocation7 + $0x78] sm:$0xff]
    %v114 = vld [vmem:[#allocation2] sm:$0xff]
    %v115 = vld [vmem:[#allocation2 + $0x8] sm:$0xff]
    %v116 = vld [vmem:[#allocation2 + $0x10] sm:$0xff]
    %v117 = vld [vmem:[#allocation2 + $0x18] sm:$0xff]
    %v118 = vld [vmem:[#allocation2 + $0x20] sm:$0xff]
    %v119 = vld [vmem:[#allocation2 + $0x28] sm:$0xff]
    %v120 = vld [vmem:[#allocation2 + $0x30] sm:$0xff]
    %v121 = vld [vmem:[#allocation2 + $0x38] sm:$0xff]
    %v122 = vld [vmem:[#allocation2 + $0x40] sm:$0xff]
    %v123 = vld [vmem:[#allocation2 + $0x48] sm:$0xff]
    %v124 = vld [vmem:[#allocation2 + $0x50] sm:$0xff]
    %v125 = vld [vmem:[#allocation2 + $0x58] sm:$0xff]
    %v126 = vld [vmem:[#allocation2 + $0x60] sm:$0xff]
    %v127 = vld [vmem:[#allocation2 + $0x68] sm:$0xff]
    %v128 = vld [vmem:[#allocation2 + $0x70] sm:$0xff]
    %v129 = vld [vmem:[#allocation2 + $0x78] sm:$0xff]
    %v130 = vld [vmem:[%s3] sm:$0xff]
    %v131 = vld [vmem:[%s3 + $0x8] sm:$0xff]
    %v132 = vld [vmem:[%s3 + $0x10] sm:$0xff]
    %v133 = vld [vmem:[%s3 + $0x18] sm:$0xff]
    %v134 = vld [vmem:[%s3 + $0x20] sm:$0xff]
    %v135 = vld [vmem:[%s3 + $0x28] sm:$0xff]
    %v136 = vld [vmem:[%s3 + $0x30] sm:$0xff]
    %v137 = vld [vmem:[%s3 + $0x38] sm:$0xff]
    %v138 = vld [vmem:[%s3 + $0x40] sm:$0xff]
    %v139 = vld [vmem:[%s3 + $0x48] sm:$0xff]
    %v140 = vld [vmem:[%s3 + $0x50] sm:$0xff]
    %v141 = vld [vmem:[%s3 + $0x58] sm:$0xff]
    %v142 = vld [vmem:[%s3 + $0x60] sm:$0xff]
    %v143 = vld [vmem:[%s3 + $0x68] sm:$0xff]
    %v144 = vld [vmem:[%s3 + $0x70] sm:$0xff]
    %v145 = vld [vmem:[%s3 + $0x78] sm:$0xff]
    %v146 = vld [vmem:[#allocation8] sm:$0xff]
    %v147 = vld [vmem:[#allocation8 + $0x8] sm:$0xff]
    %v148 = vld [vmem:[#allocation8 + $0x10] sm:$0xff]
    %v149 = vld [vmem:[#allocation8 + $0x18] sm:$0xff]
    %v150 = vld [vmem:[#allocation8 + $0x20] sm:$0xff]
    %v151 = vld [vmem:[#allocation8 + $0x28] sm:$0xff]
    %v152 = vld [vmem:[#allocation8 + $0x30] sm:$0xff]
    %v153 = vld [vmem:[#allocation8 + $0x38] sm:$0xff]
    %v154 = vld [vmem:[#allocation8 + $0x40] sm:$0xff]
    %v155 = vld [vmem:[#allocation8 + $0x48] sm:$0xff]
    %v156 = vld [vmem:[#allocation8 + $0x50] sm:$0xff]
    %v157 = vld [vmem:[#allocation8 + $0x58] sm:$0xff]
    %v158 = vld [vmem:[#allocation8 + $0x60] sm:$0xff]
    %v159 = vld [vmem:[#allocation8 + $0x68] sm:$0xff]
    %v160 = vld [vmem:[#allocation8 + $0x70] sm:$0xff]
    %v161 = vld [vmem:[#allocation8 + $0x78] sm:$0xff]
    %v162 = vld [vmem:[%s5] sm:$0xff]
    %v163 = vld [vmem:[%s5 + $0x8] sm:$0xff]
    %v164 = vld [vmem:[%s5 + $0x10] sm:$0xff]
    %v165 = vld [vmem:[%s5 + $0x18] sm:$0xff]
    %v166 = vld [vmem:[%s5 + $0x20] sm:$0xff]
    %v167 = vld [vmem:[%s5 + $0x28] sm:$0xff]
    %v168 = vld [vmem:[%s5 + $0x30] sm:$0xff]
    %v169 = vld [vmem:[%s5 + $0x38] sm:$0xff]
    %v170 = vld [vmem:[%s5 + $0x40] sm:$0xff]
    %v171 = vld [vmem:[%s5 + $0x48] sm:$0xff]
    %v172 = vld [vmem:[%s5 + $0x50] sm:$0xff]
    %v173 = vld [vmem:[%s5 + $0x58] sm:$0xff]
    %v174 = vld [vmem:[%s5 + $0x60] sm:$0xff]
    %v175 = vld [vmem:[%s5 + $0x68] sm:$0xff]
    %v176 = vld [vmem:[%s5 + $0x70] sm:$0xff]
    %v177 = vld [vmem:[%s5 + $0x78] sm:$0xff]
    %v178 = vld [vmem:[%s6] sm:$0x1]
    %179 = vmatprep.subr.mxu0 0.0
    %180 = vmatpush1.msra.mxu0 %v114
    %181 = vmatprep.subr.mxu0 0.0
    %182 = vmatpush1.msra.mxu0 %v115
    %183 = vmatprep.subr.mxu0 0.0
    %184 = vmatpush1.msra.mxu0 %v116
    %185 = vmatprep.subr.mxu0 0.0
    %186 = vmatpush1.msra.mxu0 %v117
    %187 = vmatprep.subr.mxu0 0.0
    %188 = vmatpush1.msra.mxu0 %v118
    %189 = vmatprep.subr.mxu0 0.0
    %190 = vmatpush1.msra.mxu0 %v119
    %191 = vmatprep.subr.mxu0 0.0
    %192 = vmatpush1.msra.mxu0 %v120
    %193 = vmatprep.subr.mxu0 0.0
    %194 = vmatpush1.msra.mxu0 %v121
    %195 = vmatprep.subr.mxu0 0.0
    %196 = vmatpush1.msra.mxu0 %v122
    %197 = vmatprep.subr.mxu0 0.0
    %198 = vmatpush1.msra.mxu0 %v123
    %199 = vmatprep.subr.mxu0 0.0
    %200 = vmatpush1.msra.mxu0 %v124
    %201 = vmatprep.subr.mxu0 0.0
    %202 = vmatpush1.msra.mxu0 %v125
    %203 = vmatprep.subr.mxu0 0.0
    %204 = vmatpush1.msra.mxu0 %v126
    %205 = vmatprep.subr.mxu0 0.0
    %206 = vmatpush1.msra.mxu0 %v127
    %207 = vmatprep.subr.mxu0 0.0
    %208 = vmatpush1.msra.mxu0 %v128
    %209 = vmatprep.subr.mxu0 0.0
    %210 = vmatpush1.msra.mxu0 %v129
    %211 = vmatprep.subr.mxu0 0.0
    %212 = vmatpush1.msra.mxu0 0.0
    %213 = vmatprep.subr.mxu0 0.0
    %214 = vmatpush1.msra.mxu0 0.0
    %215 = vmatprep.subr.mxu0 0.0
    %216 = vmatpush1.msra.mxu0 0.0
    %217 = vmatprep.subr.mxu0 0.0
    %218 = vmatpush1.msra.mxu0 0.0
    %219 = vmatprep.subr.mxu0 0.0
    %220 = vmatpush1.msra.mxu0 0.0
    %221 = vmatprep.subr.mxu0 0.0
    %222 = vmatpush1.msra.mxu0 0.0
    %223 = vmatprep.subr.mxu0 0.0
    %224 = vmatpush1.msra.mxu0 0.0
    %225 = vmatprep.subr.mxu0 0.0
    %226 = vmatpush1.msra.mxu0 0.0
    %227 = vmatprep.subr.mxu0 0.0
    %228 = vmatpush1.msra.mxu0 0.0
    %229 = vmatprep.subr.mxu0 0.0
    %230 = vmatpush1.msra.mxu0 0.0
    %231 = vmatprep.subr.mxu0 0.0
    %232 = vmatpush1.msra.mxu0 0.0
    %233 = vmatprep.subr.mxu0 0.0
    %234 = vmatpush1.msra.mxu0 0.0
    %235 = vmatprep.subr.mxu0 0.0
    %236 = vmatpush1.msra.mxu0 0.0
    %237 = vmatprep.subr.mxu0 0.0
    %238 = vmatpush1.msra.mxu0 0.0
    %239 = vmatprep.subr.mxu0 0.0
    %240 = vmatpush1.msra.mxu0 0.0
    %241 = vmatprep.subr.mxu0 0.0
    %242 = vmatpush1.msra.mxu0 0.0
    %243 = vmatprep.mubr.f32.mxu0 0.0
    %244 = vmatmul.mubr.f32.gmra.mrb[0].mxu0 %v130
    %v245 = vpop.f32.mrb[0].mxu0
    %v246 = vadd.f32 0.0, %v245
    %v247 = vpop.f32.mrb[0].mxu0
    %248 = vmatprep.mubr.f32.mxu0 0.0
    %249 = vmatmul.mubr.f32.gmra.mrb[0].mxu0 %v131
    %v250 = vpop.f32.mrb[0].mxu0
    %v251 = vadd.f32 0.0, %v250
    %v252 = vpop.f32.mrb[0].mxu0
    %253 = vmatprep.mubr.f32.mxu0 0.0
    %254 = vmatmul.mubr.f32.gmra.mrb[0].mxu0 %v132
    %v255 = vpop.f32.mrb[0].mxu0
    %v256 = vadd.f32 0.0, %v255
    %v257 = vpop.f32.mrb[0].mxu0
    %258 = vmatprep.mubr.f32.mxu0 0.0
    %259 = vmatmul.mubr.f32.gmra.mrb[0].mxu0 %v133
    %v260 = vpop.f32.mrb[0].mxu0
    %v261 = vadd.f32 0.0, %v260
    %v262 = vpop.f32.mrb[0].mxu0
    %263 = vmatprep.mubr.f32.mxu0 0.0
    %264 = vmatmul.mubr.f32.gmra.mrb[0].mxu0 %v134
    %v265 = vpop.f32.mrb[0].mxu0
    %v266 = vadd.f32 0.0, %v265
    %v267 = vpop.f32.mrb[0].mxu0
    %268 = vmatprep.mubr.f32.mxu0 0.0
    %269 = vmatmul.mubr.f32.gmra.mrb[0].mxu0 %v135
    %v270 = vpop.f32.mrb[0].mxu0
    %v271 = vadd.f32 0.0, %v270
    %v272 = vpop.f32.mrb[0].mxu0
    %273 = vmatprep.mubr.f32.mxu0 0.0
    %274 = vmatmul.mubr.f32.gmra.mrb[0].mxu0 %v136
    %v275 = vpop.f32.mrb[0].mxu0
    %v276 = vadd.f32 0.0, %v275
    %v277 = vpop.f32.mrb[0].mxu0
    %278 = vmatprep.mubr.f32.mxu0 0.0
    %279 = vmatmul.mubr.f32.gmra.mrb[0].mxu0 %v137
    %v280 = vpop.f32.mrb[0].mxu0
    %v281 = vadd.f32 0.0, %v280
    %v282 = vpop.f32.mrb[0].mxu0
    %283 = vmatprep.mubr.f32.mxu0 0.0
    %284 = vmatmul.mubr.f32.gmra.mrb[0].mxu0 %v138
    %v285 = vpop.f32.mrb[0].mxu0
    %v286 = vadd.f32 0.0, %v285
    %v287 = vpop.f32.mrb[0].mxu0
    %288 = vmatprep.mubr.f32.mxu0 0.0
    %289 = vmatmul.mubr.f32.gmra.mrb[0].mxu0 %v139
    %v290 = vpop.f32.mrb[0].mxu0
    %v291 = vadd.f32 0.0, %v290
    %v292 = vpop.f32.mrb[0].mxu0
    %293 = vmatprep.mubr.f32.mxu0 0.0
    %294 = vmatmul.mubr.f32.gmra.mrb[0].mxu0 %v140
    %v295 = vpop.f32.mrb[0].mxu0
    %v296 = vadd.f32 0.0, %v295
    %v297 = vpop.f32.mrb[0].mxu0
    %298 = vmatprep.mubr.f32.mxu0 0.0
    %299 = vmatmul.mubr.f32.gmra.mrb[0].mxu0 %v141
    %v300 = vpop.f32.mrb[0].mxu0
    %v301 = vadd.f32 0.0, %v300
    %v302 = vpop.f32.mrb[0].mxu0
    %303 = vmatprep.mubr.f32.mxu0 0.0
    %304 = vmatmul.mubr.f32.gmra.mrb[0].mxu0 %v142
    %v305 = vpop.f32.mrb[0].mxu0
    %v306 = vadd.f32 0.0, %v305
    %v307 = vpop.f32.mrb[0].mxu0
    %308 = vmatprep.mubr.f32.mxu0 0.0
    %309 = vmatmul.mubr.f32.gmra.mrb[0].mxu0 %v143
    %v310 = vpop.f32.mrb[0].mxu0
    %v311 = vadd.f32 0.0, %v310
    %v312 = vpop.f32.mrb[0].mxu0
    %313 = vmatprep.mubr.f32.mxu0 0.0
    %314 = vmatmul.mubr.f32.gmra.mrb[0].mxu0 %v144
    %v315 = vpop.f32.mrb[0].mxu0
    %v316 = vadd.f32 0.0, %v315
    %v317 = vpop.f32.mrb[0].mxu0
    %318 = vmatprep.mubr.f32.mxu0 0.0
    %319 = vmatmul.mubr.f32.gmra.mrb[0].mxu0 %v145
    %v320 = vpop.f32.mrb[0].mxu0
    %v321 = vadd.f32 0.0, %v320
    %v322 = vpop.f32.mrb[0].mxu0
    %323 = vdwg.mxu0
    %325 = vset.pattern.permute.xlu0 0
    %326 = vperm.xlu0 %325, %v162
    %v327 = vpop.permute.xlu0 %326
    %330 = vset.pattern.permute.xlu0 0
    %331 = vperm.xlu0 %330, %v163
    %v332 = vpop.permute.xlu0 %331
    %335 = vset.pattern.permute.xlu0 0
    %336 = vperm.xlu0 %335, %v164
    %v337 = vpop.permute.xlu0 %336
    %340 = vset.pattern.permute.xlu0 0
    %341 = vperm.xlu0 %340, %v165
    %v342 = vpop.permute.xlu0 %341
    %345 = vset.pattern.permute.xlu0 0
    %346 = vperm.xlu0 %345, %v166
    %v347 = vpop.permute.xlu0 %346
    %350 = vset.pattern.permute.xlu0 0
    %351 = vperm.xlu0 %350, %v167
    %v352 = vpop.permute.xlu0 %351
    %355 = vset.pattern.permute.xlu0 0
    %356 = vperm.xlu0 %355, %v168
    %v357 = vpop.permute.xlu0 %356
    %360 = vset.pattern.permute.xlu0 0
    %361 = vperm.xlu0 %360, %v169
    %v362 = vpop.permute.xlu0 %361
    %365 = vset.pattern.permute.xlu0 0
    %366 = vperm.xlu0 %365, %v170
    %v367 = vpop.permute.xlu0 %366
    %370 = vset.pattern.permute.xlu0 0
    %371 = vperm.xlu0 %370, %v171
    %v372 = vpop.permute.xlu0 %371
    %375 = vset.pattern.permute.xlu0 0
    %376 = vperm.xlu0 %375, %v172
    %v377 = vpop.permute.xlu0 %376
    %380 = vset.pattern.permute.xlu0 0
    %381 = vperm.xlu0 %380, %v173
    %v382 = vpop.permute.xlu0 %381
    %385 = vset.pattern.permute.xlu0 0
    %386 = vperm.xlu0 %385, %v174
    %v387 = vpop.permute.xlu0 %386
    %390 = vset.pattern.permute.xlu0 0
    %391 = vperm.xlu0 %390, %v175
    %v392 = vpop.permute.xlu0 %391
    %395 = vset.pattern.permute.xlu0 0
    %396 = vperm.xlu0 %395, %v176
    %v397 = vpop.permute.xlu0 %396
    %400 = vset.pattern.permute.xlu0 0
    %401 = vperm.xlu0 %400, %v177
    %v402 = vpop.permute.xlu0 %401
    %404 = vmatprep.subr.mxu0 0.0
    %405 = vmatpush1.msra.mxu0 %v82
    %406 = vmatprep.subr.mxu0 0.0
    %407 = vmatpush1.msra.mxu0 %v83
    %408 = vmatprep.subr.mxu0 0.0
    %409 = vmatpush1.msra.mxu0 %v84
    %410 = vmatprep.subr.mxu0 0.0
    %411 = vmatpush1.msra.mxu0 %v85
    %412 = vmatprep.subr.mxu0 0.0
    %413 = vmatpush1.msra.mxu0 %v86
    %414 = vmatprep.subr.mxu0 0.0
    %415 = vmatpush1.msra.mxu0 %v87
    %416 = vmatprep.subr.mxu0 0.0
    %417 = vmatpush1.msra.mxu0 %v88
    %418 = vmatprep.subr.mxu0 0.0
    %419 = vmatpush1.msra.mxu0 %v89
    %420 = vmatprep.subr.mxu0 0.0
    %421 = vmatpush1.msra.mxu0 %v90
    %422 = vmatprep.subr.mxu0 0.0
    %423 = vmatpush1.msra.mxu0 %v91
    %424 = vmatprep.subr.mxu0 0.0
    %425 = vmatpush1.msra.mxu0 %v92
    %426 = vmatprep.subr.mxu0 0.0
    %427 = vmatpush1.msra.mxu0 %v93
    %428 = vmatprep.subr.mxu0 0.0
    %429 = vmatpush1.msra.mxu0 %v94
    %430 = vmatprep.subr.mxu0 0.0
    %431 = vmatpush1.msra.mxu0 %v95
    %432 = vmatprep.subr.mxu0 0.0
    %433 = vmatpush1.msra.mxu0 %v96
    %434 = vmatprep.subr.mxu0 0.0
    %435 = vmatpush1.msra.mxu0 %v97
    %436 = vmatprep.subr.mxu0 0.0
    %437 = vmatpush1.msra.mxu0 0.0
    %438 = vmatprep.subr.mxu0 0.0
    %439 = vmatpush1.msra.mxu0 0.0
    %440 = vmatprep.subr.mxu0 0.0
    %441 = vmatpush1.msra.mxu0 0.0
    %442 = vmatprep.subr.mxu0 0.0
    %443 = vmatpush1.msra.mxu0 0.0
    %444 = vmatprep.subr.mxu0 0.0
    %445 = vmatpush1.msra.mxu0 0.0
    %446 = vmatprep.subr.mxu0 0.0
    %447 = vmatpush1.msra.mxu0 0.0
    %448 = vmatprep.subr.mxu0 0.0
    %449 = vmatpush1.msra.mxu0 0.0
    %450 = vmatprep.subr.mxu0 0.0
    %451 = vmatpush1.msra.mxu0 0.0
    %452 = vmatprep.subr.mxu0 0.0
    %453 = vmatpush1.msra.mxu0 0.0
    %454 = vmatprep.subr.mxu0 0.0
    %455 = vmatpush1.msra.mxu0 0.0
    %456 = vmatprep.subr.mxu0 0.0
    %457 = vmatpush1.msra.mxu0 0.0
    %458 = vmatprep.subr.mxu0 0.0
    %459 = vmatpush1.msra.mxu0 0.0
    %460 = vmatprep.subr.mxu0 0.0
    %461 = vmatpush1.msra.mxu0 0.0
    %462 = vmatprep.subr.mxu0 0.0
    %463 = vmatpush1.msra.mxu0 0.0
    %464 = vmatprep.subr.mxu0 0.0
    %465 = vmatpush1.msra.mxu0 0.0
    %466 = vmatprep.subr.mxu0 0.0
    %467 = vmatpush1.msra.mxu0 0.0
    %468 = vmatprep.mubr.f32.mxu0 0.0
    %469 = vmatmul.mubr.f32.gmra.mrb[0].mxu0 %v246
    %v470 = vpop.f32.mrb[0].mxu0
    %v471 = vadd.f32 %v327, %v470
    %v472 = vpop.f32.mrb[0].mxu0
    %473 = vmatprep.mubr.f32.mxu0 0.0
    %474 = vmatmul.mubr.f32.gmra.mrb[0].mxu0 %v251
    %v475 = vpop.f32.mrb[0].mxu0
    %v476 = vadd.f32 %v332, %v475
    %v477 = vpop.f32.mrb[0].mxu0
    %478 = vmatprep.mubr.f32.mxu0 0.0
    %479 = vmatmul.mubr.f32.gmra.mrb[0].mxu0 %v256
    %v480 = vpop.f32.mrb[0].mxu0
    %v481 = vadd.f32 %v337, %v480
    %v482 = vpop.f32.mrb[0].mxu0
    %483 = vmatprep.mubr.f32.mxu0 0.0
    %484 = vmatmul.mubr.f32.gmra.mrb[0].mxu0 %v261
    %v485 = vpop.f32.mrb[0].mxu0
    %v486 = vadd.f32 %v342, %v485
    %v487 = vpop.f32.mrb[0].mxu0
    %488 = vmatprep.mubr.f32.mxu0 0.0
    %489 = vmatmul.mubr.f32.gmra.mrb[0].mxu0 %v266
    %v490 = vpop.f32.mrb[0].mxu0
    %v491 = vadd.f32 %v347, %v490
    %v492 = vpop.f32.mrb[0].mxu0
    %493 = vmatprep.mubr.f32.mxu0 0.0
    %494 = vmatmul.mubr.f32.gmra.mrb[0].mxu0 %v271
    %v495 = vpop.f32.mrb[0].mxu0
    %v496 = vadd.f32 %v352, %v495
    %v497 = vpop.f32.mrb[0].mxu0
    %498 = vmatprep.mubr.f32.mxu0 0.0
    %499 = vmatmul.mubr.f32.gmra.mrb[0].mxu0 %v276
    %v500 = vpop.f32.mrb[0].mxu0
    %v501 = vadd.f32 %v357, %v500
    %v502 = vpop.f32.mrb[0].mxu0
    %503 = vmatprep.mubr.f32.mxu0 0.0
    %504 = vmatmul.mubr.f32.gmra.mrb[0].mxu0 %v281
    %v505 = vpop.f32.mrb[0].mxu0
    %v506 = vadd.f32 %v362, %v505
    %v507 = vpop.f32.mrb[0].mxu0
    %508 = vmatprep.mubr.f32.mxu0 0.0
    %509 = vmatmul.mubr.f32.gmra.mrb[0].mxu0 %v286
    %v510 = vpop.f32.mrb[0].mxu0
    %v511 = vadd.f32 %v367, %v510
    %v512 = vpop.f32.mrb[0].mxu0
    %513 = vmatprep.mubr.f32.mxu0 0.0
    %514 = vmatmul.mubr.f32.gmra.mrb[0].mxu0 %v291
    %v515 = vpop.f32.mrb[0].mxu0
    %v516 = vadd.f32 %v372, %v515
    %v517 = vpop.f32.mrb[0].mxu0
    %518 = vmatprep.mubr.f32.mxu0 0.0
    %519 = vmatmul.mubr.f32.gmra.mrb[0].mxu0 %v296
    %v520 = vpop.f32.mrb[0].mxu0
    %v521 = vadd.f32 %v377, %v520
    %v522 = vpop.f32.mrb[0].mxu0
    %523 = vmatprep.mubr.f32.mxu0 0.0
    %524 = vmatmul.mubr.f32.gmra.mrb[0].mxu0 %v301
    %v525 = vpop.f32.mrb[0].mxu0
    %v526 = vadd.f32 %v382, %v525
    %v527 = vpop.f32.mrb[0].mxu0
    %528 = vmatprep.mubr.f32.mxu0 0.0
    %529 = vmatmul.mubr.f32.gmra.mrb[0].mxu0 %v306
    %v530 = vpop.f32.mrb[0].mxu0
    %v531 = vadd.f32 %v387, %v530
    %v532 = vpop.f32.mrb[0].mxu0
    %533 = vmatprep.mubr.f32.mxu0 0.0
    %534 = vmatmul.mubr.f32.gmra.mrb[0].mxu0 %v311
    %v535 = vpop.f32.mrb[0].mxu0
    %v536 = vadd.f32 %v392, %v535
    %v537 = vpop.f32.mrb[0].mxu0
    %538 = vmatprep.mubr.f32.mxu0 0.0
    %539 = vmatmul.mubr.f32.gmra.mrb[0].mxu0 %v316
    %v540 = vpop.f32.mrb[0].mxu0
    %v541 = vadd.f32 %v397, %v540
    %v542 = vpop.f32.mrb[0].mxu0
    %543 = vmatprep.mubr.f32.mxu0 0.0
    %544 = vmatmul.mubr.f32.gmra.mrb[0].mxu0 %v321
    %v545 = vpop.f32.mrb[0].mxu0
    %v546 = vadd.f32 %v402, %v545
    %v547 = vpop.f32.mrb[0].mxu0
    %548 = vdwg.mxu0
    %vm549 = vcmp.ge.f32.partialorder %v471, 0.0
    %vm550 = vcmp.ge.f32.partialorder %v476, 0.0
    %vm551 = vcmp.ge.f32.partialorder %v481, 0.0
    %vm552 = vcmp.ge.f32.partialorder %v486, 0.0
    %vm553 = vcmp.ge.f32.partialorder %v491, 0.0
    %vm554 = vcmp.ge.f32.partialorder %v496, 0.0
    %vm555 = vcmp.ge.f32.partialorder %v501, 0.0
    %vm556 = vcmp.ge.f32.partialorder %v506, 0.0
    %vm557 = vcmp.ge.f32.partialorder %v511, 0.0
    %vm558 = vcmp.ge.f32.partialorder %v516, 0.0
    %vm559 = vcmp.ge.f32.partialorder %v521, 0.0
    %vm560 = vcmp.ge.f32.partialorder %v526, 0.0
    %vm561 = vcmp.ge.f32.partialorder %v531, 0.0
    %vm562 = vcmp.ge.f32.partialorder %v536, 0.0
    %vm563 = vcmp.ge.f32.partialorder %v541, 0.0
    %vm564 = vcmp.ge.f32.partialorder %v546, 0.0
    %v565 = vmul.f32 %v471, 0.01
    %v566 = vmul.f32 %v476, 0.01
    %v567 = vmul.f32 %v481, 0.01
    %v568 = vmul.f32 %v486, 0.01
    %v569 = vmul.f32 %v491, 0.01
    %v570 = vmul.f32 %v496, 0.01
    %v571 = vmul.f32 %v501, 0.01
    %v572 = vmul.f32 %v506, 0.01
    %v573 = vmul.f32 %v511, 0.01
    %v574 = vmul.f32 %v516, 0.01
    %v575 = vmul.f32 %v521, 0.01
    %v576 = vmul.f32 %v526, 0.01
    %v577 = vmul.f32 %v531, 0.01
    %v578 = vmul.f32 %v536, 0.01
    %v579 = vmul.f32 %v541, 0.01
    %v580 = vmul.f32 %v546, 0.01
    %v581 = vsel %vm549, %v471, %v565
    %v582 = vsel %vm550, %v476, %v566
    %v583 = vsel %vm551, %v481, %v567
    %v584 = vsel %vm552, %v486, %v568
    %v585 = vsel %vm553, %v491, %v569
    %v586 = vsel %vm554, %v496, %v570
    %v587 = vsel %vm555, %v501, %v571
    %v588 = vsel %vm556, %v506, %v572
    %v589 = vsel %vm557, %v511, %v573
    %v590 = vsel %vm558, %v516, %v574
    %v591 = vsel %vm559, %v521, %v575
    %v592 = vsel %vm560, %v526, %v576
    %v593 = vsel %vm561, %v531, %v577
    %v594 = vsel %vm562, %v536, %v578
    %v595 = vsel %vm563, %v541, %v579
    %v596 = vsel %vm564, %v546, %v580
    %597 = vmatprep.subr.mxu0 0.0
    %598 = vmatpush1.msra.mxu0 %v146
    %599 = vmatprep.subr.mxu0 0.0
    %600 = vmatpush1.msra.mxu0 %v147
    %601 = vmatprep.subr.mxu0 0.0
    %602 = vmatpush1.msra.mxu0 %v148
    %603 = vmatprep.subr.mxu0 0.0
    %604 = vmatpush1.msra.mxu0 %v149
    %605 = vmatprep.subr.mxu0 0.0
    %606 = vmatpush1.msra.mxu0 %v150
    %607 = vmatprep.subr.mxu0 0.0
    %608 = vmatpush1.msra.mxu0 %v151
    %609 = vmatprep.subr.mxu0 0.0
    %610 = vmatpush1.msra.mxu0 %v152
    %611 = vmatprep.subr.mxu0 0.0
    %612 = vmatpush1.msra.mxu0 %v153
    %613 = vmatprep.subr.mxu0 0.0
    %614 = vmatpush1.msra.mxu0 %v154
    %615 = vmatprep.subr.mxu0 0.0
    %616 = vmatpush1.msra.mxu0 %v155
    %617 = vmatprep.subr.mxu0 0.0
    %618 = vmatpush1.msra.mxu0 %v156
    %619 = vmatprep.subr.mxu0 0.0
    %620 = vmatpush1.msra.mxu0 %v157
    %621 = vmatprep.subr.mxu0 0.0
    %622 = vmatpush1.msra.mxu0 %v158
    %623 = vmatprep.subr.mxu0 0.0
    %624 = vmatpush1.msra.mxu0 %v159
    %625 = vmatprep.subr.mxu0 0.0
    %626 = vmatpush1.msra.mxu0 %v160
    %627 = vmatprep.subr.mxu0 0.0
    %628 = vmatpush1.msra.mxu0 %v161
    %629 = vmatprep.subr.mxu0 0.0
    %630 = vmatpush1.msra.mxu0 0.0
    %631 = vmatprep.subr.mxu0 0.0
    %632 = vmatpush1.msra.mxu0 0.0
    %633 = vmatprep.subr.mxu0 0.0
    %634 = vmatpush1.msra.mxu0 0.0
    %635 = vmatprep.subr.mxu0 0.0
    %636 = vmatpush1.msra.mxu0 0.0
    %637 = vmatprep.subr.mxu0 0.0
    %638 = vmatpush1.msra.mxu0 0.0
    %639 = vmatprep.subr.mxu0 0.0
    %640 = vmatpush1.msra.mxu0 0.0
    %641 = vmatprep.subr.mxu0 0.0
    %642 = vmatpush1.msra.mxu0 0.0
    %643 = vmatprep.subr.mxu0 0.0
    %644 = vmatpush1.msra.mxu0 0.0
    %645 = vmatprep.subr.mxu0 0.0
    %646 = vmatpush1.msra.mxu0 0.0
    %647 = vmatprep.subr.mxu0 0.0
    %648 = vmatpush1.msra.mxu0 0.0
    %649 = vmatprep.subr.mxu0 0.0
    %650 = vmatpush1.msra.mxu0 0.0
    %651 = vmatprep.subr.mxu0 0.0
    %652 = vmatpush1.msra.mxu0 0.0
    %653 = vmatprep.subr.mxu0 0.0
    %654 = vmatpush1.msra.mxu0 0.0
    %655 = vmatprep.subr.mxu0 0.0
    %656 = vmatpush1.msra.mxu0 0.0
    %657 = vmatprep.subr.mxu0 0.0
    %658 = vmatpush1.msra.mxu0 0.0
    %659 = vmatprep.subr.mxu0 0.0
    %660 = vmatpush1.msra.mxu0 0.0
    %661 = vmatprep.mubr.f32.mxu0 0.0
    %662 = vmatmul.mubr.f32.gmra.mrb[0].mxu0 %v581
    %v663 = vpop.f32.mrb[0].mxu0
    %v664 = vadd.f32 0.0, %v663
    %v665 = vpop.f32.mrb[0].mxu0
    %666 = vmatprep.mubr.f32.mxu0 0.0
    %667 = vmatmul.mubr.f32.gmra.mrb[0].mxu0 %v582
    %v668 = vpop.f32.mrb[0].mxu0
    %v669 = vadd.f32 0.0, %v668
    %v670 = vpop.f32.mrb[0].mxu0
    %671 = vmatprep.mubr.f32.mxu0 0.0
    %672 = vmatmul.mubr.f32.gmra.mrb[0].mxu0 %v583
    %v673 = vpop.f32.mrb[0].mxu0
    %v674 = vadd.f32 0.0, %v673
    %v675 = vpop.f32.mrb[0].mxu0
    %676 = vmatprep.mubr.f32.mxu0 0.0
    %677 = vmatmul.mubr.f32.gmra.mrb[0].mxu0 %v584
    %v678 = vpop.f32.mrb[0].mxu0
    %v679 = vadd.f32 0.0, %v678
    %v680 = vpop.f32.mrb[0].mxu0
    %681 = vmatprep.mubr.f32.mxu0 0.0
    %682 = vmatmul.mubr.f32.gmra.mrb[0].mxu0 %v585
    %v683 = vpop.f32.mrb[0].mxu0
    %v684 = vadd.f32 0.0, %v683
    %v685 = vpop.f32.mrb[0].mxu0
    %686 = vmatprep.mubr.f32.mxu0 0.0
    %687 = vmatmul.mubr.f32.gmra.mrb[0].mxu0 %v586
    %v688 = vpop.f32.mrb[0].mxu0
    %v689 = vadd.f32 0.0, %v688
    %v690 = vpop.f32.mrb[0].mxu0
    %691 = vmatprep.mubr.f32.mxu0 0.0
    %692 = vmatmul.mubr.f32.gmra.mrb[0].mxu0 %v587
    %v693 = vpop.f32.mrb[0].mxu0
    %v694 = vadd.f32 0.0, %v693
    %v695 = vpop.f32.mrb[0].mxu0
    %696 = vmatprep.mubr.f32.mxu0 0.0
    %697 = vmatmul.mubr.f32.gmra.mrb[0].mxu0 %v588
    %v698 = vpop.f32.mrb[0].mxu0
    %v699 = vadd.f32 0.0, %v698
    %v700 = vpop.f32.mrb[0].mxu0
    %701 = vmatprep.mubr.f32.mxu0 0.0
    %702 = vmatmul.mubr.f32.gmra.mrb[0].mxu0 %v589
    %v703 = vpop.f32.mrb[0].mxu0
    %v704 = vadd.f32 0.0, %v703
    %v705 = vpop.f32.mrb[0].mxu0
    %706 = vmatprep.mubr.f32.mxu0 0.0
    %707 = vmatmul.mubr.f32.gmra.mrb[0].mxu0 %v590
    %v708 = vpop.f32.mrb[0].mxu0
    %v709 = vadd.f32 0.0, %v708
    %v710 = vpop.f32.mrb[0].mxu0
    %711 = vmatprep.mubr.f32.mxu0 0.0
    %712 = vmatmul.mubr.f32.gmra.mrb[0].mxu0 %v591
    %v713 = vpop.f32.mrb[0].mxu0
    %v714 = vadd.f32 0.0, %v713
    %v715 = vpop.f32.mrb[0].mxu0
    %716 = vmatprep.mubr.f32.mxu0 0.0
    %717 = vmatmul.mubr.f32.gmra.mrb[0].mxu0 %v592
    %v718 = vpop.f32.mrb[0].mxu0
    %v719 = vadd.f32 0.0, %v718
    %v720 = vpop.f32.mrb[0].mxu0
    %721 = vmatprep.mubr.f32.mxu0 0.0
    %722 = vmatmul.mubr.f32.gmra.mrb[0].mxu0 %v593
    %v723 = vpop.f32.mrb[0].mxu0
    %v724 = vadd.f32 0.0, %v723
    %v725 = vpop.f32.mrb[0].mxu0
    %726 = vmatprep.mubr.f32.mxu0 0.0
    %727 = vmatmul.mubr.f32.gmra.mrb[0].mxu0 %v594
    %v728 = vpop.f32.mrb[0].mxu0
    %v729 = vadd.f32 0.0, %v728
    %v730 = vpop.f32.mrb[0].mxu0
    %731 = vmatprep.mubr.f32.mxu0 0.0
    %732 = vmatmul.mubr.f32.gmra.mrb[0].mxu0 %v595
    %v733 = vpop.f32.mrb[0].mxu0
    %v734 = vadd.f32 0.0, %v733
    %v735 = vpop.f32.mrb[0].mxu0
    %736 = vmatprep.mubr.f32.mxu0 0.0
    %737 = vmatmul.mubr.f32.gmra.mrb[0].mxu0 %v596
    %v738 = vpop.f32.mrb[0].mxu0
    %v739 = vadd.f32 0.0, %v738
    %v740 = vpop.f32.mrb[0].mxu0
    %741 = vdwg.mxu0
    %v743 = vlaneseq
    %v744 = vshrl.u32 %v743, 7
    %v745 = vsub.s32 0, %v744
    %v746 = vrot.slane %v178, %v745
    %748 = vmatprep.subr.mxu0 0.0
    %749 = vmatpush1.msra.mxu0 %v664
    %750 = vmatprep.subr.mxu0 0.0
    %751 = vmatpush1.msra.mxu0 %v669
    %752 = vmatprep.subr.mxu0 0.0
    %753 = vmatpush1.msra.mxu0 %v674
    %754 = vmatprep.subr.mxu0 0.0
    %755 = vmatpush1.msra.mxu0 %v679
    %756 = vmatprep.subr.mxu0 0.0
    %757 = vmatpush1.msra.mxu0 %v684
    %758 = vmatprep.subr.mxu0 0.0
    %759 = vmatpush1.msra.mxu0 %v689
    %760 = vmatprep.subr.mxu0 0.0
    %761 = vmatpush1.msra.mxu0 %v694
    %762 = vmatprep.subr.mxu0 0.0
    %763 = vmatpush1.msra.mxu0 %v699
    %764 = vmatprep.subr.mxu0 0.0
    %765 = vmatpush1.msra.mxu0 %v704
    %766 = vmatprep.subr.mxu0 0.0
    %767 = vmatpush1.msra.mxu0 %v709
    %768 = vmatprep.subr.mxu0 0.0
    %769 = vmatpush1.msra.mxu0 %v714
    %770 = vmatprep.subr.mxu0 0.0
    %771 = vmatpush1.msra.mxu0 %v719
    %772 = vmatprep.subr.mxu0 0.0
    %773 = vmatpush1.msra.mxu0 %v724
    %774 = vmatprep.subr.mxu0 0.0
    %775 = vmatpush1.msra.mxu0 %v729
    %776 = vmatprep.subr.mxu0 0.0
    %777 = vmatpush1.msra.mxu0 %v734
    %778 = vmatprep.subr.mxu0 0.0
    %779 = vmatpush1.msra.mxu0 %v739
    %780 = vmatprep.subr.mxu0 0.0
    %781 = vmatpush1.msra.mxu0 0.0
    %782 = vmatprep.subr.mxu0 0.0
    %783 = vmatpush1.msra.mxu0 0.0
    %784 = vmatprep.subr.mxu0 0.0
    %785 = vmatpush1.msra.mxu0 0.0
    %786 = vmatprep.subr.mxu0 0.0
    %787 = vmatpush1.msra.mxu0 0.0
    %788 = vmatprep.subr.mxu0 0.0
    %789 = vmatpush1.msra.mxu0 0.0
    %790 = vmatprep.subr.mxu0 0.0
    %791 = vmatpush1.msra.mxu0 0.0
    %792 = vmatprep.subr.mxu0 0.0
    %793 = vmatpush1.msra.mxu0 0.0
    %794 = vmatprep.subr.mxu0 0.0
    %795 = vmatpush1.msra.mxu0 0.0
    %796 = vmatprep.subr.mxu0 0.0
    %797 = vmatpush1.msra.mxu0 0.0
    %798 = vmatprep.subr.mxu0 0.0
    %799 = vmatpush1.msra.mxu0 0.0
    %800 = vmatprep.subr.mxu0 0.0
    %801 = vmatpush1.msra.mxu0 0.0
    %802 = vmatprep.subr.mxu0 0.0
    %803 = vmatpush1.msra.mxu0 0.0
    %804 = vmatprep.subr.mxu0 0.0
    %805 = vmatpush1.msra.mxu0 0.0
    %806 = vmatprep.subr.mxu0 0.0
    %807 = vmatpush1.msra.mxu0 0.0
    %808 = vmatprep.subr.mxu0 0.0
    %809 = vmatpush1.msra.mxu0 0.0
    %810 = vmatprep.subr.mxu0 0.0
    %811 = vmatpush1.msra.mxu0 0.0
    %812 = vmatprep.mubr.f32.mxu0 0.0
    %813 = vmatmul.mubr.f32.gmra.mrb[0].mxu0 %v98
    %v814 = vpop.f32.mrb[0].mxu0
    %v815 = vadd.f32 %v746, %v814
    %v816 = vpop.f32.mrb[0].mxu0
    %817 = vmatprep.mubr.f32.mxu0 0.0
    %818 = vmatmul.mubr.f32.gmra.mrb[0].mxu0 %v99
    %v819 = vpop.f32.mrb[0].mxu0
    %v820 = vadd.f32 %v746, %v819
    %v821 = vpop.f32.mrb[0].mxu0
    %822 = vmatprep.mubr.f32.mxu0 0.0
    %823 = vmatmul.mubr.f32.gmra.mrb[0].mxu0 %v100
    %v824 = vpop.f32.mrb[0].mxu0
    %v825 = vadd.f32 %v746, %v824
    %v826 = vpop.f32.mrb[0].mxu0
    %827 = vmatprep.mubr.f32.mxu0 0.0
    %828 = vmatmul.mubr.f32.gmra.mrb[0].mxu0 %v101
    %v829 = vpop.f32.mrb[0].mxu0
    %v830 = vadd.f32 %v746, %v829
    %v831 = vpop.f32.mrb[0].mxu0
    %832 = vmatprep.mubr.f32.mxu0 0.0
    %833 = vmatmul.mubr.f32.gmra.mrb[0].mxu0 %v102
    %v834 = vpop.f32.mrb[0].mxu0
    %v835 = vadd.f32 %v746, %v834
    %v836 = vpop.f32.mrb[0].mxu0
    %837 = vmatprep.mubr.f32.mxu0 0.0
    %838 = vmatmul.mubr.f32.gmra.mrb[0].mxu0 %v103
    %v839 = vpop.f32.mrb[0].mxu0
    %v840 = vadd.f32 %v746, %v839
    %v841 = vpop.f32.mrb[0].mxu0
    %842 = vmatprep.mubr.f32.mxu0 0.0
    %843 = vmatmul.mubr.f32.gmra.mrb[0].mxu0 %v104
    %v844 = vpop.f32.mrb[0].mxu0
    %v845 = vadd.f32 %v746, %v844
    %v846 = vpop.f32.mrb[0].mxu0
    %847 = vmatprep.mubr.f32.mxu0 0.0
    %848 = vmatmul.mubr.f32.gmra.mrb[0].mxu0 %v105
    %v849 = vpop.f32.mrb[0].mxu0
    %v850 = vadd.f32 %v746, %v849
    %v851 = vpop.f32.mrb[0].mxu0
    %852 = vmatprep.mubr.f32.mxu0 0.0
    %853 = vmatmul.mubr.f32.gmra.mrb[0].mxu0 %v106
    %v854 = vpop.f32.mrb[0].mxu0
    %v855 = vadd.f32 %v746, %v854
    %v856 = vpop.f32.mrb[0].mxu0
    %857 = vmatprep.mubr.f32.mxu0 0.0
    %858 = vmatmul.mubr.f32.gmra.mrb[0].mxu0 %v107
    %v859 = vpop.f32.mrb[0].mxu0
    %v860 = vadd.f32 %v746, %v859
    %v861 = vpop.f32.mrb[0].mxu0
    %862 = vmatprep.mubr.f32.mxu0 0.0
    %863 = vmatmul.mubr.f32.gmra.mrb[0].mxu0 %v108
    %v864 = vpop.f32.mrb[0].mxu0
    %v865 = vadd.f32 %v746, %v864
    %v866 = vpop.f32.mrb[0].mxu0
    %867 = vmatprep.mubr.f32.mxu0 0.0
    %868 = vmatmul.mubr.f32.gmra.mrb[0].mxu0 %v109
    %v869 = vpop.f32.mrb[0].mxu0
    %v870 = vadd.f32 %v746, %v869
    %v871 = vpop.f32.mrb[0].mxu0
    %872 = vmatprep.mubr.f32.mxu0 0.0
    %873 = vmatmul.mubr.f32.gmra.mrb[0].mxu0 %v110
    %v874 = vpop.f32.mrb[0].mxu0
    %v875 = vadd.f32 %v746, %v874
    %v876 = vpop.f32.mrb[0].mxu0
    %877 = vmatprep.mubr.f32.mxu0 0.0
    %878 = vmatmul.mubr.f32.gmra.mrb[0].mxu0 %v111
    %v879 = vpop.f32.mrb[0].mxu0
    %v880 = vadd.f32 %v746, %v879
    %v881 = vpop.f32.mrb[0].mxu0
    %882 = vmatprep.mubr.f32.mxu0 0.0
    %883 = vmatmul.mubr.f32.gmra.mrb[0].mxu0 %v112
    %v884 = vpop.f32.mrb[0].mxu0
    %v885 = vadd.f32 %v746, %v884
    %v886 = vpop.f32.mrb[0].mxu0
    %887 = vmatprep.mubr.f32.mxu0 0.0
    %888 = vmatmul.mubr.f32.gmra.mrb[0].mxu0 %v113
    %v889 = vpop.f32.mrb[0].mxu0
    %v890 = vadd.f32 %v746, %v889
    %v891 = vpop.f32.mrb[0].mxu0
    %892 = vdwg.mxu0
    %vm893 = vcmp.ge.f32.partialorder %v815, 0.0
    %vm894 = vcmp.ge.f32.partialorder %v820, 0.0
    %vm895 = vcmp.ge.f32.partialorder %v825, 0.0
    %vm896 = vcmp.ge.f32.partialorder %v830, 0.0
    %vm897 = vcmp.ge.f32.partialorder %v835, 0.0
    %vm898 = vcmp.ge.f32.partialorder %v840, 0.0
    %vm899 = vcmp.ge.f32.partialorder %v845, 0.0
    %vm900 = vcmp.ge.f32.partialorder %v850, 0.0
    %vm901 = vcmp.ge.f32.partialorder %v855, 0.0
    %vm902 = vcmp.ge.f32.partialorder %v860, 0.0
    %vm903 = vcmp.ge.f32.partialorder %v865, 0.0
    %vm904 = vcmp.ge.f32.partialorder %v870, 0.0
    %vm905 = vcmp.ge.f32.partialorder %v875, 0.0
    %vm906 = vcmp.ge.f32.partialorder %v880, 0.0
    %vm907 = vcmp.ge.f32.partialorder %v885, 0.0
    %vm908 = vcmp.ge.f32.partialorder %v890, 0.0
    %v909 = vmul.f32 %v815, 0.01
    %v910 = vmul.f32 %v820, 0.01
    %v911 = vmul.f32 %v825, 0.01
    %v912 = vmul.f32 %v830, 0.01
    %v913 = vmul.f32 %v835, 0.01
    %v914 = vmul.f32 %v840, 0.01
    %v915 = vmul.f32 %v845, 0.01
    %v916 = vmul.f32 %v850, 0.01
    %v917 = vmul.f32 %v855, 0.01
    %v918 = vmul.f32 %v860, 0.01
    %v919 = vmul.f32 %v865, 0.01
    %v920 = vmul.f32 %v870, 0.01
    %v921 = vmul.f32 %v875, 0.01
    %v922 = vmul.f32 %v880, 0.01
    %v923 = vmul.f32 %v885, 0.01
    %v924 = vmul.f32 %v890, 0.01
    %v925 = vsel %vm893, %v815, %v909
    %v926 = vsel %vm894, %v820, %v910
    %v927 = vsel %vm895, %v825, %v911
    %v928 = vsel %vm896, %v830, %v912
    %v929 = vsel %vm897, %v835, %v913
    %v930 = vsel %vm898, %v840, %v914
    %v931 = vsel %vm899, %v845, %v915
    %v932 = vsel %vm900, %v850, %v916
    %v933 = vsel %vm901, %v855, %v917
    %v934 = vsel %vm902, %v860, %v918
    %v935 = vsel %vm903, %v865, %v919
    %v936 = vsel %vm904, %v870, %v920
    %v937 = vsel %vm905, %v875, %v921
    %v938 = vsel %vm906, %v880, %v922
    %v939 = vsel %vm907, %v885, %v923
    %v940 = vsel %vm908, %v890, %v924
    %s941 = scalar_lea.vmem %s3, 128
    %v942 = vld [vmem:[%s941] sm:$0xff]
    %v943 = vld [vmem:[%s941 + $0x8] sm:$0xff]
    %v944 = vld [vmem:[%s941 + $0x10] sm:$0xff]
    %v945 = vld [vmem:[%s941 + $0x18] sm:$0xff]
    %v946 = vld [vmem:[%s941 + $0x20] sm:$0xff]
    %v947 = vld [vmem:[%s941 + $0x28] sm:$0xff]
    %v948 = vld [vmem:[%s941 + $0x30] sm:$0xff]
    %v949 = vld [vmem:[%s941 + $0x38] sm:$0xff]
    %v950 = vld [vmem:[%s941 + $0x40] sm:$0xff]
    %v951 = vld [vmem:[%s941 + $0x48] sm:$0xff]
    %v952 = vld [vmem:[%s941 + $0x50] sm:$0xff]
    %v953 = vld [vmem:[%s941 + $0x58] sm:$0xff]
    %v954 = vld [vmem:[%s941 + $0x60] sm:$0xff]
    %v955 = vld [vmem:[%s941 + $0x68] sm:$0xff]
    %v956 = vld [vmem:[%s941 + $0x70] sm:$0xff]
    %v957 = vld [vmem:[%s941 + $0x78] sm:$0xff]
    %s958 = scalar_lea.vmem [#allocation8], 128
    %v959 = vld [vmem:[%s958] sm:$0xff]
    %v960 = vld [vmem:[%s958 + $0x8] sm:$0xff]
    %v961 = vld [vmem:[%s958 + $0x10] sm:$0xff]
    %v962 = vld [vmem:[%s958 + $0x18] sm:$0xff]
    %v963 = vld [vmem:[%s958 + $0x20] sm:$0xff]
    %v964 = vld [vmem:[%s958 + $0x28] sm:$0xff]
    %v965 = vld [vmem:[%s958 + $0x30] sm:$0xff]
    %v966 = vld [vmem:[%s958 + $0x38] sm:$0xff]
    %v967 = vld [vmem:[%s958 + $0x40] sm:$0xff]
    %v968 = vld [vmem:[%s958 + $0x48] sm:$0xff]
    %v969 = vld [vmem:[%s958 + $0x50] sm:$0xff]
    %v970 = vld [vmem:[%s958 + $0x58] sm:$0xff]
    %v971 = vld [vmem:[%s958 + $0x60] sm:$0xff]
    %v972 = vld [vmem:[%s958 + $0x68] sm:$0xff]
    %v973 = vld [vmem:[%s958 + $0x70] sm:$0xff]
    %v974 = vld [vmem:[%s958 + $0x78] sm:$0xff]
    %s975 = scalar_lea.vmem %s5, 128
    %v976 = vld [vmem:[%s975] sm:$0xff]
    %v977 = vld [vmem:[%s975 + $0x8] sm:$0xff]
    %v978 = vld [vmem:[%s975 + $0x10] sm:$0xff]
    %v979 = vld [vmem:[%s975 + $0x18] sm:$0xff]
    %v980 = vld [vmem:[%s975 + $0x20] sm:$0xff]
    %v981 = vld [vmem:[%s975 + $0x28] sm:$0xff]
    %v982 = vld [vmem:[%s975 + $0x30] sm:$0xff]
    %v983 = vld [vmem:[%s975 + $0x38] sm:$0xff]
    %v984 = vld [vmem:[%s975 + $0x40] sm:$0xff]
    %v985 = vld [vmem:[%s975 + $0x48] sm:$0xff]
    %v986 = vld [vmem:[%s975 + $0x50] sm:$0xff]
    %v987 = vld [vmem:[%s975 + $0x58] sm:$0xff]
    %v988 = vld [vmem:[%s975 + $0x60] sm:$0xff]
    %v989 = vld [vmem:[%s975 + $0x68] sm:$0xff]
    %v990 = vld [vmem:[%s975 + $0x70] sm:$0xff]
    %v991 = vld [vmem:[%s975 + $0x78] sm:$0xff]
    %s992 = scalar_lea.vmem %s6, 1
    %v993 = vld [vmem:[%s992] sm:$0x1]
    %994 = vmatprep.subr.mxu0 0.0
    %995 = vmatpush1.msra.mxu0 %v925
    %996 = vmatprep.subr.mxu0 0.0
    %997 = vmatpush1.msra.mxu0 %v926
    %998 = vmatprep.subr.mxu0 0.0
    %999 = vmatpush1.msra.mxu0 %v927
    %1000 = vmatprep.subr.mxu0 0.0
    %1001 = vmatpush1.msra.mxu0 %v928
    %1002 = vmatprep.subr.mxu0 0.0
    %1003 = vmatpush1.msra.mxu0 %v929
    %1004 = vmatprep.subr.mxu0 0.0
    %1005 = vmatpush1.msra.mxu0 %v930
    %1006 = vmatprep.subr.mxu0 0.0
    %1007 = vmatpush1.msra.mxu0 %v931
    %1008 = vmatprep.subr.mxu0 0.0
    %1009 = vmatpush1.msra.mxu0 %v932
    %1010 = vmatprep.subr.mxu0 0.0
    %1011 = vmatpush1.msra.mxu0 %v933
    %1012 = vmatprep.subr.mxu0 0.0
    %1013 = vmatpush1.msra.mxu0 %v934
    %1014 = vmatprep.subr.mxu0 0.0
    %1015 = vmatpush1.msra.mxu0 %v935
    %1016 = vmatprep.subr.mxu0 0.0
    %1017 = vmatpush1.msra.mxu0 %v936
    %1018 = vmatprep.subr.mxu0 0.0
    %1019 = vmatpush1.msra.mxu0 %v937
    %1020 = vmatprep.subr.mxu0 0.0
    %1021 = vmatpush1.msra.mxu0 %v938
    %1022 = vmatprep.subr.mxu0 0.0
    %1023 = vmatpush1.msra.mxu0 %v939
    %1024 = vmatprep.subr.mxu0 0.0
    %1025 = vmatpush1.msra.mxu0 %v940
    %1026 = vmatprep.subr.mxu0 0.0
    %1027 = vmatpush1.msra.mxu0 0.0
    %1028 = vmatprep.subr.mxu0 0.0
    %1029 = vmatpush1.msra.mxu0 0.0
    %1030 = vmatprep.subr.mxu0 0.0
    %1031 = vmatpush1.msra.mxu0 0.0
    %1032 = vmatprep.subr.mxu0 0.0
    %1033 = vmatpush1.msra.mxu0 0.0
    %1034 = vmatprep.subr.mxu0 0.0
    %1035 = vmatpush1.msra.mxu0 0.0
    %1036 = vmatprep.subr.mxu0 0.0
    %1037 = vmatpush1.msra.mxu0 0.0
    %1038 = vmatprep.subr.mxu0 0.0
    %1039 = vmatpush1.msra.mxu0 0.0
    %1040 = vmatprep.subr.mxu0 0.0
    %1041 = vmatpush1.msra.mxu0 0.0
    %1042 = vmatprep.subr.mxu0 0.0
    %1043 = vmatpush1.msra.mxu0 0.0
    %1044 = vmatprep.subr.mxu0 0.0
    %1045 = vmatpush1.msra.mxu0 0.0
    %1046 = vmatprep.subr.mxu0 0.0
    %1047 = vmatpush1.msra.mxu0 0.0
    %1048 = vmatprep.subr.mxu0 0.0
    %1049 = vmatpush1.msra.mxu0 0.0
    %1050 = vmatprep.subr.mxu0 0.0
    %1051 = vmatpush1.msra.mxu0 0.0
    %1052 = vmatprep.subr.mxu0 0.0
    %1053 = vmatpush1.msra.mxu0 0.0
    %1054 = vmatprep.subr.mxu0 0.0
    %1055 = vmatpush1.msra.mxu0 0.0
    %1056 = vmatprep.subr.mxu0 0.0
    %1057 = vmatpush1.msra.mxu0 0.0
    %1058 = vmatprep.mubr.f32.mxu0 0.0
    %1059 = vmatmul.mubr.f32.gmra.mrb[0].mxu0 %v942
    %v1060 = vpop.f32.mrb[0].mxu0
    %v1061 = vadd.f32 0.0, %v1060
    %v1062 = vpop.f32.mrb[0].mxu0
    %1063 = vmatprep.mubr.f32.mxu0 0.0
    %1064 = vmatmul.mubr.f32.gmra.mrb[0].mxu0 %v943
    %v1065 = vpop.f32.mrb[0].mxu0
    %v1066 = vadd.f32 0.0, %v1065
    %v1067 = vpop.f32.mrb[0].mxu0
    %1068 = vmatprep.mubr.f32.mxu0 0.0
    %1069 = vmatmul.mubr.f32.gmra.mrb[0].mxu0 %v944
    %v1070 = vpop.f32.mrb[0].mxu0
    %v1071 = vadd.f32 0.0, %v1070
    %v1072 = vpop.f32.mrb[0].mxu0
    %1073 = vmatprep.mubr.f32.mxu0 0.0
    %1074 = vmatmul.mubr.f32.gmra.mrb[0].mxu0 %v945
    %v1075 = vpop.f32.mrb[0].mxu0
    %v1076 = vadd.f32 0.0, %v1075
    %v1077 = vpop.f32.mrb[0].mxu0
    %1078 = vmatprep.mubr.f32.mxu0 0.0
    %1079 = vmatmul.mubr.f32.gmra.mrb[0].mxu0 %v946
    %v1080 = vpop.f32.mrb[0].mxu0
    %v1081 = vadd.f32 0.0, %v1080
    %v1082 = vpop.f32.mrb[0].mxu0
    %1083 = vmatprep.mubr.f32.mxu0 0.0
    %1084 = vmatmul.mubr.f32.gmra.mrb[0].mxu0 %v947
    %v1085 = vpop.f32.mrb[0].mxu0
    %v1086 = vadd.f32 0.0, %v1085
    %v1087 = vpop.f32.mrb[0].mxu0
    %1088 = vmatprep.mubr.f32.mxu0 0.0
    %1089 = vmatmul.mubr.f32.gmra.mrb[0].mxu0 %v948
    %v1090 = vpop.f32.mrb[0].mxu0
    %v1091 = vadd.f32 0.0, %v1090
    %v1092 = vpop.f32.mrb[0].mxu0
    %1093 = vmatprep.mubr.f32.mxu0 0.0
    %1094 = vmatmul.mubr.f32.gmra.mrb[0].mxu0 %v949
    %v1095 = vpop.f32.mrb[0].mxu0
    %v1096 = vadd.f32 0.0, %v1095
    %v1097 = vpop.f32.mrb[0].mxu0
    %1098 = vmatprep.mubr.f32.mxu0 0.0
    %1099 = vmatmul.mubr.f32.gmra.mrb[0].mxu0 %v950
    %v1100 = vpop.f32.mrb[0].mxu0
    %v1101 = vadd.f32 0.0, %v1100
    %v1102 = vpop.f32.mrb[0].mxu0
    %1103 = vmatprep.mubr.f32.mxu0 0.0
    %1104 = vmatmul.mubr.f32.gmra.mrb[0].mxu0 %v951
    %v1105 = vpop.f32.mrb[0].mxu0
    %v1106 = vadd.f32 0.0, %v1105
    %v1107 = vpop.f32.mrb[0].mxu0
    %1108 = vmatprep.mubr.f32.mxu0 0.0
    %1109 = vmatmul.mubr.f32.gmra.mrb[0].mxu0 %v952
    %v1110 = vpop.f32.mrb[0].mxu0
    %v1111 = vadd.f32 0.0, %v1110
    %v1112 = vpop.f32.mrb[0].mxu0
    %1113 = vmatprep.mubr.f32.mxu0 0.0
    %1114 = vmatmul.mubr.f32.gmra.mrb[0].mxu0 %v953
    %v1115 = vpop.f32.mrb[0].mxu0
    %v1116 = vadd.f32 0.0, %v1115
    %v1117 = vpop.f32.mrb[0].mxu0
    %1118 = vmatprep.mubr.f32.mxu0 0.0
    %1119 = vmatmul.mubr.f32.gmra.mrb[0].mxu0 %v954
    %v1120 = vpop.f32.mrb[0].mxu0
    %v1121 = vadd.f32 0.0, %v1120
    %v1122 = vpop.f32.mrb[0].mxu0
    %1123 = vmatprep.mubr.f32.mxu0 0.0
    %1124 = vmatmul.mubr.f32.gmra.mrb[0].mxu0 %v955
    %v1125 = vpop.f32.mrb[0].mxu0
    %v1126 = vadd.f32 0.0, %v1125
    %v1127 = vpop.f32.mrb[0].mxu0
    %1128 = vmatprep.mubr.f32.mxu0 0.0
    %1129 = vmatmul.mubr.f32.gmra.mrb[0].mxu0 %v956
    %v1130 = vpop.f32.mrb[0].mxu0
    %v1131 = vadd.f32 0.0, %v1130
    %v1132 = vpop.f32.mrb[0].mxu0
    %1133 = vmatprep.mubr.f32.mxu0 0.0
    %1134 = vmatmul.mubr.f32.gmra.mrb[0].mxu0 %v957
    %v1135 = vpop.f32.mrb[0].mxu0
    %v1136 = vadd.f32 0.0, %v1135
    %v1137 = vpop.f32.mrb[0].mxu0
    %1138 = vdwg.mxu0
    %1140 = vset.pattern.permute.xlu0 0
    %1141 = vperm.xlu0 %1140, %v976
    %v1142 = vpop.permute.xlu0 %1141
    %1145 = vset.pattern.permute.xlu0 0
    %1146 = vperm.xlu0 %1145, %v977
    %v1147 = vpop.permute.xlu0 %1146
    %1150 = vset.pattern.permute.xlu0 0
    %1151 = vperm.xlu0 %1150, %v978
    %v1152 = vpop.permute.xlu0 %1151
    %1155 = vset.pattern.permute.xlu0 0
    %1156 = vperm.xlu0 %1155, %v979
    %v1157 = vpop.permute.xlu0 %1156
    %1160 = vset.pattern.permute.xlu0 0
    %1161 = vperm.xlu0 %1160, %v980
    %v1162 = vpop.permute.xlu0 %1161
    %1165 = vset.pattern.permute.xlu0 0
    %1166 = vperm.xlu0 %1165, %v981
    %v1167 = vpop.permute.xlu0 %1166
    %1170 = vset.pattern.permute.xlu0 0
    %1171 = vperm.xlu0 %1170, %v982
    %v1172 = vpop.permute.xlu0 %1171
    %1175 = vset.pattern.permute.xlu0 0
    %1176 = vperm.xlu0 %1175, %v983
    %v1177 = vpop.permute.xlu0 %1176
    %1180 = vset.pattern.permute.xlu0 0
    %1181 = vperm.xlu0 %1180, %v984
    %v1182 = vpop.permute.xlu0 %1181
    %1185 = vset.pattern.permute.xlu0 0
    %1186 = vperm.xlu0 %1185, %v985
    %v1187 = vpop.permute.xlu0 %1186
    %1190 = vset.pattern.permute.xlu0 0
    %1191 = vperm.xlu0 %1190, %v986
    %v1192 = vpop.permute.xlu0 %1191
    %1195 = vset.pattern.permute.xlu0 0
    %1196 = vperm.xlu0 %1195, %v987
    %v1197 = vpop.permute.xlu0 %1196
    %1200 = vset.pattern.permute.xlu0 0
    %1201 = vperm.xlu0 %1200, %v988
    %v1202 = vpop.permute.xlu0 %1201
    %1205 = vset.pattern.permute.xlu0 0
    %1206 = vperm.xlu0 %1205, %v989
    %v1207 = vpop.permute.xlu0 %1206
    %1210 = vset.pattern.permute.xlu0 0
    %1211 = vperm.xlu0 %1210, %v990
    %v1212 = vpop.permute.xlu0 %1211
    %1215 = vset.pattern.permute.xlu0 0
    %1216 = vperm.xlu0 %1215, %v991
    %v1217 = vpop.permute.xlu0 %1216
    %1219 = vmatprep.subr.mxu0 0.0
    %1220 = vmatpush1.msra.mxu0 %v82
    %1221 = vmatprep.subr.mxu0 0.0
    %1222 = vmatpush1.msra.mxu0 %v83
    %1223 = vmatprep.subr.mxu0 0.0
    %1224 = vmatpush1.msra.mxu0 %v84
    %1225 = vmatprep.subr.mxu0 0.0
    %1226 = vmatpush1.msra.mxu0 %v85
    %1227 = vmatprep.subr.mxu0 0.0
    %1228 = vmatpush1.msra.mxu0 %v86
    %1229 = vmatprep.subr.mxu0 0.0
    %1230 = vmatpush1.msra.mxu0 %v87
    %1231 = vmatprep.subr.mxu0 0.0
    %1232 = vmatpush1.msra.mxu0 %v88
    %1233 = vmatprep.subr.mxu0 0.0
    %1234 = vmatpush1.msra.mxu0 %v89
    %1235 = vmatprep.subr.mxu0 0.0
    %1236 = vmatpush1.msra.mxu0 %v90
    %1237 = vmatprep.subr.mxu0 0.0
    %1238 = vmatpush1.msra.mxu0 %v91
    %1239 = vmatprep.subr.mxu0 0.0
    %1240 = vmatpush1.msra.mxu0 %v92
    %1241 = vmatprep.subr.mxu0 0.0
    %1242 = vmatpush1.msra.mxu0 %v93
    %1243 = vmatprep.subr.mxu0 0.0
    %1244 = vmatpush1.msra.mxu0 %v94
    %1245 = vmatprep.subr.mxu0 0.0
    %1246 = vmatpush1.msra.mxu0 %v95
    %1247 = vmatprep.subr.mxu0 0.0
    %1248 = vmatpush1.msra.mxu0 %v96
    %1249 = vmatprep.subr.mxu0 0.0
    %1250 = vmatpush1.msra.mxu0 %v97
    %1251 = vmatprep.subr.mxu0 0.0
    %1252 = vmatpush1.msra.mxu0 0.0
    %1253 = vmatprep.subr.mxu0 0.0
    %1254 = vmatpush1.msra.mxu0 0.0
    %1255 = vmatprep.subr.mxu0 0.0
    %1256 = vmatpush1.msra.mxu0 0.0
    %1257 = vmatprep.subr.mxu0 0.0
    %1258 = vmatpush1.msra.mxu0 0.0
    %1259 = vmatprep.subr.mxu0 0.0
    %1260 = vmatpush1.msra.mxu0 0.0
    %1261 = vmatprep.subr.mxu0 0.0
    %1262 = vmatpush1.msra.mxu0 0.0
    %1263 = vmatprep.subr.mxu0 0.0
    %1264 = vmatpush1.msra.mxu0 0.0
    %1265 = vmatprep.subr.mxu0 0.0
    %1266 = vmatpush1.msra.mxu0 0.0
    %1267 = vmatprep.subr.mxu0 0.0
    %1268 = vmatpush1.msra.mxu0 0.0
    %1269 = vmatprep.subr.mxu0 0.0
    %1270 = vmatpush1.msra.mxu0 0.0
    %1271 = vmatprep.subr.mxu0 0.0
    %1272 = vmatpush1.msra.mxu0 0.0
    %1273 = vmatprep.subr.mxu0 0.0
    %1274 = vmatpush1.msra.mxu0 0.0
    %1275 = vmatprep.subr.mxu0 0.0
    %1276 = vmatpush1.msra.mxu0 0.0
    %1277 = vmatprep.subr.mxu0 0.0
    %1278 = vmatpush1.msra.mxu0 0.0
    %1279 = vmatprep.subr.mxu0 0.0
    %1280 = vmatpush1.msra.mxu0 0.0
    %1281 = vmatprep.subr.mxu0 0.0
    %1282 = vmatpush1.msra.mxu0 0.0
    %1283 = vmatprep.mubr.f32.mxu0 0.0
    %1284 = vmatmul.mubr.f32.gmra.mrb[0].mxu0 %v1061
    %v1285 = vpop.f32.mrb[0].mxu0
    %v1286 = vadd.f32 %v1142, %v1285
    %v1287 = vpop.f32.mrb[0].mxu0
    %1288 = vmatprep.mubr.f32.mxu0 0.0
    %1289 = vmatmul.mubr.f32.gmra.mrb[0].mxu0 %v1066
    %v1290 = vpop.f32.mrb[0].mxu0
    %v1291 = vadd.f32 %v1147, %v1290
    %v1292 = vpop.f32.mrb[0].mxu0
    %1293 = vmatprep.mubr.f32.mxu0 0.0
    %1294 = vmatmul.mubr.f32.gmra.mrb[0].mxu0 %v1071
    %v1295 = vpop.f32.mrb[0].mxu0
    %v1296 = vadd.f32 %v1152, %v1295
    %v1297 = vpop.f32.mrb[0].mxu0
    %1298 = vmatprep.mubr.f32.mxu0 0.0
    %1299 = vmatmul.mubr.f32.gmra.mrb[0].mxu0 %v1076
    %v1300 = vpop.f32.mrb[0].mxu0
    %v1301 = vadd.f32 %v1157, %v1300
    %v1302 = vpop.f32.mrb[0].mxu0
    %1303 = vmatprep.mubr.f32.mxu0 0.0
    %1304 = vmatmul.mubr.f32.gmra.mrb[0].mxu0 %v1081
    %v1305 = vpop.f32.mrb[0].mxu0
    %v1306 = vadd.f32 %v1162, %v1305
    %v1307 = vpop.f32.mrb[0].mxu0
    %1308 = vmatprep.mubr.f32.mxu0 0.0
    %1309 = vmatmul.mubr.f32.gmra.mrb[0].mxu0 %v1086
    %v1310 = vpop.f32.mrb[0].mxu0
    %v1311 = vadd.f32 %v1167, %v1310
    %v1312 = vpop.f32.mrb[0].mxu0
    %1313 = vmatprep.mubr.f32.mxu0 0.0
    %1314 = vmatmul.mubr.f32.gmra.mrb[0].mxu0 %v1091
    %v1315 = vpop.f32.mrb[0].mxu0
    %v1316 = vadd.f32 %v1172, %v1315
    %v1317 = vpop.f32.mrb[0].mxu0
    %1318 = vmatprep.mubr.f32.mxu0 0.0
    %1319 = vmatmul.mubr.f32.gmra.mrb[0].mxu0 %v1096
    %v1320 = vpop.f32.mrb[0].mxu0
    %v1321 = vadd.f32 %v1177, %v1320
    %v1322 = vpop.f32.mrb[0].mxu0
    %1323 = vmatprep.mubr.f32.mxu0 0.0
    %1324 = vmatmul.mubr.f32.gmra.mrb[0].mxu0 %v1101
    %v1325 = vpop.f32.mrb[0].mxu0
    %v1326 = vadd.f32 %v1182, %v1325
    %v1327 = vpop.f32.mrb[0].mxu0
    %1328 = vmatprep.mubr.f32.mxu0 0.0
    %1329 = vmatmul.mubr.f32.gmra.mrb[0].mxu0 %v1106
    %v1330 = vpop.f32.mrb[0].mxu0
    %v1331 = vadd.f32 %v1187, %v1330
    %v1332 = vpop.f32.mrb[0].mxu0
    %1333 = vmatprep.mubr.f32.mxu0 0.0
    %1334 = vmatmul.mubr.f32.gmra.mrb[0].mxu0 %v1111
    %v1335 = vpop.f32.mrb[0].mxu0
    %v1336 = vadd.f32 %v1192, %v1335
    %v1337 = vpop.f32.mrb[0].mxu0
    %1338 = vmatprep.mubr.f32.mxu0 0.0
    %1339 = vmatmul.mubr.f32.gmra.mrb[0].mxu0 %v1116
    %v1340 = vpop.f32.mrb[0].mxu0
    %v1341 = vadd.f32 %v1197, %v1340
    %v1342 = vpop.f32.mrb[0].mxu0
    %1343 = vmatprep.mubr.f32.mxu0 0.0
    %1344 = vmatmul.mubr.f32.gmra.mrb[0].mxu0 %v1121
    %v1345 = vpop.f32.mrb[0].mxu0
    %v1346 = vadd.f32 %v1202, %v1345
    %v1347 = vpop.f32.mrb[0].mxu0
    %1348 = vmatprep.mubr.f32.mxu0 0.0
    %1349 = vmatmul.mubr.f32.gmra.mrb[0].mxu0 %v1126
    %v1350 = vpop.f32.mrb[0].mxu0
    %v1351 = vadd.f32 %v1207, %v1350
    %v1352 = vpop.f32.mrb[0].mxu0
    %1353 = vmatprep.mubr.f32.mxu0 0.0
    %1354 = vmatmul.mubr.f32.gmra.mrb[0].mxu0 %v1131
    %v1355 = vpop.f32.mrb[0].mxu0
    %v1356 = vadd.f32 %v1212, %v1355
    %v1357 = vpop.f32.mrb[0].mxu0
    %1358 = vmatprep.mubr.f32.mxu0 0.0
    %1359 = vmatmul.mubr.f32.gmra.mrb[0].mxu0 %v1136
    %v1360 = vpop.f32.mrb[0].mxu0
    %v1361 = vadd.f32 %v1217, %v1360
    %v1362 = vpop.f32.mrb[0].mxu0
    %1363 = vdwg.mxu0
    %vm1364 = vcmp.ge.f32.partialorder %v1286, 0.0
    %vm1365 = vcmp.ge.f32.partialorder %v1291, 0.0
    %vm1366 = vcmp.ge.f32.partialorder %v1296, 0.0
    %vm1367 = vcmp.ge.f32.partialorder %v1301, 0.0
    %vm1368 = vcmp.ge.f32.partialorder %v1306, 0.0
    %vm1369 = vcmp.ge.f32.partialorder %v1311, 0.0
    %vm1370 = vcmp.ge.f32.partialorder %v1316, 0.0
    %vm1371 = vcmp.ge.f32.partialorder %v1321, 0.0
    %vm1372 = vcmp.ge.f32.partialorder %v1326, 0.0
    %vm1373 = vcmp.ge.f32.partialorder %v1331, 0.0
    %vm1374 = vcmp.ge.f32.partialorder %v1336, 0.0
    %vm1375 = vcmp.ge.f32.partialorder %v1341, 0.0
    %vm1376 = vcmp.ge.f32.partialorder %v1346, 0.0
    %vm1377 = vcmp.ge.f32.partialorder %v1351, 0.0
    %vm1378 = vcmp.ge.f32.partialorder %v1356, 0.0
    %vm1379 = vcmp.ge.f32.partialorder %v1361, 0.0
    %v1380 = vmul.f32 %v1286, 0.01
    %v1381 = vmul.f32 %v1291, 0.01
    %v1382 = vmul.f32 %v1296, 0.01
    %v1383 = vmul.f32 %v1301, 0.01
    %v1384 = vmul.f32 %v1306, 0.01
    %v1385 = vmul.f32 %v1311, 0.01
    %v1386 = vmul.f32 %v1316, 0.01
    %v1387 = vmul.f32 %v1321, 0.01
    %v1388 = vmul.f32 %v1326, 0.01
    %v1389 = vmul.f32 %v1331, 0.01
    %v1390 = vmul.f32 %v1336, 0.01
    %v1391 = vmul.f32 %v1341, 0.01
    %v1392 = vmul.f32 %v1346, 0.01
    %v1393 = vmul.f32 %v1351, 0.01
    %v1394 = vmul.f32 %v1356, 0.01
    %v1395 = vmul.f32 %v1361, 0.01
    %v1396 = vsel %vm1364, %v1286, %v1380
    %v1397 = vsel %vm1365, %v1291, %v1381
    %v1398 = vsel %vm1366, %v1296, %v1382
    %v1399 = vsel %vm1367, %v1301, %v1383
    %v1400 = vsel %vm1368, %v1306, %v1384
    %v1401 = vsel %vm1369, %v1311, %v1385
    %v1402 = vsel %vm1370, %v1316, %v1386
    %v1403 = vsel %vm1371, %v1321, %v1387
    %v1404 = vsel %vm1372, %v1326, %v1388
    %v1405 = vsel %vm1373, %v1331, %v1389
    %v1406 = vsel %vm1374, %v1336, %v1390
    %v1407 = vsel %vm1375, %v1341, %v1391
    %v1408 = vsel %vm1376, %v1346, %v1392
    %v1409 = vsel %vm1377, %v1351, %v1393
    %v1410 = vsel %vm1378, %v1356, %v1394
    %v1411 = vsel %vm1379, %v1361, %v1395
    %1412 = vmatprep.subr.mxu0 0.0
    %1413 = vmatpush1.msra.mxu0 %v959
    %1414 = vmatprep.subr.mxu0 0.0
    %1415 = vmatpush1.msra.mxu0 %v960
    %1416 = vmatprep.subr.mxu0 0.0
    %1417 = vmatpush1.msra.mxu0 %v961
    %1418 = vmatprep.subr.mxu0 0.0
    %1419 = vmatpush1.msra.mxu0 %v962
    %1420 = vmatprep.subr.mxu0 0.0
    %1421 = vmatpush1.msra.mxu0 %v963
    %1422 = vmatprep.subr.mxu0 0.0
    %1423 = vmatpush1.msra.mxu0 %v964
    %1424 = vmatprep.subr.mxu0 0.0
    %1425 = vmatpush1.msra.mxu0 %v965
    %1426 = vmatprep.subr.mxu0 0.0
    %1427 = vmatpush1.msra.mxu0 %v966
    %1428 = vmatprep.subr.mxu0 0.0
    %1429 = vmatpush1.msra.mxu0 %v967
    %1430 = vmatprep.subr.mxu0 0.0
    %1431 = vmatpush1.msra.mxu0 %v968
    %1432 = vmatprep.subr.mxu0 0.0
    %1433 = vmatpush1.msra.mxu0 %v969
    %1434 = vmatprep.subr.mxu0 0.0
    %1435 = vmatpush1.msra.mxu0 %v970
    %1436 = vmatprep.subr.mxu0 0.0
    %1437 = vmatpush1.msra.mxu0 %v971
    %1438 = vmatprep.subr.mxu0 0.0
    %1439 = vmatpush1.msra.mxu0 %v972
    %1440 = vmatprep.subr.mxu0 0.0
    %1441 = vmatpush1.msra.mxu0 %v973
    %1442 = vmatprep.subr.mxu0 0.0
    %1443 = vmatpush1.msra.mxu0 %v974
    %1444 = vmatprep.subr.mxu0 0.0
    %1445 = vmatpush1.msra.mxu0 0.0
    %1446 = vmatprep.subr.mxu0 0.0
    %1447 = vmatpush1.msra.mxu0 0.0
    %1448 = vmatprep.subr.mxu0 0.0
    %1449 = vmatpush1.msra.mxu0 0.0
    %1450 = vmatprep.subr.mxu0 0.0
    %1451 = vmatpush1.msra.mxu0 0.0
    %1452 = vmatprep.subr.mxu0 0.0
    %1453 = vmatpush1.msra.mxu0 0.0
    %1454 = vmatprep.subr.mxu0 0.0
    %1455 = vmatpush1.msra.mxu0 0.0
    %1456 = vmatprep.subr.mxu0 0.0
    %1457 = vmatpush1.msra.mxu0 0.0
    %1458 = vmatprep.subr.mxu0 0.0
    %1459 = vmatpush1.msra.mxu0 0.0
    %1460 = vmatprep.subr.mxu0 0.0
    %1461 = vmatpush1.msra.mxu0 0.0
    %1462 = vmatprep.subr.mxu0 0.0
    %1463 = vmatpush1.msra.mxu0 0.0
    %1464 = vmatprep.subr.mxu0 0.0
    %1465 = vmatpush1.msra.mxu0 0.0
    %1466 = vmatprep.subr.mxu0 0.0
    %1467 = vmatpush1.msra.mxu0 0.0
    %1468 = vmatprep.subr.mxu0 0.0
    %1469 = vmatpush1.msra.mxu0 0.0
    %1470 = vmatprep.subr.mxu0 0.0
    %1471 = vmatpush1.msra.mxu0 0.0
    %1472 = vmatprep.subr.mxu0 0.0
    %1473 = vmatpush1.msra.mxu0 0.0
    %1474 = vmatprep.subr.mxu0 0.0
    %1475 = vmatpush1.msra.mxu0 0.0
    %1476 = vmatprep.mubr.f32.mxu0 0.0
    %1477 = vmatmul.mubr.f32.gmra.mrb[0].mxu0 %v1396
    %v1478 = vpop.f32.mrb[0].mxu0
    %v1479 = vadd.f32 0.0, %v1478
    %v1480 = vpop.f32.mrb[0].mxu0
    %1481 = vmatprep.mubr.f32.mxu0 0.0
    %1482 = vmatmul.mubr.f32.gmra.mrb[0].mxu0 %v1397
    %v1483 = vpop.f32.mrb[0].mxu0
    %v1484 = vadd.f32 0.0, %v1483
    %v1485 = vpop.f32.mrb[0].mxu0
    %1486 = vmatprep.mubr.f32.mxu0 0.0
    %1487 = vmatmul.mubr.f32.gmra.mrb[0].mxu0 %v1398
    %v1488 = vpop.f32.mrb[0].mxu0
    %v1489 = vadd.f32 0.0, %v1488
    %v1490 = vpop.f32.mrb[0].mxu0
    %1491 = vmatprep.mubr.f32.mxu0 0.0
    %1492 = vmatmul.mubr.f32.gmra.mrb[0].mxu0 %v1399
    %v1493 = vpop.f32.mrb[0].mxu0
    %v1494 = vadd.f32 0.0, %v1493
    %v1495 = vpop.f32.mrb[0].mxu0
    %1496 = vmatprep.mubr.f32.mxu0 0.0
    %1497 = vmatmul.mubr.f32.gmra.mrb[0].mxu0 %v1400
    %v1498 = vpop.f32.mrb[0].mxu0
    %v1499 = vadd.f32 0.0, %v1498
    %v1500 = vpop.f32.mrb[0].mxu0
    %1501 = vmatprep.mubr.f32.mxu0 0.0
    %1502 = vmatmul.mubr.f32.gmra.mrb[0].mxu0 %v1401
    %v1503 = vpop.f32.mrb[0].mxu0
    %v1504 = vadd.f32 0.0, %v1503
    %v1505 = vpop.f32.mrb[0].mxu0
    %1506 = vmatprep.mubr.f32.mxu0 0.0
    %1507 = vmatmul.mubr.f32.gmra.mrb[0].mxu0 %v1402
    %v1508 = vpop.f32.mrb[0].mxu0
    %v1509 = vadd.f32 0.0, %v1508
    %v1510 = vpop.f32.mrb[0].mxu0
    %1511 = vmatprep.mubr.f32.mxu0 0.0
    %1512 = vmatmul.mubr.f32.gmra.mrb[0].mxu0 %v1403
    %v1513 = vpop.f32.mrb[0].mxu0
    %v1514 = vadd.f32 0.0, %v1513
    %v1515 = vpop.f32.mrb[0].mxu0
    %1516 = vmatprep.mubr.f32.mxu0 0.0
    %1517 = vmatmul.mubr.f32.gmra.mrb[0].mxu0 %v1404
    %v1518 = vpop.f32.mrb[0].mxu0
    %v1519 = vadd.f32 0.0, %v1518
    %v1520 = vpop.f32.mrb[0].mxu0
    %1521 = vmatprep.mubr.f32.mxu0 0.0
    %1522 = vmatmul.mubr.f32.gmra.mrb[0].mxu0 %v1405
    %v1523 = vpop.f32.mrb[0].mxu0
    %v1524 = vadd.f32 0.0, %v1523
    %v1525 = vpop.f32.mrb[0].mxu0
    %1526 = vmatprep.mubr.f32.mxu0 0.0
    %1527 = vmatmul.mubr.f32.gmra.mrb[0].mxu0 %v1406
    %v1528 = vpop.f32.mrb[0].mxu0
    %v1529 = vadd.f32 0.0, %v1528
    %v1530 = vpop.f32.mrb[0].mxu0
    %1531 = vmatprep.mubr.f32.mxu0 0.0
    %1532 = vmatmul.mubr.f32.gmra.mrb[0].mxu0 %v1407
    %v1533 = vpop.f32.mrb[0].mxu0
    %v1534 = vadd.f32 0.0, %v1533
    %v1535 = vpop.f32.mrb[0].mxu0
    %1536 = vmatprep.mubr.f32.mxu0 0.0
    %1537 = vmatmul.mubr.f32.gmra.mrb[0].mxu0 %v1408
    %v1538 = vpop.f32.mrb[0].mxu0
    %v1539 = vadd.f32 0.0, %v1538
    %v1540 = vpop.f32.mrb[0].mxu0
    %1541 = vmatprep.mubr.f32.mxu0 0.0
    %1542 = vmatmul.mubr.f32.gmra.mrb[0].mxu0 %v1409
    %v1543 = vpop.f32.mrb[0].mxu0
    %v1544 = vadd.f32 0.0, %v1543
    %v1545 = vpop.f32.mrb[0].mxu0
    %1546 = vmatprep.mubr.f32.mxu0 0.0
    %1547 = vmatmul.mubr.f32.gmra.mrb[0].mxu0 %v1410
    %v1548 = vpop.f32.mrb[0].mxu0
    %v1549 = vadd.f32 0.0, %v1548
    %v1550 = vpop.f32.mrb[0].mxu0
    %1551 = vmatprep.mubr.f32.mxu0 0.0
    %1552 = vmatmul.mubr.f32.gmra.mrb[0].mxu0 %v1411
    %v1553 = vpop.f32.mrb[0].mxu0
    %v1554 = vadd.f32 0.0, %v1553
    %v1555 = vpop.f32.mrb[0].mxu0
    %1556 = vdwg.mxu0
    %v1558 = vlaneseq
    %v1559 = vshrl.u32 %v1558, 7
    %v1560 = vsub.s32 0, %v1559
    %v1561 = vrot.slane %v993, %v1560
    %1563 = vmatprep.subr.mxu0 0.0
    %1564 = vmatpush1.msra.mxu0 %v1479
    %1565 = vmatprep.subr.mxu0 0.0
    %1566 = vmatpush1.msra.mxu0 %v1484
    %1567 = vmatprep.subr.mxu0 0.0
    %1568 = vmatpush1.msra.mxu0 %v1489
    %1569 = vmatprep.subr.mxu0 0.0
    %1570 = vmatpush1.msra.mxu0 %v1494
    %1571 = vmatprep.subr.mxu0 0.0
    %1572 = vmatpush1.msra.mxu0 %v1499
    %1573 = vmatprep.subr.mxu0 0.0
    %1574 = vmatpush1.msra.mxu0 %v1504
    %1575 = vmatprep.subr.mxu0 0.0
    %1576 = vmatpush1.msra.mxu0 %v1509
    %1577 = vmatprep.subr.mxu0 0.0
    %1578 = vmatpush1.msra.mxu0 %v1514
    %1579 = vmatprep.subr.mxu0 0.0
    %1580 = vmatpush1.msra.mxu0 %v1519
    %1581 = vmatprep.subr.mxu0 0.0
    %1582 = vmatpush1.msra.mxu0 %v1524
    %1583 = vmatprep.subr.mxu0 0.0
    %1584 = vmatpush1.msra.mxu0 %v1529
    %1585 = vmatprep.subr.mxu0 0.0
    %1586 = vmatpush1.msra.mxu0 %v1534
    %1587 = vmatprep.subr.mxu0 0.0
    %1588 = vmatpush1.msra.mxu0 %v1539
    %1589 = vmatprep.subr.mxu0 0.0
    %1590 = vmatpush1.msra.mxu0 %v1544
    %1591 = vmatprep.subr.mxu0 0.0
    %1592 = vmatpush1.msra.mxu0 %v1549
    %1593 = vmatprep.subr.mxu0 0.0
    %1594 = vmatpush1.msra.mxu0 %v1554
    %1595 = vmatprep.subr.mxu0 0.0
    %1596 = vmatpush1.msra.mxu0 0.0
    %1597 = vmatprep.subr.mxu0 0.0
    %1598 = vmatpush1.msra.mxu0 0.0
    %1599 = vmatprep.subr.mxu0 0.0
    %1600 = vmatpush1.msra.mxu0 0.0
    %1601 = vmatprep.subr.mxu0 0.0
    %1602 = vmatpush1.msra.mxu0 0.0
    %1603 = vmatprep.subr.mxu0 0.0
    %1604 = vmatpush1.msra.mxu0 0.0
    %1605 = vmatprep.subr.mxu0 0.0
    %1606 = vmatpush1.msra.mxu0 0.0
    %1607 = vmatprep.subr.mxu0 0.0
    %1608 = vmatpush1.msra.mxu0 0.0
    %1609 = vmatprep.subr.mxu0 0.0
    %1610 = vmatpush1.msra.mxu0 0.0
    %1611 = vmatprep.subr.mxu0 0.0
    %1612 = vmatpush1.msra.mxu0 0.0
    %1613 = vmatprep.subr.mxu0 0.0
    %1614 = vmatpush1.msra.mxu0 0.0
    %1615 = vmatprep.subr.mxu0 0.0
    %1616 = vmatpush1.msra.mxu0 0.0
    %1617 = vmatprep.subr.mxu0 0.0
    %1618 = vmatpush1.msra.mxu0 0.0
    %1619 = vmatprep.subr.mxu0 0.0
    %1620 = vmatpush1.msra.mxu0 0.0
    %1621 = vmatprep.subr.mxu0 0.0
    %1622 = vmatpush1.msra.mxu0 0.0
    %1623 = vmatprep.subr.mxu0 0.0
    %1624 = vmatpush1.msra.mxu0 0.0
    %1625 = vmatprep.subr.mxu0 0.0
    %1626 = vmatpush1.msra.mxu0 0.0
    %1627 = vmatprep.mubr.f32.mxu0 0.0
    %1628 = vmatmul.mubr.f32.gmra.mrb[0].mxu0 %v98
    %v1629 = vpop.f32.mrb[0].mxu0
    %v1630 = vadd.f32 %v1561, %v1629
    %v1631 = vpop.f32.mrb[0].mxu0
    %1632 = vmatprep.mubr.f32.mxu0 0.0
    %1633 = vmatmul.mubr.f32.gmra.mrb[0].mxu0 %v99
    %v1634 = vpop.f32.mrb[0].mxu0
    %v1635 = vadd.f32 %v1561, %v1634
    %v1636 = vpop.f32.mrb[0].mxu0
    %1637 = vmatprep.mubr.f32.mxu0 0.0
    %1638 = vmatmul.mubr.f32.gmra.mrb[0].mxu0 %v100
    %v1639 = vpop.f32.mrb[0].mxu0
    %v1640 = vadd.f32 %v1561, %v1639
    %v1641 = vpop.f32.mrb[0].mxu0
    %1642 = vmatprep.mubr.f32.mxu0 0.0
    %1643 = vmatmul.mubr.f32.gmra.mrb[0].mxu0 %v101
    %v1644 = vpop.f32.mrb[0].mxu0
    %v1645 = vadd.f32 %v1561, %v1644
    %v1646 = vpop.f32.mrb[0].mxu0
    %1647 = vmatprep.mubr.f32.mxu0 0.0
    %1648 = vmatmul.mubr.f32.gmra.mrb[0].mxu0 %v102
    %v1649 = vpop.f32.mrb[0].mxu0
    %v1650 = vadd.f32 %v1561, %v1649
    %v1651 = vpop.f32.mrb[0].mxu0
    %1652 = vmatprep.mubr.f32.mxu0 0.0
    %1653 = vmatmul.mubr.f32.gmra.mrb[0].mxu0 %v103
    %v1654 = vpop.f32.mrb[0].mxu0
    %v1655 = vadd.f32 %v1561, %v1654
    %v1656 = vpop.f32.mrb[0].mxu0
    %1657 = vmatprep.mubr.f32.mxu0 0.0
    %1658 = vmatmul.mubr.f32.gmra.mrb[0].mxu0 %v104
    %v1659 = vpop.f32.mrb[0].mxu0
    %v1660 = vadd.f32 %v1561, %v1659
    %v1661 = vpop.f32.mrb[0].mxu0
    %1662 = vmatprep.mubr.f32.mxu0 0.0
    %1663 = vmatmul.mubr.f32.gmra.mrb[0].mxu0 %v105
    %v1664 = vpop.f32.mrb[0].mxu0
    %v1665 = vadd.f32 %v1561, %v1664
    %v1666 = vpop.f32.mrb[0].mxu0
    %1667 = vmatprep.mubr.f32.mxu0 0.0
    %1668 = vmatmul.mubr.f32.gmra.mrb[0].mxu0 %v106
    %v1669 = vpop.f32.mrb[0].mxu0
    %v1670 = vadd.f32 %v1561, %v1669
    %v1671 = vpop.f32.mrb[0].mxu0
    %1672 = vmatprep.mubr.f32.mxu0 0.0
    %1673 = vmatmul.mubr.f32.gmra.mrb[0].mxu0 %v107
    %v1674 = vpop.f32.mrb[0].mxu0
    %v1675 = vadd.f32 %v1561, %v1674
    %v1676 = vpop.f32.mrb[0].mxu0
    %1677 = vmatprep.mubr.f32.mxu0 0.0
    %1678 = vmatmul.mubr.f32.gmra.mrb[0].mxu0 %v108
    %v1679 = vpop.f32.mrb[0].mxu0
    %v1680 = vadd.f32 %v1561, %v1679
    %v1681 = vpop.f32.mrb[0].mxu0
    %1682 = vmatprep.mubr.f32.mxu0 0.0
    %1683 = vmatmul.mubr.f32.gmra.mrb[0].mxu0 %v109
    %v1684 = vpop.f32.mrb[0].mxu0
    %v1685 = vadd.f32 %v1561, %v1684
    %v1686 = vpop.f32.mrb[0].mxu0
    %1687 = vmatprep.mubr.f32.mxu0 0.0
    %1688 = vmatmul.mubr.f32.gmra.mrb[0].mxu0 %v110
    %v1689 = vpop.f32.mrb[0].mxu0
    %v1690 = vadd.f32 %v1561, %v1689
    %v1691 = vpop.f32.mrb[0].mxu0
    %1692 = vmatprep.mubr.f32.mxu0 0.0
    %1693 = vmatmul.mubr.f32.gmra.mrb[0].mxu0 %v111
    %v1694 = vpop.f32.mrb[0].mxu0
    %v1695 = vadd.f32 %v1561, %v1694
    %v1696 = vpop.f32.mrb[0].mxu0
    %1697 = vmatprep.mubr.f32.mxu0 0.0
    %1698 = vmatmul.mubr.f32.gmra.mrb[0].mxu0 %v112
    %v1699 = vpop.f32.mrb[0].mxu0
    %v1700 = vadd.f32 %v1561, %v1699
    %v1701 = vpop.f32.mrb[0].mxu0
    %1702 = vmatprep.mubr.f32.mxu0 0.0
    %1703 = vmatmul.mubr.f32.gmra.mrb[0].mxu0 %v113
    %v1704 = vpop.f32.mrb[0].mxu0
    %v1705 = vadd.f32 %v1561, %v1704
    %v1706 = vpop.f32.mrb[0].mxu0
    %1707 = vdwg.mxu0
    %vm1708 = vcmp.ge.f32.partialorder %v1630, 0.0
    %vm1709 = vcmp.ge.f32.partialorder %v1635, 0.0
    %vm1710 = vcmp.ge.f32.partialorder %v1640, 0.0
    %vm1711 = vcmp.ge.f32.partialorder %v1645, 0.0
    %vm1712 = vcmp.ge.f32.partialorder %v1650, 0.0
    %vm1713 = vcmp.ge.f32.partialorder %v1655, 0.0
    %vm1714 = vcmp.ge.f32.partialorder %v1660, 0.0
    %vm1715 = vcmp.ge.f32.partialorder %v1665, 0.0
    %vm1716 = vcmp.ge.f32.partialorder %v1670, 0.0
    %vm1717 = vcmp.ge.f32.partialorder %v1675, 0.0
    %vm1718 = vcmp.ge.f32.partialorder %v1680, 0.0
    %vm1719 = vcmp.ge.f32.partialorder %v1685, 0.0
    %vm1720 = vcmp.ge.f32.partialorder %v1690, 0.0
    %vm1721 = vcmp.ge.f32.partialorder %v1695, 0.0
    %vm1722 = vcmp.ge.f32.partialorder %v1700, 0.0
    %vm1723 = vcmp.ge.f32.partialorder %v1705, 0.0
    %v1724 = vmul.f32 %v1630, 0.01
    %v1725 = vmul.f32 %v1635, 0.01
    %v1726 = vmul.f32 %v1640, 0.01
    %v1727 = vmul.f32 %v1645, 0.01
    %v1728 = vmul.f32 %v1650, 0.01
    %v1729 = vmul.f32 %v1655, 0.01
    %v1730 = vmul.f32 %v1660, 0.01
    %v1731 = vmul.f32 %v1665, 0.01
    %v1732 = vmul.f32 %v1670, 0.01
    %v1733 = vmul.f32 %v1675, 0.01
    %v1734 = vmul.f32 %v1680, 0.01
    %v1735 = vmul.f32 %v1685, 0.01
    %v1736 = vmul.f32 %v1690, 0.01
    %v1737 = vmul.f32 %v1695, 0.01
    %v1738 = vmul.f32 %v1700, 0.01
    %v1739 = vmul.f32 %v1705, 0.01
    %v1740 = vsel %vm1708, %v1630, %v1724
    %v1741 = vsel %vm1709, %v1635, %v1725
    %v1742 = vsel %vm1710, %v1640, %v1726
    %v1743 = vsel %vm1711, %v1645, %v1727
    %v1744 = vsel %vm1712, %v1650, %v1728
    %v1745 = vsel %vm1713, %v1655, %v1729
    %v1746 = vsel %vm1714, %v1660, %v1730
    %v1747 = vsel %vm1715, %v1665, %v1731
    %v1748 = vsel %vm1716, %v1670, %v1732
    %v1749 = vsel %vm1717, %v1675, %v1733
    %v1750 = vsel %vm1718, %v1680, %v1734
    %v1751 = vsel %vm1719, %v1685, %v1735
    %v1752 = vsel %vm1720, %v1690, %v1736
    %v1753 = vsel %vm1721, %v1695, %v1737
    %v1754 = vsel %vm1722, %v1700, %v1738
    %v1755 = vsel %vm1723, %v1705, %v1739
    %s1756 = scalar_lea.vmem %s3, 256
    %v1757 = vld [vmem:[%s1756] sm:$0xff]
    %v1758 = vld [vmem:[%s1756 + $0x8] sm:$0xff]
    %v1759 = vld [vmem:[%s1756 + $0x10] sm:$0xff]
    %v1760 = vld [vmem:[%s1756 + $0x18] sm:$0xff]
    %v1761 = vld [vmem:[%s1756 + $0x20] sm:$0xff]
    %v1762 = vld [vmem:[%s1756 + $0x28] sm:$0xff]
    %v1763 = vld [vmem:[%s1756 + $0x30] sm:$0xff]
    %v1764 = vld [vmem:[%s1756 + $0x38] sm:$0xff]
    %v1765 = vld [vmem:[%s1756 + $0x40] sm:$0xff]
    %v1766 = vld [vmem:[%s1756 + $0x48] sm:$0xff]
    %v1767 = vld [vmem:[%s1756 + $0x50] sm:$0xff]
    %v1768 = vld [vmem:[%s1756 + $0x58] sm:$0xff]
    %v1769 = vld [vmem:[%s1756 + $0x60] sm:$0xff]
    %v1770 = vld [vmem:[%s1756 + $0x68] sm:$0xff]
    %v1771 = vld [vmem:[%s1756 + $0x70] sm:$0xff]
    %v1772 = vld [vmem:[%s1756 + $0x78] sm:$0xff]
    %s1773 = scalar_lea.vmem [#allocation8], 256
    %v1774 = vld [vmem:[%s1773] sm:$0xff]
    %v1775 = vld [vmem:[%s1773 + $0x8] sm:$0xff]
    %v1776 = vld [vmem:[%s1773 + $0x10] sm:$0xff]
    %v1777 = vld [vmem:[%s1773 + $0x18] sm:$0xff]
    %v1778 = vld [vmem:[%s1773 + $0x20] sm:$0xff]
    %v1779 = vld [vmem:[%s1773 + $0x28] sm:$0xff]
    %v1780 = vld [vmem:[%s1773 + $0x30] sm:$0xff]
    %v1781 = vld [vmem:[%s1773 + $0x38] sm:$0xff]
    %v1782 = vld [vmem:[%s1773 + $0x40] sm:$0xff]
    %v1783 = vld [vmem:[%s1773 + $0x48] sm:$0xff]
    %v1784 = vld [vmem:[%s1773 + $0x50] sm:$0xff]
    %v1785 = vld [vmem:[%s1773 + $0x58] sm:$0xff]
    %v1786 = vld [vmem:[%s1773 + $0x60] sm:$0xff]
    %v1787 = vld [vmem:[%s1773 + $0x68] sm:$0xff]
    %v1788 = vld [vmem:[%s1773 + $0x70] sm:$0xff]
    %v1789 = vld [vmem:[%s1773 + $0x78] sm:$0xff]
    %s1790 = scalar_lea.vmem %s5, 256
    %v1791 = vld [vmem:[%s1790] sm:$0xff]
    %v1792 = vld [vmem:[%s1790 + $0x8] sm:$0xff]
    %v1793 = vld [vmem:[%s1790 + $0x10] sm:$0xff]
    %v1794 = vld [vmem:[%s1790 + $0x18] sm:$0xff]
    %v1795 = vld [vmem:[%s1790 + $0x20] sm:$0xff]
    %v1796 = vld [vmem:[%s1790 + $0x28] sm:$0xff]
    %v1797 = vld [vmem:[%s1790 + $0x30] sm:$0xff]
    %v1798 = vld [vmem:[%s1790 + $0x38] sm:$0xff]
    %v1799 = vld [vmem:[%s1790 + $0x40] sm:$0xff]
    %v1800 = vld [vmem:[%s1790 + $0x48] sm:$0xff]
    %v1801 = vld [vmem:[%s1790 + $0x50] sm:$0xff]
    %v1802 = vld [vmem:[%s1790 + $0x58] sm:$0xff]
    %v1803 = vld [vmem:[%s1790 + $0x60] sm:$0xff]
    %v1804 = vld [vmem:[%s1790 + $0x68] sm:$0xff]
    %v1805 = vld [vmem:[%s1790 + $0x70] sm:$0xff]
    %v1806 = vld [vmem:[%s1790 + $0x78] sm:$0xff]
    %s1807 = scalar_lea.vmem %s6, 2
    %v1808 = vld [vmem:[%s1807] sm:$0x1]
    %1809 = vmatprep.subr.mxu0 0.0
    %1810 = vmatpush1.msra.mxu0 %v1740
    %1811 = vmatprep.subr.mxu0 0.0
    %1812 = vmatpush1.msra.mxu0 %v1741
    %1813 = vmatprep.subr.mxu0 0.0
    %1814 = vmatpush1.msra.mxu0 %v1742
    %1815 = vmatprep.subr.mxu0 0.0
    %1816 = vmatpush1.msra.mxu0 %v1743
    %1817 = vmatprep.subr.mxu0 0.0
    %1818 = vmatpush1.msra.mxu0 %v1744
    %1819 = vmatprep.subr.mxu0 0.0
    %1820 = vmatpush1.msra.mxu0 %v1745
    %1821 = vmatprep.subr.mxu0 0.0
    %1822 = vmatpush1.msra.mxu0 %v1746
    %1823 = vmatprep.subr.mxu0 0.0
    %1824 = vmatpush1.msra.mxu0 %v1747
    %1825 = vmatprep.subr.mxu0 0.0
    %1826 = vmatpush1.msra.mxu0 %v1748
    %1827 = vmatprep.subr.mxu0 0.0
    %1828 = vmatpush1.msra.mxu0 %v1749
    %1829 = vmatprep.subr.mxu0 0.0
    %1830 = vmatpush1.msra.mxu0 %v1750
    %1831 = vmatprep.subr.mxu0 0.0
    %1832 = vmatpush1.msra.mxu0 %v1751
    %1833 = vmatprep.subr.mxu0 0.0
    %1834 = vmatpush1.msra.mxu0 %v1752
    %1835 = vmatprep.subr.mxu0 0.0
    %1836 = vmatpush1.msra.mxu0 %v1753
    %1837 = vmatprep.subr.mxu0 0.0
    %1838 = vmatpush1.msra.mxu0 %v1754
    %1839 = vmatprep.subr.mxu0 0.0
    %1840 = vmatpush1.msra.mxu0 %v1755
    %1841 = vmatprep.subr.mxu0 0.0
    %1842 = vmatpush1.msra.mxu0 0.0
    %1843 = vmatprep.subr.mxu0 0.0
    %1844 = vmatpush1.msra.mxu0 0.0
    %1845 = vmatprep.subr.mxu0 0.0
    %1846 = vmatpush1.msra.mxu0 0.0
    %1847 = vmatprep.subr.mxu0 0.0
    %1848 = vmatpush1.msra.mxu0 0.0
    %1849 = vmatprep.subr.mxu0 0.0
    %1850 = vmatpush1.msra.mxu0 0.0
    %1851 = vmatprep.subr.mxu0 0.0
    %1852 = vmatpush1.msra.mxu0 0.0
    %1853 = vmatprep.subr.mxu0 0.0
    %1854 = vmatpush1.msra.mxu0 0.0
    %1855 = vmatprep.subr.mxu0 0.0
    %1856 = vmatpush1.msra.mxu0 0.0
    %1857 = vmatprep.subr.mxu0 0.0
    %1858 = vmatpush1.msra.mxu0 0.0
    %1859 = vmatprep.subr.mxu0 0.0
    %1860 = vmatpush1.msra.mxu0 0.0
    %1861 = vmatprep.subr.mxu0 0.0
    %1862 = vmatpush1.msra.mxu0 0.0
    %1863 = vmatprep.subr.mxu0 0.0
    %1864 = vmatpush1.msra.mxu0 0.0
    %1865 = vmatprep.subr.mxu0 0.0
    %1866 = vmatpush1.msra.mxu0 0.0
    %1867 = vmatprep.subr.mxu0 0.0
    %1868 = vmatpush1.msra.mxu0 0.0
    %1869 = vmatprep.subr.mxu0 0.0
    %1870 = vmatpush1.msra.mxu0 0.0
    %1871 = vmatprep.subr.mxu0 0.0
    %1872 = vmatpush1.msra.mxu0 0.0
    %1873 = vmatprep.mubr.f32.mxu0 0.0
    %1874 = vmatmul.mubr.f32.gmra.mrb[0].mxu0 %v1757
    %v1875 = vpop.f32.mrb[0].mxu0
    %v1876 = vadd.f32 0.0, %v1875
    %v1877 = vpop.f32.mrb[0].mxu0
    %1878 = vmatprep.mubr.f32.mxu0 0.0
    %1879 = vmatmul.mubr.f32.gmra.mrb[0].mxu0 %v1758
    %v1880 = vpop.f32.mrb[0].mxu0
    %v1881 = vadd.f32 0.0, %v1880
    %v1882 = vpop.f32.mrb[0].mxu0
    %1883 = vmatprep.mubr.f32.mxu0 0.0
    %1884 = vmatmul.mubr.f32.gmra.mrb[0].mxu0 %v1759
    %v1885 = vpop.f32.mrb[0].mxu0
    %v1886 = vadd.f32 0.0, %v1885
    %v1887 = vpop.f32.mrb[0].mxu0
    %1888 = vmatprep.mubr.f32.mxu0 0.0
    %1889 = vmatmul.mubr.f32.gmra.mrb[0].mxu0 %v1760
    %v1890 = vpop.f32.mrb[0].mxu0
    %v1891 = vadd.f32 0.0, %v1890
    %v1892 = vpop.f32.mrb[0].mxu0
    %1893 = vmatprep.mubr.f32.mxu0 0.0
    %1894 = vmatmul.mubr.f32.gmra.mrb[0].mxu0 %v1761
    %v1895 = vpop.f32.mrb[0].mxu0
    %v1896 = vadd.f32 0.0, %v1895
    %v1897 = vpop.f32.mrb[0].mxu0
    %1898 = vmatprep.mubr.f32.mxu0 0.0
    %1899 = vmatmul.mubr.f32.gmra.mrb[0].mxu0 %v1762
    %v1900 = vpop.f32.mrb[0].mxu0
    %v1901 = vadd.f32 0.0, %v1900
    %v1902 = vpop.f32.mrb[0].mxu0
    %1903 = vmatprep.mubr.f32.mxu0 0.0
    %1904 = vmatmul.mubr.f32.gmra.mrb[0].mxu0 %v1763
    %v1905 = vpop.f32.mrb[0].mxu0
    %v1906 = vadd.f32 0.0, %v1905
    %v1907 = vpop.f32.mrb[0].mxu0
    %1908 = vmatprep.mubr.f32.mxu0 0.0
    %1909 = vmatmul.mubr.f32.gmra.mrb[0].mxu0 %v1764
    %v1910 = vpop.f32.mrb[0].mxu0
    %v1911 = vadd.f32 0.0, %v1910
    %v1912 = vpop.f32.mrb[0].mxu0
    %1913 = vmatprep.mubr.f32.mxu0 0.0
    %1914 = vmatmul.mubr.f32.gmra.mrb[0].mxu0 %v1765
    %v1915 = vpop.f32.mrb[0].mxu0
    %v1916 = vadd.f32 0.0, %v1915
    %v1917 = vpop.f32.mrb[0].mxu0
    %1918 = vmatprep.mubr.f32.mxu0 0.0
    %1919 = vmatmul.mubr.f32.gmra.mrb[0].mxu0 %v1766
    %v1920 = vpop.f32.mrb[0].mxu0
    %v1921 = vadd.f32 0.0, %v1920
    %v1922 = vpop.f32.mrb[0].mxu0
    %1923 = vmatprep.mubr.f32.mxu0 0.0
    %1924 = vmatmul.mubr.f32.gmra.mrb[0].mxu0 %v1767
    %v1925 = vpop.f32.mrb[0].mxu0
    %v1926 = vadd.f32 0.0, %v1925
    %v1927 = vpop.f32.mrb[0].mxu0
    %1928 = vmatprep.mubr.f32.mxu0 0.0
    %1929 = vmatmul.mubr.f32.gmra.mrb[0].mxu0 %v1768
    %v1930 = vpop.f32.mrb[0].mxu0
    %v1931 = vadd.f32 0.0, %v1930
    %v1932 = vpop.f32.mrb[0].mxu0
    %1933 = vmatprep.mubr.f32.mxu0 0.0
    %1934 = vmatmul.mubr.f32.gmra.mrb[0].mxu0 %v1769
    %v1935 = vpop.f32.mrb[0].mxu0
    %v1936 = vadd.f32 0.0, %v1935
    %v1937 = vpop.f32.mrb[0].mxu0
    %1938 = vmatprep.mubr.f32.mxu0 0.0
    %1939 = vmatmul.mubr.f32.gmra.mrb[0].mxu0 %v1770
    %v1940 = vpop.f32.mrb[0].mxu0
    %v1941 = vadd.f32 0.0, %v1940
    %v1942 = vpop.f32.mrb[0].mxu0
    %1943 = vmatprep.mubr.f32.mxu0 0.0
    %1944 = vmatmul.mubr.f32.gmra.mrb[0].mxu0 %v1771
    %v1945 = vpop.f32.mrb[0].mxu0
    %v1946 = vadd.f32 0.0, %v1945
    %v1947 = vpop.f32.mrb[0].mxu0
    %1948 = vmatprep.mubr.f32.mxu0 0.0
    %1949 = vmatmul.mubr.f32.gmra.mrb[0].mxu0 %v1772
    %v1950 = vpop.f32.mrb[0].mxu0
    %v1951 = vadd.f32 0.0, %v1950
    %v1952 = vpop.f32.mrb[0].mxu0
    %1953 = vdwg.mxu0
    %1955 = vset.pattern.permute.xlu0 0
    %1956 = vperm.xlu0 %1955, %v1791
    %v1957 = vpop.permute.xlu0 %1956
    %1960 = vset.pattern.permute.xlu0 0
    %1961 = vperm.xlu0 %1960, %v1792
    %v1962 = vpop.permute.xlu0 %1961
    %1965 = vset.pattern.permute.xlu0 0
    %1966 = vperm.xlu0 %1965, %v1793
    %v1967 = vpop.permute.xlu0 %1966
    %1970 = vset.pattern.permute.xlu0 0
    %1971 = vperm.xlu0 %1970, %v1794
    %v1972 = vpop.permute.xlu0 %1971
    %1975 = vset.pattern.permute.xlu0 0
    %1976 = vperm.xlu0 %1975, %v1795
    %v1977 = vpop.permute.xlu0 %1976
    %1980 = vset.pattern.permute.xlu0 0
    %1981 = vperm.xlu0 %1980, %v1796
    %v1982 = vpop.permute.xlu0 %1981
    %1985 = vset.pattern.permute.xlu0 0
    %1986 = vperm.xlu0 %1985, %v1797
    %v1987 = vpop.permute.xlu0 %1986
    %1990 = vset.pattern.permute.xlu0 0
    %1991 = vperm.xlu0 %1990, %v1798
    %v1992 = vpop.permute.xlu0 %1991
    %1995 = vset.pattern.permute.xlu0 0
    %1996 = vperm.xlu0 %1995, %v1799
    %v1997 = vpop.permute.xlu0 %1996
    %2000 = vset.pattern.permute.xlu0 0
    %2001 = vperm.xlu0 %2000, %v1800
    %v2002 = vpop.permute.xlu0 %2001
    %2005 = vset.pattern.permute.xlu0 0
    %2006 = vperm.xlu0 %2005, %v1801
    %v2007 = vpop.permute.xlu0 %2006
    %2010 = vset.pattern.permute.xlu0 0
    %2011 = vperm.xlu0 %2010, %v1802
    %v2012 = vpop.permute.xlu0 %2011
    %2015 = vset.pattern.permute.xlu0 0
    %2016 = vperm.xlu0 %2015, %v1803
    %v2017 = vpop.permute.xlu0 %2016
    %2020 = vset.pattern.permute.xlu0 0
    %2021 = vperm.xlu0 %2020, %v1804
    %v2022 = vpop.permute.xlu0 %2021
    %2025 = vset.pattern.permute.xlu0 0
    %2026 = vperm.xlu0 %2025, %v1805
    %v2027 = vpop.permute.xlu0 %2026
    %2030 = vset.pattern.permute.xlu0 0
    %2031 = vperm.xlu0 %2030, %v1806
    %v2032 = vpop.permute.xlu0 %2031
    %2034 = vmatprep.subr.mxu0 0.0
    %2035 = vmatpush1.msra.mxu0 %v82
    %2036 = vmatprep.subr.mxu0 0.0
    %2037 = vmatpush1.msra.mxu0 %v83
    %2038 = vmatprep.subr.mxu0 0.0
    %2039 = vmatpush1.msra.mxu0 %v84
    %2040 = vmatprep.subr.mxu0 0.0
    %2041 = vmatpush1.msra.mxu0 %v85
    %2042 = vmatprep.subr.mxu0 0.0
    %2043 = vmatpush1.msra.mxu0 %v86
    %2044 = vmatprep.subr.mxu0 0.0
    %2045 = vmatpush1.msra.mxu0 %v87
    %2046 = vmatprep.subr.mxu0 0.0
    %2047 = vmatpush1.msra.mxu0 %v88
    %2048 = vmatprep.subr.mxu0 0.0
    %2049 = vmatpush1.msra.mxu0 %v89
    %2050 = vmatprep.subr.mxu0 0.0
    %2051 = vmatpush1.msra.mxu0 %v90
    %2052 = vmatprep.subr.mxu0 0.0
    %2053 = vmatpush1.msra.mxu0 %v91
    %2054 = vmatprep.subr.mxu0 0.0
    %2055 = vmatpush1.msra.mxu0 %v92
    %2056 = vmatprep.subr.mxu0 0.0
    %2057 = vmatpush1.msra.mxu0 %v93
    %2058 = vmatprep.subr.mxu0 0.0
    %2059 = vmatpush1.msra.mxu0 %v94
    %2060 = vmatprep.subr.mxu0 0.0
    %2061 = vmatpush1.msra.mxu0 %v95
    %2062 = vmatprep.subr.mxu0 0.0
    %2063 = vmatpush1.msra.mxu0 %v96
    %2064 = vmatprep.subr.mxu0 0.0
    %2065 = vmatpush1.msra.mxu0 %v97
    %2066 = vmatprep.subr.mxu0 0.0
    %2067 = vmatpush1.msra.mxu0 0.0
    %2068 = vmatprep.subr.mxu0 0.0
    %2069 = vmatpush1.msra.mxu0 0.0
    %2070 = vmatprep.subr.mxu0 0.0
    %2071 = vmatpush1.msra.mxu0 0.0
    %2072 = vmatprep.subr.mxu0 0.0
    %2073 = vmatpush1.msra.mxu0 0.0
    %2074 = vmatprep.subr.mxu0 0.0
    %2075 = vmatpush1.msra.mxu0 0.0
    %2076 = vmatprep.subr.mxu0 0.0
    %2077 = vmatpush1.msra.mxu0 0.0
    %2078 = vmatprep.subr.mxu0 0.0
    %2079 = vmatpush1.msra.mxu0 0.0
    %2080 = vmatprep.subr.mxu0 0.0
    %2081 = vmatpush1.msra.mxu0 0.0
    %2082 = vmatprep.subr.mxu0 0.0
    %2083 = vmatpush1.msra.mxu0 0.0
    %2084 = vmatprep.subr.mxu0 0.0
    %2085 = vmatpush1.msra.mxu0 0.0
    %2086 = vmatprep.subr.mxu0 0.0
    %2087 = vmatpush1.msra.mxu0 0.0
    %2088 = vmatprep.subr.mxu0 0.0
    %2089 = vmatpush1.msra.mxu0 0.0
    %2090 = vmatprep.subr.mxu0 0.0
    %2091 = vmatpush1.msra.mxu0 0.0
    %2092 = vmatprep.subr.mxu0 0.0
    %2093 = vmatpush1.msra.mxu0 0.0
    %2094 = vmatprep.subr.mxu0 0.0
    %2095 = vmatpush1.msra.mxu0 0.0
    %2096 = vmatprep.subr.mxu0 0.0
    %2097 = vmatpush1.msra.mxu0 0.0
    %2098 = vmatprep.mubr.f32.mxu0 0.0
    %2099 = vmatmul.mubr.f32.gmra.mrb[0].mxu0 %v1876
    %v2100 = vpop.f32.mrb[0].mxu0
    %v2101 = vadd.f32 %v1957, %v2100
    %v2102 = vpop.f32.mrb[0].mxu0
    %2103 = vmatprep.mubr.f32.mxu0 0.0
    %2104 = vmatmul.mubr.f32.gmra.mrb[0].mxu0 %v1881
    %v2105 = vpop.f32.mrb[0].mxu0
    %v2106 = vadd.f32 %v1962, %v2105
    %v2107 = vpop.f32.mrb[0].mxu0
    %2108 = vmatprep.mubr.f32.mxu0 0.0
    %2109 = vmatmul.mubr.f32.gmra.mrb[0].mxu0 %v1886
    %v2110 = vpop.f32.mrb[0].mxu0
    %v2111 = vadd.f32 %v1967, %v2110
    %v2112 = vpop.f32.mrb[0].mxu0
    %2113 = vmatprep.mubr.f32.mxu0 0.0
    %2114 = vmatmul.mubr.f32.gmra.mrb[0].mxu0 %v1891
    %v2115 = vpop.f32.mrb[0].mxu0
    %v2116 = vadd.f32 %v1972, %v2115
    %v2117 = vpop.f32.mrb[0].mxu0
    %2118 = vmatprep.mubr.f32.mxu0 0.0
    %2119 = vmatmul.mubr.f32.gmra.mrb[0].mxu0 %v1896
    %v2120 = vpop.f32.mrb[0].mxu0
    %v2121 = vadd.f32 %v1977, %v2120
    %v2122 = vpop.f32.mrb[0].mxu0
    %2123 = vmatprep.mubr.f32.mxu0 0.0
    %2124 = vmatmul.mubr.f32.gmra.mrb[0].mxu0 %v1901
    %v2125 = vpop.f32.mrb[0].mxu0
    %v2126 = vadd.f32 %v1982, %v2125
    %v2127 = vpop.f32.mrb[0].mxu0
    %2128 = vmatprep.mubr.f32.mxu0 0.0
    %2129 = vmatmul.mubr.f32.gmra.mrb[0].mxu0 %v1906
    %v2130 = vpop.f32.mrb[0].mxu0
    %v2131 = vadd.f32 %v1987, %v2130
    %v2132 = vpop.f32.mrb[0].mxu0
    %2133 = vmatprep.mubr.f32.mxu0 0.0
    %2134 = vmatmul.mubr.f32.gmra.mrb[0].mxu0 %v1911
    %v2135 = vpop.f32.mrb[0].mxu0
    %v2136 = vadd.f32 %v1992, %v2135
    %v2137 = vpop.f32.mrb[0].mxu0
    %2138 = vmatprep.mubr.f32.mxu0 0.0
    %2139 = vmatmul.mubr.f32.gmra.mrb[0].mxu0 %v1916
    %v2140 = vpop.f32.mrb[0].mxu0
    %v2141 = vadd.f32 %v1997, %v2140
    %v2142 = vpop.f32.mrb[0].mxu0
    %2143 = vmatprep.mubr.f32.mxu0 0.0
    %2144 = vmatmul.mubr.f32.gmra.mrb[0].mxu0 %v1921
    %v2145 = vpop.f32.mrb[0].mxu0
    %v2146 = vadd.f32 %v2002, %v2145
    %v2147 = vpop.f32.mrb[0].mxu0
    %2148 = vmatprep.mubr.f32.mxu0 0.0
    %2149 = vmatmul.mubr.f32.gmra.mrb[0].mxu0 %v1926
    %v2150 = vpop.f32.mrb[0].mxu0
    %v2151 = vadd.f32 %v2007, %v2150
    %v2152 = vpop.f32.mrb[0].mxu0
    %2153 = vmatprep.mubr.f32.mxu0 0.0
    %2154 = vmatmul.mubr.f32.gmra.mrb[0].mxu0 %v1931
    %v2155 = vpop.f32.mrb[0].mxu0
    %v2156 = vadd.f32 %v2012, %v2155
    %v2157 = vpop.f32.mrb[0].mxu0
    %2158 = vmatprep.mubr.f32.mxu0 0.0
    %2159 = vmatmul.mubr.f32.gmra.mrb[0].mxu0 %v1936
    %v2160 = vpop.f32.mrb[0].mxu0
    %v2161 = vadd.f32 %v2017, %v2160
    %v2162 = vpop.f32.mrb[0].mxu0
    %2163 = vmatprep.mubr.f32.mxu0 0.0
    %2164 = vmatmul.mubr.f32.gmra.mrb[0].mxu0 %v1941
    %v2165 = vpop.f32.mrb[0].mxu0
    %v2166 = vadd.f32 %v2022, %v2165
    %v2167 = vpop.f32.mrb[0].mxu0
    %2168 = vmatprep.mubr.f32.mxu0 0.0
    %2169 = vmatmul.mubr.f32.gmra.mrb[0].mxu0 %v1946
    %v2170 = vpop.f32.mrb[0].mxu0
    %v2171 = vadd.f32 %v2027, %v2170
    %v2172 = vpop.f32.mrb[0].mxu0
    %2173 = vmatprep.mubr.f32.mxu0 0.0
    %2174 = vmatmul.mubr.f32.gmra.mrb[0].mxu0 %v1951
    %v2175 = vpop.f32.mrb[0].mxu0
    %v2176 = vadd.f32 %v2032, %v2175
    %v2177 = vpop.f32.mrb[0].mxu0
    %2178 = vdwg.mxu0
    %vm2179 = vcmp.ge.f32.partialorder %v2101, 0.0
    %vm2180 = vcmp.ge.f32.partialorder %v2106, 0.0
    %vm2181 = vcmp.ge.f32.partialorder %v2111, 0.0
    %vm2182 = vcmp.ge.f32.partialorder %v2116, 0.0
    %vm2183 = vcmp.ge.f32.partialorder %v2121, 0.0
    %vm2184 = vcmp.ge.f32.partialorder %v2126, 0.0
    %vm2185 = vcmp.ge.f32.partialorder %v2131, 0.0
    %vm2186 = vcmp.ge.f32.partialorder %v2136, 0.0
    %vm2187 = vcmp.ge.f32.partialorder %v2141, 0.0
    %vm2188 = vcmp.ge.f32.partialorder %v2146, 0.0
    %vm2189 = vcmp.ge.f32.partialorder %v2151, 0.0
    %vm2190 = vcmp.ge.f32.partialorder %v2156, 0.0
    %vm2191 = vcmp.ge.f32.partialorder %v2161, 0.0
    %vm2192 = vcmp.ge.f32.partialorder %v2166, 0.0
    %vm2193 = vcmp.ge.f32.partialorder %v2171, 0.0
    %vm2194 = vcmp.ge.f32.partialorder %v2176, 0.0
    %v2195 = vmul.f32 %v2101, 0.01
    %v2196 = vmul.f32 %v2106, 0.01
    %v2197 = vmul.f32 %v2111, 0.01
    %v2198 = vmul.f32 %v2116, 0.01
    %v2199 = vmul.f32 %v2121, 0.01
    %v2200 = vmul.f32 %v2126, 0.01
    %v2201 = vmul.f32 %v2131, 0.01
    %v2202 = vmul.f32 %v2136, 0.01
    %v2203 = vmul.f32 %v2141, 0.01
    %v2204 = vmul.f32 %v2146, 0.01
    %v2205 = vmul.f32 %v2151, 0.01
    %v2206 = vmul.f32 %v2156, 0.01
    %v2207 = vmul.f32 %v2161, 0.01
    %v2208 = vmul.f32 %v2166, 0.01
    %v2209 = vmul.f32 %v2171, 0.01
    %v2210 = vmul.f32 %v2176, 0.01
    %v2211 = vsel %vm2179, %v2101, %v2195
    %v2212 = vsel %vm2180, %v2106, %v2196
    %v2213 = vsel %vm2181, %v2111, %v2197
    %v2214 = vsel %vm2182, %v2116, %v2198
    %v2215 = vsel %vm2183, %v2121, %v2199
    %v2216 = vsel %vm2184, %v2126, %v2200
    %v2217 = vsel %vm2185, %v2131, %v2201
    %v2218 = vsel %vm2186, %v2136, %v2202
    %v2219 = vsel %vm2187, %v2141, %v2203
    %v2220 = vsel %vm2188, %v2146, %v2204
    %v2221 = vsel %vm2189, %v2151, %v2205
    %v2222 = vsel %vm2190, %v2156, %v2206
    %v2223 = vsel %vm2191, %v2161, %v2207
    %v2224 = vsel %vm2192, %v2166, %v2208
    %v2225 = vsel %vm2193, %v2171, %v2209
    %v2226 = vsel %vm2194, %v2176, %v2210
    %2227 = vmatprep.subr.mxu0 0.0
    %2228 = vmatpush1.msra.mxu0 %v1774
    %2229 = vmatprep.subr.mxu0 0.0
    %2230 = vmatpush1.msra.mxu0 %v1775
    %2231 = vmatprep.subr.mxu0 0.0
    %2232 = vmatpush1.msra.mxu0 %v1776
    %2233 = vmatprep.subr.mxu0 0.0
    %2234 = vmatpush1.msra.mxu0 %v1777
    %2235 = vmatprep.subr.mxu0 0.0
    %2236 = vmatpush1.msra.mxu0 %v1778
    %2237 = vmatprep.subr.mxu0 0.0
    %2238 = vmatpush1.msra.mxu0 %v1779
    %2239 = vmatprep.subr.mxu0 0.0
    %2240 = vmatpush1.msra.mxu0 %v1780
    %2241 = vmatprep.subr.mxu0 0.0
    %2242 = vmatpush1.msra.mxu0 %v1781
    %2243 = vmatprep.subr.mxu0 0.0
    %2244 = vmatpush1.msra.mxu0 %v1782
    %2245 = vmatprep.subr.mxu0 0.0
    %2246 = vmatpush1.msra.mxu0 %v1783
    %2247 = vmatprep.subr.mxu0 0.0
    %2248 = vmatpush1.msra.mxu0 %v1784
    %2249 = vmatprep.subr.mxu0 0.0
    %2250 = vmatpush1.msra.mxu0 %v1785
    %2251 = vmatprep.subr.mxu0 0.0
    %2252 = vmatpush1.msra.mxu0 %v1786
    %2253 = vmatprep.subr.mxu0 0.0
    %2254 = vmatpush1.msra.mxu0 %v1787
    %2255 = vmatprep.subr.mxu0 0.0
    %2256 = vmatpush1.msra.mxu0 %v1788
    %2257 = vmatprep.subr.mxu0 0.0
    %2258 = vmatpush1.msra.mxu0 %v1789
    %2259 = vmatprep.subr.mxu0 0.0
    %2260 = vmatpush1.msra.mxu0 0.0
    %2261 = vmatprep.subr.mxu0 0.0
    %2262 = vmatpush1.msra.mxu0 0.0
    %2263 = vmatprep.subr.mxu0 0.0
    %2264 = vmatpush1.msra.mxu0 0.0
    %2265 = vmatprep.subr.mxu0 0.0
    %2266 = vmatpush1.msra.mxu0 0.0
    %2267 = vmatprep.subr.mxu0 0.0
    %2268 = vmatpush1.msra.mxu0 0.0
    %2269 = vmatprep.subr.mxu0 0.0
    %2270 = vmatpush1.msra.mxu0 0.0
    %2271 = vmatprep.subr.mxu0 0.0
    %2272 = vmatpush1.msra.mxu0 0.0
    %2273 = vmatprep.subr.mxu0 0.0
    %2274 = vmatpush1.msra.mxu0 0.0
    %2275 = vmatprep.subr.mxu0 0.0
    %2276 = vmatpush1.msra.mxu0 0.0
    %2277 = vmatprep.subr.mxu0 0.0
    %2278 = vmatpush1.msra.mxu0 0.0
    %2279 = vmatprep.subr.mxu0 0.0
    %2280 = vmatpush1.msra.mxu0 0.0
    %2281 = vmatprep.subr.mxu0 0.0
    %2282 = vmatpush1.msra.mxu0 0.0
    %2283 = vmatprep.subr.mxu0 0.0
    %2284 = vmatpush1.msra.mxu0 0.0
    %2285 = vmatprep.subr.mxu0 0.0
    %2286 = vmatpush1.msra.mxu0 0.0
    %2287 = vmatprep.subr.mxu0 0.0
    %2288 = vmatpush1.msra.mxu0 0.0
    %2289 = vmatprep.subr.mxu0 0.0
    %2290 = vmatpush1.msra.mxu0 0.0
    %2291 = vmatprep.mubr.f32.mxu0 0.0
    %2292 = vmatmul.mubr.f32.gmra.mrb[0].mxu0 %v2211
    %v2293 = vpop.f32.mrb[0].mxu0
    %v2294 = vadd.f32 0.0, %v2293
    %v2295 = vpop.f32.mrb[0].mxu0
    %2296 = vmatprep.mubr.f32.mxu0 0.0
    %2297 = vmatmul.mubr.f32.gmra.mrb[0].mxu0 %v2212
    %v2298 = vpop.f32.mrb[0].mxu0
    %v2299 = vadd.f32 0.0, %v2298
    %v2300 = vpop.f32.mrb[0].mxu0
    %2301 = vmatprep.mubr.f32.mxu0 0.0
    %2302 = vmatmul.mubr.f32.gmra.mrb[0].mxu0 %v2213
    %v2303 = vpop.f32.mrb[0].mxu0
    %v2304 = vadd.f32 0.0, %v2303
    %v2305 = vpop.f32.mrb[0].mxu0
    %2306 = vmatprep.mubr.f32.mxu0 0.0
    %2307 = vmatmul.mubr.f32.gmra.mrb[0].mxu0 %v2214
    %v2308 = vpop.f32.mrb[0].mxu0
    %v2309 = vadd.f32 0.0, %v2308
    %v2310 = vpop.f32.mrb[0].mxu0
    %2311 = vmatprep.mubr.f32.mxu0 0.0
    %2312 = vmatmul.mubr.f32.gmra.mrb[0].mxu0 %v2215
    %v2313 = vpop.f32.mrb[0].mxu0
    %v2314 = vadd.f32 0.0, %v2313
    %v2315 = vpop.f32.mrb[0].mxu0
    %2316 = vmatprep.mubr.f32.mxu0 0.0
    %2317 = vmatmul.mubr.f32.gmra.mrb[0].mxu0 %v2216
    %v2318 = vpop.f32.mrb[0].mxu0
    %v2319 = vadd.f32 0.0, %v2318
    %v2320 = vpop.f32.mrb[0].mxu0
    %2321 = vmatprep.mubr.f32.mxu0 0.0
    %2322 = vmatmul.mubr.f32.gmra.mrb[0].mxu0 %v2217
    %v2323 = vpop.f32.mrb[0].mxu0
    %v2324 = vadd.f32 0.0, %v2323
    %v2325 = vpop.f32.mrb[0].mxu0
    %2326 = vmatprep.mubr.f32.mxu0 0.0
    %2327 = vmatmul.mubr.f32.gmra.mrb[0].mxu0 %v2218
    %v2328 = vpop.f32.mrb[0].mxu0
    %v2329 = vadd.f32 0.0, %v2328
    %v2330 = vpop.f32.mrb[0].mxu0
    %2331 = vmatprep.mubr.f32.mxu0 0.0
    %2332 = vmatmul.mubr.f32.gmra.mrb[0].mxu0 %v2219
    %v2333 = vpop.f32.mrb[0].mxu0
    %v2334 = vadd.f32 0.0, %v2333
    %v2335 = vpop.f32.mrb[0].mxu0
    %2336 = vmatprep.mubr.f32.mxu0 0.0
    %2337 = vmatmul.mubr.f32.gmra.mrb[0].mxu0 %v2220
    %v2338 = vpop.f32.mrb[0].mxu0
    %v2339 = vadd.f32 0.0, %v2338
    %v2340 = vpop.f32.mrb[0].mxu0
    %2341 = vmatprep.mubr.f32.mxu0 0.0
    %2342 = vmatmul.mubr.f32.gmra.mrb[0].mxu0 %v2221
    %v2343 = vpop.f32.mrb[0].mxu0
    %v2344 = vadd.f32 0.0, %v2343
    %v2345 = vpop.f32.mrb[0].mxu0
    %2346 = vmatprep.mubr.f32.mxu0 0.0
    %2347 = vmatmul.mubr.f32.gmra.mrb[0].mxu0 %v2222
    %v2348 = vpop.f32.mrb[0].mxu0
    %v2349 = vadd.f32 0.0, %v2348
    %v2350 = vpop.f32.mrb[0].mxu0
    %2351 = vmatprep.mubr.f32.mxu0 0.0
    %2352 = vmatmul.mubr.f32.gmra.mrb[0].mxu0 %v2223
    %v2353 = vpop.f32.mrb[0].mxu0
    %v2354 = vadd.f32 0.0, %v2353
    %v2355 = vpop.f32.mrb[0].mxu0
    %2356 = vmatprep.mubr.f32.mxu0 0.0
    %2357 = vmatmul.mubr.f32.gmra.mrb[0].mxu0 %v2224
    %v2358 = vpop.f32.mrb[0].mxu0
    %v2359 = vadd.f32 0.0, %v2358
    %v2360 = vpop.f32.mrb[0].mxu0
    %2361 = vmatprep.mubr.f32.mxu0 0.0
    %2362 = vmatmul.mubr.f32.gmra.mrb[0].mxu0 %v2225
    %v2363 = vpop.f32.mrb[0].mxu0
    %v2364 = vadd.f32 0.0, %v2363
    %v2365 = vpop.f32.mrb[0].mxu0
    %2366 = vmatprep.mubr.f32.mxu0 0.0
    %2367 = vmatmul.mubr.f32.gmra.mrb[0].mxu0 %v2226
    %v2368 = vpop.f32.mrb[0].mxu0
    %v2369 = vadd.f32 0.0, %v2368
    %v2370 = vpop.f32.mrb[0].mxu0
    %2371 = vdwg.mxu0
    %v2373 = vlaneseq
    %v2374 = vshrl.u32 %v2373, 7
    %v2375 = vsub.s32 0, %v2374
    %v2376 = vrot.slane %v1808, %v2375
    %2378 = vmatprep.subr.mxu0 0.0
    %2379 = vmatpush1.msra.mxu0 %v2294
    %2380 = vmatprep.subr.mxu0 0.0
    %2381 = vmatpush1.msra.mxu0 %v2299
    %2382 = vmatprep.subr.mxu0 0.0
    %2383 = vmatpush1.msra.mxu0 %v2304
    %2384 = vmatprep.subr.mxu0 0.0
    %2385 = vmatpush1.msra.mxu0 %v2309
    %2386 = vmatprep.subr.mxu0 0.0
    %2387 = vmatpush1.msra.mxu0 %v2314
    %2388 = vmatprep.subr.mxu0 0.0
    %2389 = vmatpush1.msra.mxu0 %v2319
    %2390 = vmatprep.subr.mxu0 0.0
    %2391 = vmatpush1.msra.mxu0 %v2324
    %2392 = vmatprep.subr.mxu0 0.0
    %2393 = vmatpush1.msra.mxu0 %v2329
    %2394 = vmatprep.subr.mxu0 0.0
    %2395 = vmatpush1.msra.mxu0 %v2334
    %2396 = vmatprep.subr.mxu0 0.0
    %2397 = vmatpush1.msra.mxu0 %v2339
    %2398 = vmatprep.subr.mxu0 0.0
    %2399 = vmatpush1.msra.mxu0 %v2344
    %2400 = vmatprep.subr.mxu0 0.0
    %2401 = vmatpush1.msra.mxu0 %v2349
    %2402 = vmatprep.subr.mxu0 0.0
    %2403 = vmatpush1.msra.mxu0 %v2354
    %2404 = vmatprep.subr.mxu0 0.0
    %2405 = vmatpush1.msra.mxu0 %v2359
    %2406 = vmatprep.subr.mxu0 0.0
    %2407 = vmatpush1.msra.mxu0 %v2364
    %2408 = vmatprep.subr.mxu0 0.0
    %2409 = vmatpush1.msra.mxu0 %v2369
    %2410 = vmatprep.subr.mxu0 0.0
    %2411 = vmatpush1.msra.mxu0 0.0
    %2412 = vmatprep.subr.mxu0 0.0
    %2413 = vmatpush1.msra.mxu0 0.0
    %2414 = vmatprep.subr.mxu0 0.0
    %2415 = vmatpush1.msra.mxu0 0.0
    %2416 = vmatprep.subr.mxu0 0.0
    %2417 = vmatpush1.msra.mxu0 0.0
    %2418 = vmatprep.subr.mxu0 0.0
    %2419 = vmatpush1.msra.mxu0 0.0
    %2420 = vmatprep.subr.mxu0 0.0
    %2421 = vmatpush1.msra.mxu0 0.0
    %2422 = vmatprep.subr.mxu0 0.0
    %2423 = vmatpush1.msra.mxu0 0.0
    %2424 = vmatprep.subr.mxu0 0.0
    %2425 = vmatpush1.msra.mxu0 0.0
    %2426 = vmatprep.subr.mxu0 0.0
    %2427 = vmatpush1.msra.mxu0 0.0
    %2428 = vmatprep.subr.mxu0 0.0
    %2429 = vmatpush1.msra.mxu0 0.0
    %2430 = vmatprep.subr.mxu0 0.0
    %2431 = vmatpush1.msra.mxu0 0.0
    %2432 = vmatprep.subr.mxu0 0.0
    %2433 = vmatpush1.msra.mxu0 0.0
    %2434 = vmatprep.subr.mxu0 0.0
    %2435 = vmatpush1.msra.mxu0 0.0
    %2436 = vmatprep.subr.mxu0 0.0
    %2437 = vmatpush1.msra.mxu0 0.0
    %2438 = vmatprep.subr.mxu0 0.0
    %2439 = vmatpush1.msra.mxu0 0.0
    %2440 = vmatprep.subr.mxu0 0.0
    %2441 = vmatpush1.msra.mxu0 0.0
    %2442 = vmatprep.mubr.f32.mxu0 0.0
    %2443 = vmatmul.mubr.f32.gmra.mrb[0].mxu0 %v98
    %v2444 = vpop.f32.mrb[0].mxu0
    %v2445 = vadd.f32 %v2376, %v2444
    %v2446 = vpop.f32.mrb[0].mxu0
    %2447 = vmatprep.mubr.f32.mxu0 0.0
    %2448 = vmatmul.mubr.f32.gmra.mrb[0].mxu0 %v99
    %v2449 = vpop.f32.mrb[0].mxu0
    %v2450 = vadd.f32 %v2376, %v2449
    %v2451 = vpop.f32.mrb[0].mxu0
    %2452 = vmatprep.mubr.f32.mxu0 0.0
    %2453 = vmatmul.mubr.f32.gmra.mrb[0].mxu0 %v100
    %v2454 = vpop.f32.mrb[0].mxu0
    %v2455 = vadd.f32 %v2376, %v2454
    %v2456 = vpop.f32.mrb[0].mxu0
    %2457 = vmatprep.mubr.f32.mxu0 0.0
    %2458 = vmatmul.mubr.f32.gmra.mrb[0].mxu0 %v101
    %v2459 = vpop.f32.mrb[0].mxu0
    %v2460 = vadd.f32 %v2376, %v2459
    %v2461 = vpop.f32.mrb[0].mxu0
    %2462 = vmatprep.mubr.f32.mxu0 0.0
    %2463 = vmatmul.mubr.f32.gmra.mrb[0].mxu0 %v102
    %v2464 = vpop.f32.mrb[0].mxu0
    %v2465 = vadd.f32 %v2376, %v2464
    %v2466 = vpop.f32.mrb[0].mxu0
    %2467 = vmatprep.mubr.f32.mxu0 0.0
    %2468 = vmatmul.mubr.f32.gmra.mrb[0].mxu0 %v103
    %v2469 = vpop.f32.mrb[0].mxu0
    %v2470 = vadd.f32 %v2376, %v2469
    %v2471 = vpop.f32.mrb[0].mxu0
    %2472 = vmatprep.mubr.f32.mxu0 0.0
    %2473 = vmatmul.mubr.f32.gmra.mrb[0].mxu0 %v104
    %v2474 = vpop.f32.mrb[0].mxu0
    %v2475 = vadd.f32 %v2376, %v2474
    %v2476 = vpop.f32.mrb[0].mxu0
    %2477 = vmatprep.mubr.f32.mxu0 0.0
    %2478 = vmatmul.mubr.f32.gmra.mrb[0].mxu0 %v105
    %v2479 = vpop.f32.mrb[0].mxu0
    %v2480 = vadd.f32 %v2376, %v2479
    %v2481 = vpop.f32.mrb[0].mxu0
    %2482 = vmatprep.mubr.f32.mxu0 0.0
    %2483 = vmatmul.mubr.f32.gmra.mrb[0].mxu0 %v106
    %v2484 = vpop.f32.mrb[0].mxu0
    %v2485 = vadd.f32 %v2376, %v2484
    %v2486 = vpop.f32.mrb[0].mxu0
    %2487 = vmatprep.mubr.f32.mxu0 0.0
    %2488 = vmatmul.mubr.f32.gmra.mrb[0].mxu0 %v107
    %v2489 = vpop.f32.mrb[0].mxu0
    %v2490 = vadd.f32 %v2376, %v2489
    %v2491 = vpop.f32.mrb[0].mxu0
    %2492 = vmatprep.mubr.f32.mxu0 0.0
    %2493 = vmatmul.mubr.f32.gmra.mrb[0].mxu0 %v108
    %v2494 = vpop.f32.mrb[0].mxu0
    %v2495 = vadd.f32 %v2376, %v2494
    %v2496 = vpop.f32.mrb[0].mxu0
    %2497 = vmatprep.mubr.f32.mxu0 0.0
    %2498 = vmatmul.mubr.f32.gmra.mrb[0].mxu0 %v109
    %v2499 = vpop.f32.mrb[0].mxu0
    %v2500 = vadd.f32 %v2376, %v2499
    %v2501 = vpop.f32.mrb[0].mxu0
    %2502 = vmatprep.mubr.f32.mxu0 0.0
    %2503 = vmatmul.mubr.f32.gmra.mrb[0].mxu0 %v110
    %v2504 = vpop.f32.mrb[0].mxu0
    %v2505 = vadd.f32 %v2376, %v2504
    %v2506 = vpop.f32.mrb[0].mxu0
    %2507 = vmatprep.mubr.f32.mxu0 0.0
    %2508 = vmatmul.mubr.f32.gmra.mrb[0].mxu0 %v111
    %v2509 = vpop.f32.mrb[0].mxu0
    %v2510 = vadd.f32 %v2376, %v2509
    %v2511 = vpop.f32.mrb[0].mxu0
    %2512 = vmatprep.mubr.f32.mxu0 0.0
    %2513 = vmatmul.mubr.f32.gmra.mrb[0].mxu0 %v112
    %v2514 = vpop.f32.mrb[0].mxu0
    %v2515 = vadd.f32 %v2376, %v2514
    %v2516 = vpop.f32.mrb[0].mxu0
    %2517 = vmatprep.mubr.f32.mxu0 0.0
    %2518 = vmatmul.mubr.f32.gmra.mrb[0].mxu0 %v113
    %v2519 = vpop.f32.mrb[0].mxu0
    %v2520 = vadd.f32 %v2376, %v2519
    %v2521 = vpop.f32.mrb[0].mxu0
    %2522 = vdwg.mxu0
    %vm2523 = vcmp.ge.f32.partialorder %v2445, 0.0
    %vm2524 = vcmp.ge.f32.partialorder %v2450, 0.0
    %vm2525 = vcmp.ge.f32.partialorder %v2455, 0.0
    %vm2526 = vcmp.ge.f32.partialorder %v2460, 0.0
    %vm2527 = vcmp.ge.f32.partialorder %v2465, 0.0
    %vm2528 = vcmp.ge.f32.partialorder %v2470, 0.0
    %vm2529 = vcmp.ge.f32.partialorder %v2475, 0.0
    %vm2530 = vcmp.ge.f32.partialorder %v2480, 0.0
    %vm2531 = vcmp.ge.f32.partialorder %v2485, 0.0
    %vm2532 = vcmp.ge.f32.partialorder %v2490, 0.0
    %vm2533 = vcmp.ge.f32.partialorder %v2495, 0.0
    %vm2534 = vcmp.ge.f32.partialorder %v2500, 0.0
    %vm2535 = vcmp.ge.f32.partialorder %v2505, 0.0
    %vm2536 = vcmp.ge.f32.partialorder %v2510, 0.0
    %vm2537 = vcmp.ge.f32.partialorder %v2515, 0.0
    %vm2538 = vcmp.ge.f32.partialorder %v2520, 0.0
    %v2539 = vmul.f32 %v2445, 0.01
    %v2540 = vmul.f32 %v2450, 0.01
    %v2541 = vmul.f32 %v2455, 0.01
    %v2542 = vmul.f32 %v2460, 0.01
    %v2543 = vmul.f32 %v2465, 0.01
    %v2544 = vmul.f32 %v2470, 0.01
    %v2545 = vmul.f32 %v2475, 0.01
    %v2546 = vmul.f32 %v2480, 0.01
    %v2547 = vmul.f32 %v2485, 0.01
    %v2548 = vmul.f32 %v2490, 0.01
    %v2549 = vmul.f32 %v2495, 0.01
    %v2550 = vmul.f32 %v2500, 0.01
    %v2551 = vmul.f32 %v2505, 0.01
    %v2552 = vmul.f32 %v2510, 0.01
    %v2553 = vmul.f32 %v2515, 0.01
    %v2554 = vmul.f32 %v2520, 0.01
    %v2555 = vsel %vm2523, %v2445, %v2539
    %v2556 = vsel %vm2524, %v2450, %v2540
    %v2557 = vsel %vm2525, %v2455, %v2541
    %v2558 = vsel %vm2526, %v2460, %v2542
    %v2559 = vsel %vm2527, %v2465, %v2543
    %v2560 = vsel %vm2528, %v2470, %v2544
    %v2561 = vsel %vm2529, %v2475, %v2545
    %v2562 = vsel %vm2530, %v2480, %v2546
    %v2563 = vsel %vm2531, %v2485, %v2547
    %v2564 = vsel %vm2532, %v2490, %v2548
    %v2565 = vsel %vm2533, %v2495, %v2549
    %v2566 = vsel %vm2534, %v2500, %v2550
    %v2567 = vsel %vm2535, %v2505, %v2551
    %v2568 = vsel %vm2536, %v2510, %v2552
    %v2569 = vsel %vm2537, %v2515, %v2553
    %v2570 = vsel %vm2538, %v2520, %v2554
    %s2571 = scalar_lea.vmem %s3, 384
    %v2572 = vld [vmem:[%s2571] sm:$0xff]
    %v2573 = vld [vmem:[%s2571 + $0x8] sm:$0xff]
    %v2574 = vld [vmem:[%s2571 + $0x10] sm:$0xff]
    %v2575 = vld [vmem:[%s2571 + $0x18] sm:$0xff]
    %v2576 = vld [vmem:[%s2571 + $0x20] sm:$0xff]
    %v2577 = vld [vmem:[%s2571 + $0x28] sm:$0xff]
    %v2578 = vld [vmem:[%s2571 + $0x30] sm:$0xff]
    %v2579 = vld [vmem:[%s2571 + $0x38] sm:$0xff]
    %v2580 = vld [vmem:[%s2571 + $0x40] sm:$0xff]
    %v2581 = vld [vmem:[%s2571 + $0x48] sm:$0xff]
    %v2582 = vld [vmem:[%s2571 + $0x50] sm:$0xff]
    %v2583 = vld [vmem:[%s2571 + $0x58] sm:$0xff]
    %v2584 = vld [vmem:[%s2571 + $0x60] sm:$0xff]
    %v2585 = vld [vmem:[%s2571 + $0x68] sm:$0xff]
    %v2586 = vld [vmem:[%s2571 + $0x70] sm:$0xff]
    %v2587 = vld [vmem:[%s2571 + $0x78] sm:$0xff]
    %s2588 = scalar_lea.vmem [#allocation8], 384
    %v2589 = vld [vmem:[%s2588] sm:$0xff]
    %v2590 = vld [vmem:[%s2588 + $0x8] sm:$0xff]
    %v2591 = vld [vmem:[%s2588 + $0x10] sm:$0xff]
    %v2592 = vld [vmem:[%s2588 + $0x18] sm:$0xff]
    %v2593 = vld [vmem:[%s2588 + $0x20] sm:$0xff]
    %v2594 = vld [vmem:[%s2588 + $0x28] sm:$0xff]
    %v2595 = vld [vmem:[%s2588 + $0x30] sm:$0xff]
    %v2596 = vld [vmem:[%s2588 + $0x38] sm:$0xff]
    %v2597 = vld [vmem:[%s2588 + $0x40] sm:$0xff]
    %v2598 = vld [vmem:[%s2588 + $0x48] sm:$0xff]
    %v2599 = vld [vmem:[%s2588 + $0x50] sm:$0xff]
    %v2600 = vld [vmem:[%s2588 + $0x58] sm:$0xff]
    %v2601 = vld [vmem:[%s2588 + $0x60] sm:$0xff]
    %v2602 = vld [vmem:[%s2588 + $0x68] sm:$0xff]
    %v2603 = vld [vmem:[%s2588 + $0x70] sm:$0xff]
    %v2604 = vld [vmem:[%s2588 + $0x78] sm:$0xff]
    %s2605 = scalar_lea.vmem %s5, 384
    %v2606 = vld [vmem:[%s2605] sm:$0xff]
    %v2607 = vld [vmem:[%s2605 + $0x8] sm:$0xff]
    %v2608 = vld [vmem:[%s2605 + $0x10] sm:$0xff]
    %v2609 = vld [vmem:[%s2605 + $0x18] sm:$0xff]
    %v2610 = vld [vmem:[%s2605 + $0x20] sm:$0xff]
    %v2611 = vld [vmem:[%s2605 + $0x28] sm:$0xff]
    %v2612 = vld [vmem:[%s2605 + $0x30] sm:$0xff]
    %v2613 = vld [vmem:[%s2605 + $0x38] sm:$0xff]
    %v2614 = vld [vmem:[%s2605 + $0x40] sm:$0xff]
    %v2615 = vld [vmem:[%s2605 + $0x48] sm:$0xff]
    %v2616 = vld [vmem:[%s2605 + $0x50] sm:$0xff]
    %v2617 = vld [vmem:[%s2605 + $0x58] sm:$0xff]
    %v2618 = vld [vmem:[%s2605 + $0x60] sm:$0xff]
    %v2619 = vld [vmem:[%s2605 + $0x68] sm:$0xff]
    %v2620 = vld [vmem:[%s2605 + $0x70] sm:$0xff]
    %v2621 = vld [vmem:[%s2605 + $0x78] sm:$0xff]
    %s2622 = scalar_lea.vmem %s6, 3
    %v2623 = vld [vmem:[%s2622] sm:$0x1]
    %2624 = vmatprep.subr.mxu0 0.0
    %2625 = vmatpush1.msra.mxu0 %v2555
    %2626 = vmatprep.subr.mxu0 0.0
    %2627 = vmatpush1.msra.mxu0 %v2556
    %2628 = vmatprep.subr.mxu0 0.0
    %2629 = vmatpush1.msra.mxu0 %v2557
    %2630 = vmatprep.subr.mxu0 0.0
    %2631 = vmatpush1.msra.mxu0 %v2558
    %2632 = vmatprep.subr.mxu0 0.0
    %2633 = vmatpush1.msra.mxu0 %v2559
    %2634 = vmatprep.subr.mxu0 0.0
    %2635 = vmatpush1.msra.mxu0 %v2560
    %2636 = vmatprep.subr.mxu0 0.0
    %2637 = vmatpush1.msra.mxu0 %v2561
    %2638 = vmatprep.subr.mxu0 0.0
    %2639 = vmatpush1.msra.mxu0 %v2562
    %2640 = vmatprep.subr.mxu0 0.0
    %2641 = vmatpush1.msra.mxu0 %v2563
    %2642 = vmatprep.subr.mxu0 0.0
    %2643 = vmatpush1.msra.mxu0 %v2564
    %2644 = vmatprep.subr.mxu0 0.0
    %2645 = vmatpush1.msra.mxu0 %v2565
    %2646 = vmatprep.subr.mxu0 0.0
    %2647 = vmatpush1.msra.mxu0 %v2566
    %2648 = vmatprep.subr.mxu0 0.0
    %2649 = vmatpush1.msra.mxu0 %v2567
    %2650 = vmatprep.subr.mxu0 0.0
    %2651 = vmatpush1.msra.mxu0 %v2568
    %2652 = vmatprep.subr.mxu0 0.0
    %2653 = vmatpush1.msra.mxu0 %v2569
    %2654 = vmatprep.subr.mxu0 0.0
    %2655 = vmatpush1.msra.mxu0 %v2570
    %2656 = vmatprep.subr.mxu0 0.0
    %2657 = vmatpush1.msra.mxu0 0.0
    %2658 = vmatprep.subr.mxu0 0.0
    %2659 = vmatpush1.msra.mxu0 0.0
    %2660 = vmatprep.subr.mxu0 0.0
    %2661 = vmatpush1.msra.mxu0 0.0
    %2662 = vmatprep.subr.mxu0 0.0
    %2663 = vmatpush1.msra.mxu0 0.0
    %2664 = vmatprep.subr.mxu0 0.0
    %2665 = vmatpush1.msra.mxu0 0.0
    %2666 = vmatprep.subr.mxu0 0.0
    %2667 = vmatpush1.msra.mxu0 0.0
    %2668 = vmatprep.subr.mxu0 0.0
    %2669 = vmatpush1.msra.mxu0 0.0
    %2670 = vmatprep.subr.mxu0 0.0
    %2671 = vmatpush1.msra.mxu0 0.0
    %2672 = vmatprep.subr.mxu0 0.0
    %2673 = vmatpush1.msra.mxu0 0.0
    %2674 = vmatprep.subr.mxu0 0.0
    %2675 = vmatpush1.msra.mxu0 0.0
    %2676 = vmatprep.subr.mxu0 0.0
    %2677 = vmatpush1.msra.mxu0 0.0
    %2678 = vmatprep.subr.mxu0 0.0
    %2679 = vmatpush1.msra.mxu0 0.0
    %2680 = vmatprep.subr.mxu0 0.0
    %2681 = vmatpush1.msra.mxu0 0.0
    %2682 = vmatprep.subr.mxu0 0.0
    %2683 = vmatpush1.msra.mxu0 0.0
    %2684 = vmatprep.subr.mxu0 0.0
    %2685 = vmatpush1.msra.mxu0 0.0
    %2686 = vmatprep.subr.mxu0 0.0
    %2687 = vmatpush1.msra.mxu0 0.0
    %2688 = vmatprep.mubr.f32.mxu0 0.0
    %2689 = vmatmul.mubr.f32.gmra.mrb[0].mxu0 %v2572
    %v2690 = vpop.f32.mrb[0].mxu0
    %v2691 = vadd.f32 0.0, %v2690
    %v2692 = vpop.f32.mrb[0].mxu0
    %2693 = vmatprep.mubr.f32.mxu0 0.0
    %2694 = vmatmul.mubr.f32.gmra.mrb[0].mxu0 %v2573
    %v2695 = vpop.f32.mrb[0].mxu0
    %v2696 = vadd.f32 0.0, %v2695
    %v2697 = vpop.f32.mrb[0].mxu0
    %2698 = vmatprep.mubr.f32.mxu0 0.0
    %2699 = vmatmul.mubr.f32.gmra.mrb[0].mxu0 %v2574
    %v2700 = vpop.f32.mrb[0].mxu0
    %v2701 = vadd.f32 0.0, %v2700
    %v2702 = vpop.f32.mrb[0].mxu0
    %2703 = vmatprep.mubr.f32.mxu0 0.0
    %2704 = vmatmul.mubr.f32.gmra.mrb[0].mxu0 %v2575
    %v2705 = vpop.f32.mrb[0].mxu0
    %v2706 = vadd.f32 0.0, %v2705
    %v2707 = vpop.f32.mrb[0].mxu0
    %2708 = vmatprep.mubr.f32.mxu0 0.0
    %2709 = vmatmul.mubr.f32.gmra.mrb[0].mxu0 %v2576
    %v2710 = vpop.f32.mrb[0].mxu0
    %v2711 = vadd.f32 0.0, %v2710
    %v2712 = vpop.f32.mrb[0].mxu0
    %2713 = vmatprep.mubr.f32.mxu0 0.0
    %2714 = vmatmul.mubr.f32.gmra.mrb[0].mxu0 %v2577
    %v2715 = vpop.f32.mrb[0].mxu0
    %v2716 = vadd.f32 0.0, %v2715
    %v2717 = vpop.f32.mrb[0].mxu0
    %2718 = vmatprep.mubr.f32.mxu0 0.0
    %2719 = vmatmul.mubr.f32.gmra.mrb[0].mxu0 %v2578
    %v2720 = vpop.f32.mrb[0].mxu0
    %v2721 = vadd.f32 0.0, %v2720
    %v2722 = vpop.f32.mrb[0].mxu0
    %2723 = vmatprep.mubr.f32.mxu0 0.0
    %2724 = vmatmul.mubr.f32.gmra.mrb[0].mxu0 %v2579
    %v2725 = vpop.f32.mrb[0].mxu0
    %v2726 = vadd.f32 0.0, %v2725
    %v2727 = vpop.f32.mrb[0].mxu0
    %2728 = vmatprep.mubr.f32.mxu0 0.0
    %2729 = vmatmul.mubr.f32.gmra.mrb[0].mxu0 %v2580
    %v2730 = vpop.f32.mrb[0].mxu0
    %v2731 = vadd.f32 0.0, %v2730
    %v2732 = vpop.f32.mrb[0].mxu0
    %2733 = vmatprep.mubr.f32.mxu0 0.0
    %2734 = vmatmul.mubr.f32.gmra.mrb[0].mxu0 %v2581
    %v2735 = vpop.f32.mrb[0].mxu0
    %v2736 = vadd.f32 0.0, %v2735
    %v2737 = vpop.f32.mrb[0].mxu0
    %2738 = vmatprep.mubr.f32.mxu0 0.0
    %2739 = vmatmul.mubr.f32.gmra.mrb[0].mxu0 %v2582
    %v2740 = vpop.f32.mrb[0].mxu0
    %v2741 = vadd.f32 0.0, %v2740
    %v2742 = vpop.f32.mrb[0].mxu0
    %2743 = vmatprep.mubr.f32.mxu0 0.0
    %2744 = vmatmul.mubr.f32.gmra.mrb[0].mxu0 %v2583
    %v2745 = vpop.f32.mrb[0].mxu0
    %v2746 = vadd.f32 0.0, %v2745
    %v2747 = vpop.f32.mrb[0].mxu0
    %2748 = vmatprep.mubr.f32.mxu0 0.0
    %2749 = vmatmul.mubr.f32.gmra.mrb[0].mxu0 %v2584
    %v2750 = vpop.f32.mrb[0].mxu0
    %v2751 = vadd.f32 0.0, %v2750
    %v2752 = vpop.f32.mrb[0].mxu0
    %2753 = vmatprep.mubr.f32.mxu0 0.0
    %2754 = vmatmul.mubr.f32.gmra.mrb[0].mxu0 %v2585
    %v2755 = vpop.f32.mrb[0].mxu0
    %v2756 = vadd.f32 0.0, %v2755
    %v2757 = vpop.f32.mrb[0].mxu0
    %2758 = vmatprep.mubr.f32.mxu0 0.0
    %2759 = vmatmul.mubr.f32.gmra.mrb[0].mxu0 %v2586
    %v2760 = vpop.f32.mrb[0].mxu0
    %v2761 = vadd.f32 0.0, %v2760
    %v2762 = vpop.f32.mrb[0].mxu0
    %2763 = vmatprep.mubr.f32.mxu0 0.0
    %2764 = vmatmul.mubr.f32.gmra.mrb[0].mxu0 %v2587
    %v2765 = vpop.f32.mrb[0].mxu0
    %v2766 = vadd.f32 0.0, %v2765
    %v2767 = vpop.f32.mrb[0].mxu0
    %2768 = vdwg.mxu0
    %2770 = vset.pattern.permute.xlu0 0
    %2771 = vperm.xlu0 %2770, %v2606
    %v2772 = vpop.permute.xlu0 %2771
    %2775 = vset.pattern.permute.xlu0 0
    %2776 = vperm.xlu0 %2775, %v2607
    %v2777 = vpop.permute.xlu0 %2776
    %2780 = vset.pattern.permute.xlu0 0
    %2781 = vperm.xlu0 %2780, %v2608
    %v2782 = vpop.permute.xlu0 %2781
    %2785 = vset.pattern.permute.xlu0 0
    %2786 = vperm.xlu0 %2785, %v2609
    %v2787 = vpop.permute.xlu0 %2786
    %2790 = vset.pattern.permute.xlu0 0
    %2791 = vperm.xlu0 %2790, %v2610
    %v2792 = vpop.permute.xlu0 %2791
    %2795 = vset.pattern.permute.xlu0 0
    %2796 = vperm.xlu0 %2795, %v2611
    %v2797 = vpop.permute.xlu0 %2796
    %2800 = vset.pattern.permute.xlu0 0
    %2801 = vperm.xlu0 %2800, %v2612
    %v2802 = vpop.permute.xlu0 %2801
    %2805 = vset.pattern.permute.xlu0 0
    %2806 = vperm.xlu0 %2805, %v2613
    %v2807 = vpop.permute.xlu0 %2806
    %2810 = vset.pattern.permute.xlu0 0
    %2811 = vperm.xlu0 %2810, %v2614
    %v2812 = vpop.permute.xlu0 %2811
    %2815 = vset.pattern.permute.xlu0 0
    %2816 = vperm.xlu0 %2815, %v2615
    %v2817 = vpop.permute.xlu0 %2816
    %2820 = vset.pattern.permute.xlu0 0
    %2821 = vperm.xlu0 %2820, %v2616
    %v2822 = vpop.permute.xlu0 %2821
    %2825 = vset.pattern.permute.xlu0 0
    %2826 = vperm.xlu0 %2825, %v2617
    %v2827 = vpop.permute.xlu0 %2826
    %2830 = vset.pattern.permute.xlu0 0
    %2831 = vperm.xlu0 %2830, %v2618
    %v2832 = vpop.permute.xlu0 %2831
    %2835 = vset.pattern.permute.xlu0 0
    %2836 = vperm.xlu0 %2835, %v2619
    %v2837 = vpop.permute.xlu0 %2836
    %2840 = vset.pattern.permute.xlu0 0
    %2841 = vperm.xlu0 %2840, %v2620
    %v2842 = vpop.permute.xlu0 %2841
    %2845 = vset.pattern.permute.xlu0 0
    %2846 = vperm.xlu0 %2845, %v2621
    %v2847 = vpop.permute.xlu0 %2846
    %2849 = vmatprep.subr.mxu0 0.0
    %2850 = vmatpush1.msra.mxu0 %v82
    %2851 = vmatprep.subr.mxu0 0.0
    %2852 = vmatpush1.msra.mxu0 %v83
    %2853 = vmatprep.subr.mxu0 0.0
    %2854 = vmatpush1.msra.mxu0 %v84
    %2855 = vmatprep.subr.mxu0 0.0
    %2856 = vmatpush1.msra.mxu0 %v85
    %2857 = vmatprep.subr.mxu0 0.0
    %2858 = vmatpush1.msra.mxu0 %v86
    %2859 = vmatprep.subr.mxu0 0.0
    %2860 = vmatpush1.msra.mxu0 %v87
    %2861 = vmatprep.subr.mxu0 0.0
    %2862 = vmatpush1.msra.mxu0 %v88
    %2863 = vmatprep.subr.mxu0 0.0
    %2864 = vmatpush1.msra.mxu0 %v89
    %2865 = vmatprep.subr.mxu0 0.0
    %2866 = vmatpush1.msra.mxu0 %v90
    %2867 = vmatprep.subr.mxu0 0.0
    %2868 = vmatpush1.msra.mxu0 %v91
    %2869 = vmatprep.subr.mxu0 0.0
    %2870 = vmatpush1.msra.mxu0 %v92
    %2871 = vmatprep.subr.mxu0 0.0
    %2872 = vmatpush1.msra.mxu0 %v93
    %2873 = vmatprep.subr.mxu0 0.0
    %2874 = vmatpush1.msra.mxu0 %v94
    %2875 = vmatprep.subr.mxu0 0.0
    %2876 = vmatpush1.msra.mxu0 %v95
    %2877 = vmatprep.subr.mxu0 0.0
    %2878 = vmatpush1.msra.mxu0 %v96
    %2879 = vmatprep.subr.mxu0 0.0
    %2880 = vmatpush1.msra.mxu0 %v97
    %2881 = vmatprep.subr.mxu0 0.0
    %2882 = vmatpush1.msra.mxu0 0.0
    %2883 = vmatprep.subr.mxu0 0.0
    %2884 = vmatpush1.msra.mxu0 0.0
    %2885 = vmatprep.subr.mxu0 0.0
    %2886 = vmatpush1.msra.mxu0 0.0
    %2887 = vmatprep.subr.mxu0 0.0
    %2888 = vmatpush1.msra.mxu0 0.0
    %2889 = vmatprep.subr.mxu0 0.0
    %2890 = vmatpush1.msra.mxu0 0.0
    %2891 = vmatprep.subr.mxu0 0.0
    %2892 = vmatpush1.msra.mxu0 0.0
    %2893 = vmatprep.subr.mxu0 0.0
    %2894 = vmatpush1.msra.mxu0 0.0
    %2895 = vmatprep.subr.mxu0 0.0
    %2896 = vmatpush1.msra.mxu0 0.0
    %2897 = vmatprep.subr.mxu0 0.0
    %2898 = vmatpush1.msra.mxu0 0.0
    %2899 = vmatprep.subr.mxu0 0.0
    %2900 = vmatpush1.msra.mxu0 0.0
    %2901 = vmatprep.subr.mxu0 0.0
    %2902 = vmatpush1.msra.mxu0 0.0
    %2903 = vmatprep.subr.mxu0 0.0
    %2904 = vmatpush1.msra.mxu0 0.0
    %2905 = vmatprep.subr.mxu0 0.0
    %2906 = vmatpush1.msra.mxu0 0.0
    %2907 = vmatprep.subr.mxu0 0.0
    %2908 = vmatpush1.msra.mxu0 0.0
    %2909 = vmatprep.subr.mxu0 0.0
    %2910 = vmatpush1.msra.mxu0 0.0
    %2911 = vmatprep.subr.mxu0 0.0
    %2912 = vmatpush1.msra.mxu0 0.0
    %2913 = vmatprep.mubr.f32.mxu0 0.0
    %2914 = vmatmul.mubr.f32.gmra.mrb[0].mxu0 %v2691
    %v2915 = vpop.f32.mrb[0].mxu0
    %v2916 = vadd.f32 %v2772, %v2915
    %v2917 = vpop.f32.mrb[0].mxu0
    %2918 = vmatprep.mubr.f32.mxu0 0.0
    %2919 = vmatmul.mubr.f32.gmra.mrb[0].mxu0 %v2696
    %v2920 = vpop.f32.mrb[0].mxu0
    %v2921 = vadd.f32 %v2777, %v2920
    %v2922 = vpop.f32.mrb[0].mxu0
    %2923 = vmatprep.mubr.f32.mxu0 0.0
    %2924 = vmatmul.mubr.f32.gmra.mrb[0].mxu0 %v2701
    %v2925 = vpop.f32.mrb[0].mxu0
    %v2926 = vadd.f32 %v2782, %v2925
    %v2927 = vpop.f32.mrb[0].mxu0
    %2928 = vmatprep.mubr.f32.mxu0 0.0
    %2929 = vmatmul.mubr.f32.gmra.mrb[0].mxu0 %v2706
    %v2930 = vpop.f32.mrb[0].mxu0
    %v2931 = vadd.f32 %v2787, %v2930
    %v2932 = vpop.f32.mrb[0].mxu0
    %2933 = vmatprep.mubr.f32.mxu0 0.0
    %2934 = vmatmul.mubr.f32.gmra.mrb[0].mxu0 %v2711
    %v2935 = vpop.f32.mrb[0].mxu0
    %v2936 = vadd.f32 %v2792, %v2935
    %v2937 = vpop.f32.mrb[0].mxu0
    %2938 = vmatprep.mubr.f32.mxu0 0.0
    %2939 = vmatmul.mubr.f32.gmra.mrb[0].mxu0 %v2716
    %v2940 = vpop.f32.mrb[0].mxu0
    %v2941 = vadd.f32 %v2797, %v2940
    %v2942 = vpop.f32.mrb[0].mxu0
    %2943 = vmatprep.mubr.f32.mxu0 0.0
    %2944 = vmatmul.mubr.f32.gmra.mrb[0].mxu0 %v2721
    %v2945 = vpop.f32.mrb[0].mxu0
    %v2946 = vadd.f32 %v2802, %v2945
    %v2947 = vpop.f32.mrb[0].mxu0
    %2948 = vmatprep.mubr.f32.mxu0 0.0
    %2949 = vmatmul.mubr.f32.gmra.mrb[0].mxu0 %v2726
    %v2950 = vpop.f32.mrb[0].mxu0
    %v2951 = vadd.f32 %v2807, %v2950
    %v2952 = vpop.f32.mrb[0].mxu0
    %2953 = vmatprep.mubr.f32.mxu0 0.0
    %2954 = vmatmul.mubr.f32.gmra.mrb[0].mxu0 %v2731
    %v2955 = vpop.f32.mrb[0].mxu0
    %v2956 = vadd.f32 %v2812, %v2955
    %v2957 = vpop.f32.mrb[0].mxu0
    %2958 = vmatprep.mubr.f32.mxu0 0.0
    %2959 = vmatmul.mubr.f32.gmra.mrb[0].mxu0 %v2736
    %v2960 = vpop.f32.mrb[0].mxu0
    %v2961 = vadd.f32 %v2817, %v2960
    %v2962 = vpop.f32.mrb[0].mxu0
    %2963 = vmatprep.mubr.f32.mxu0 0.0
    %2964 = vmatmul.mubr.f32.gmra.mrb[0].mxu0 %v2741
    %v2965 = vpop.f32.mrb[0].mxu0
    %v2966 = vadd.f32 %v2822, %v2965
    %v2967 = vpop.f32.mrb[0].mxu0
    %2968 = vmatprep.mubr.f32.mxu0 0.0
    %2969 = vmatmul.mubr.f32.gmra.mrb[0].mxu0 %v2746
    %v2970 = vpop.f32.mrb[0].mxu0
    %v2971 = vadd.f32 %v2827, %v2970
    %v2972 = vpop.f32.mrb[0].mxu0
    %2973 = vmatprep.mubr.f32.mxu0 0.0
    %2974 = vmatmul.mubr.f32.gmra.mrb[0].mxu0 %v2751
    %v2975 = vpop.f32.mrb[0].mxu0
    %v2976 = vadd.f32 %v2832, %v2975
    %v2977 = vpop.f32.mrb[0].mxu0
    %2978 = vmatprep.mubr.f32.mxu0 0.0
    %2979 = vmatmul.mubr.f32.gmra.mrb[0].mxu0 %v2756
    %v2980 = vpop.f32.mrb[0].mxu0
    %v2981 = vadd.f32 %v2837, %v2980
    %v2982 = vpop.f32.mrb[0].mxu0
    %2983 = vmatprep.mubr.f32.mxu0 0.0
    %2984 = vmatmul.mubr.f32.gmra.mrb[0].mxu0 %v2761
    %v2985 = vpop.f32.mrb[0].mxu0
    %v2986 = vadd.f32 %v2842, %v2985
    %v2987 = vpop.f32.mrb[0].mxu0
    %2988 = vmatprep.mubr.f32.mxu0 0.0
    %2989 = vmatmul.mubr.f32.gmra.mrb[0].mxu0 %v2766
    %v2990 = vpop.f32.mrb[0].mxu0
    %v2991 = vadd.f32 %v2847, %v2990
    %v2992 = vpop.f32.mrb[0].mxu0
    %2993 = vdwg.mxu0
    %vm2994 = vcmp.ge.f32.partialorder %v2916, 0.0
    %vm2995 = vcmp.ge.f32.partialorder %v2921, 0.0
    %vm2996 = vcmp.ge.f32.partialorder %v2926, 0.0
    %vm2997 = vcmp.ge.f32.partialorder %v2931, 0.0
    %vm2998 = vcmp.ge.f32.partialorder %v2936, 0.0
    %vm2999 = vcmp.ge.f32.partialorder %v2941, 0.0
    %vm3000 = vcmp.ge.f32.partialorder %v2946, 0.0
    %vm3001 = vcmp.ge.f32.partialorder %v2951, 0.0
    %vm3002 = vcmp.ge.f32.partialorder %v2956, 0.0
    %vm3003 = vcmp.ge.f32.partialorder %v2961, 0.0
    %vm3004 = vcmp.ge.f32.partialorder %v2966, 0.0
    %vm3005 = vcmp.ge.f32.partialorder %v2971, 0.0
    %vm3006 = vcmp.ge.f32.partialorder %v2976, 0.0
    %vm3007 = vcmp.ge.f32.partialorder %v2981, 0.0
    %vm3008 = vcmp.ge.f32.partialorder %v2986, 0.0
    %vm3009 = vcmp.ge.f32.partialorder %v2991, 0.0
    %v3010 = vmul.f32 %v2916, 0.01
    %v3011 = vmul.f32 %v2921, 0.01
    %v3012 = vmul.f32 %v2926, 0.01
    %v3013 = vmul.f32 %v2931, 0.01
    %v3014 = vmul.f32 %v2936, 0.01
    %v3015 = vmul.f32 %v2941, 0.01
    %v3016 = vmul.f32 %v2946, 0.01
    %v3017 = vmul.f32 %v2951, 0.01
    %v3018 = vmul.f32 %v2956, 0.01
    %v3019 = vmul.f32 %v2961, 0.01
    %v3020 = vmul.f32 %v2966, 0.01
    %v3021 = vmul.f32 %v2971, 0.01
    %v3022 = vmul.f32 %v2976, 0.01
    %v3023 = vmul.f32 %v2981, 0.01
    %v3024 = vmul.f32 %v2986, 0.01
    %v3025 = vmul.f32 %v2991, 0.01
    %v3026 = vsel %vm2994, %v2916, %v3010
    %v3027 = vsel %vm2995, %v2921, %v3011
    %v3028 = vsel %vm2996, %v2926, %v3012
    %v3029 = vsel %vm2997, %v2931, %v3013
    %v3030 = vsel %vm2998, %v2936, %v3014
    %v3031 = vsel %vm2999, %v2941, %v3015
    %v3032 = vsel %vm3000, %v2946, %v3016
    %v3033 = vsel %vm3001, %v2951, %v3017
    %v3034 = vsel %vm3002, %v2956, %v3018
    %v3035 = vsel %vm3003, %v2961, %v3019
    %v3036 = vsel %vm3004, %v2966, %v3020
    %v3037 = vsel %vm3005, %v2971, %v3021
    %v3038 = vsel %vm3006, %v2976, %v3022
    %v3039 = vsel %vm3007, %v2981, %v3023
    %v3040 = vsel %vm3008, %v2986, %v3024
    %v3041 = vsel %vm3009, %v2991, %v3025
    %3042 = vmatprep.subr.mxu0 0.0
    %3043 = vmatpush1.msra.mxu0 %v2589
    %3044 = vmatprep.subr.mxu0 0.0
    %3045 = vmatpush1.msra.mxu0 %v2590
    %3046 = vmatprep.subr.mxu0 0.0
    %3047 = vmatpush1.msra.mxu0 %v2591
    %3048 = vmatprep.subr.mxu0 0.0
    %3049 = vmatpush1.msra.mxu0 %v2592
    %3050 = vmatprep.subr.mxu0 0.0
    %3051 = vmatpush1.msra.mxu0 %v2593
    %3052 = vmatprep.subr.mxu0 0.0
    %3053 = vmatpush1.msra.mxu0 %v2594
    %3054 = vmatprep.subr.mxu0 0.0
    %3055 = vmatpush1.msra.mxu0 %v2595
    %3056 = vmatprep.subr.mxu0 0.0
    %3057 = vmatpush1.msra.mxu0 %v2596
    %3058 = vmatprep.subr.mxu0 0.0
    %3059 = vmatpush1.msra.mxu0 %v2597
    %3060 = vmatprep.subr.mxu0 0.0
    %3061 = vmatpush1.msra.mxu0 %v2598
    %3062 = vmatprep.subr.mxu0 0.0
    %3063 = vmatpush1.msra.mxu0 %v2599
    %3064 = vmatprep.subr.mxu0 0.0
    %3065 = vmatpush1.msra.mxu0 %v2600
    %3066 = vmatprep.subr.mxu0 0.0
    %3067 = vmatpush1.msra.mxu0 %v2601
    %3068 = vmatprep.subr.mxu0 0.0
    %3069 = vmatpush1.msra.mxu0 %v2602
    %3070 = vmatprep.subr.mxu0 0.0
    %3071 = vmatpush1.msra.mxu0 %v2603
    %3072 = vmatprep.subr.mxu0 0.0
    %3073 = vmatpush1.msra.mxu0 %v2604
    %3074 = vmatprep.subr.mxu0 0.0
    %3075 = vmatpush1.msra.mxu0 0.0
    %3076 = vmatprep.subr.mxu0 0.0
    %3077 = vmatpush1.msra.mxu0 0.0
    %3078 = vmatprep.subr.mxu0 0.0
    %3079 = vmatpush1.msra.mxu0 0.0
    %3080 = vmatprep.subr.mxu0 0.0
    %3081 = vmatpush1.msra.mxu0 0.0
    %3082 = vmatprep.subr.mxu0 0.0
    %3083 = vmatpush1.msra.mxu0 0.0
    %3084 = vmatprep.subr.mxu0 0.0
    %3085 = vmatpush1.msra.mxu0 0.0
    %3086 = vmatprep.subr.mxu0 0.0
    %3087 = vmatpush1.msra.mxu0 0.0
    %3088 = vmatprep.subr.mxu0 0.0
    %3089 = vmatpush1.msra.mxu0 0.0
    %3090 = vmatprep.subr.mxu0 0.0
    %3091 = vmatpush1.msra.mxu0 0.0
    %3092 = vmatprep.subr.mxu0 0.0
    %3093 = vmatpush1.msra.mxu0 0.0
    %3094 = vmatprep.subr.mxu0 0.0
    %3095 = vmatpush1.msra.mxu0 0.0
    %3096 = vmatprep.subr.mxu0 0.0
    %3097 = vmatpush1.msra.mxu0 0.0
    %3098 = vmatprep.subr.mxu0 0.0
    %3099 = vmatpush1.msra.mxu0 0.0
    %3100 = vmatprep.subr.mxu0 0.0
    %3101 = vmatpush1.msra.mxu0 0.0
    %3102 = vmatprep.subr.mxu0 0.0
    %3103 = vmatpush1.msra.mxu0 0.0
    %3104 = vmatprep.subr.mxu0 0.0
    %3105 = vmatpush1.msra.mxu0 0.0
    %3106 = vmatprep.mubr.f32.mxu0 0.0
    %3107 = vmatmul.mubr.f32.gmra.mrb[0].mxu0 %v3026
    %v3108 = vpop.f32.mrb[0].mxu0
    %v3109 = vadd.f32 0.0, %v3108
    %v3110 = vpop.f32.mrb[0].mxu0
    %3111 = vmatprep.mubr.f32.mxu0 0.0
    %3112 = vmatmul.mubr.f32.gmra.mrb[0].mxu0 %v3027
    %v3113 = vpop.f32.mrb[0].mxu0
    %v3114 = vadd.f32 0.0, %v3113
    %v3115 = vpop.f32.mrb[0].mxu0
    %3116 = vmatprep.mubr.f32.mxu0 0.0
    %3117 = vmatmul.mubr.f32.gmra.mrb[0].mxu0 %v3028
    %v3118 = vpop.f32.mrb[0].mxu0
    %v3119 = vadd.f32 0.0, %v3118
    %v3120 = vpop.f32.mrb[0].mxu0
    %3121 = vmatprep.mubr.f32.mxu0 0.0
    %3122 = vmatmul.mubr.f32.gmra.mrb[0].mxu0 %v3029
    %v3123 = vpop.f32.mrb[0].mxu0
    %v3124 = vadd.f32 0.0, %v3123
    %v3125 = vpop.f32.mrb[0].mxu0
    %3126 = vmatprep.mubr.f32.mxu0 0.0
    %3127 = vmatmul.mubr.f32.gmra.mrb[0].mxu0 %v3030
    %v3128 = vpop.f32.mrb[0].mxu0
    %v3129 = vadd.f32 0.0, %v3128
    %v3130 = vpop.f32.mrb[0].mxu0
    %3131 = vmatprep.mubr.f32.mxu0 0.0
    %3132 = vmatmul.mubr.f32.gmra.mrb[0].mxu0 %v3031
    %v3133 = vpop.f32.mrb[0].mxu0
    %v3134 = vadd.f32 0.0, %v3133
    %v3135 = vpop.f32.mrb[0].mxu0
    %3136 = vmatprep.mubr.f32.mxu0 0.0
    %3137 = vmatmul.mubr.f32.gmra.mrb[0].mxu0 %v3032
    %v3138 = vpop.f32.mrb[0].mxu0
    %v3139 = vadd.f32 0.0, %v3138
    %v3140 = vpop.f32.mrb[0].mxu0
    %3141 = vmatprep.mubr.f32.mxu0 0.0
    %3142 = vmatmul.mubr.f32.gmra.mrb[0].mxu0 %v3033
    %v3143 = vpop.f32.mrb[0].mxu0
    %v3144 = vadd.f32 0.0, %v3143
    %v3145 = vpop.f32.mrb[0].mxu0
    %3146 = vmatprep.mubr.f32.mxu0 0.0
    %3147 = vmatmul.mubr.f32.gmra.mrb[0].mxu0 %v3034
    %v3148 = vpop.f32.mrb[0].mxu0
    %v3149 = vadd.f32 0.0, %v3148
    %v3150 = vpop.f32.mrb[0].mxu0
    %3151 = vmatprep.mubr.f32.mxu0 0.0
    %3152 = vmatmul.mubr.f32.gmra.mrb[0].mxu0 %v3035
    %v3153 = vpop.f32.mrb[0].mxu0
    %v3154 = vadd.f32 0.0, %v3153
    %v3155 = vpop.f32.mrb[0].mxu0
    %3156 = vmatprep.mubr.f32.mxu0 0.0
    %3157 = vmatmul.mubr.f32.gmra.mrb[0].mxu0 %v3036
    %v3158 = vpop.f32.mrb[0].mxu0
    %v3159 = vadd.f32 0.0, %v3158
    %v3160 = vpop.f32.mrb[0].mxu0
    %3161 = vmatprep.mubr.f32.mxu0 0.0
    %3162 = vmatmul.mubr.f32.gmra.mrb[0].mxu0 %v3037
    %v3163 = vpop.f32.mrb[0].mxu0
    %v3164 = vadd.f32 0.0, %v3163
    %v3165 = vpop.f32.mrb[0].mxu0
    %3166 = vmatprep.mubr.f32.mxu0 0.0
    %3167 = vmatmul.mubr.f32.gmra.mrb[0].mxu0 %v3038
    %v3168 = vpop.f32.mrb[0].mxu0
    %v3169 = vadd.f32 0.0, %v3168
    %v3170 = vpop.f32.mrb[0].mxu0
    %3171 = vmatprep.mubr.f32.mxu0 0.0
    %3172 = vmatmul.mubr.f32.gmra.mrb[0].mxu0 %v3039
    %v3173 = vpop.f32.mrb[0].mxu0
    %v3174 = vadd.f32 0.0, %v3173
    %v3175 = vpop.f32.mrb[0].mxu0
    %3176 = vmatprep.mubr.f32.mxu0 0.0
    %3177 = vmatmul.mubr.f32.gmra.mrb[0].mxu0 %v3040
    %v3178 = vpop.f32.mrb[0].mxu0
    %v3179 = vadd.f32 0.0, %v3178
    %v3180 = vpop.f32.mrb[0].mxu0
    %3181 = vmatprep.mubr.f32.mxu0 0.0
    %3182 = vmatmul.mubr.f32.gmra.mrb[0].mxu0 %v3041
    %v3183 = vpop.f32.mrb[0].mxu0
    %v3184 = vadd.f32 0.0, %v3183
    %v3185 = vpop.f32.mrb[0].mxu0
    %3186 = vdwg.mxu0
    %v3188 = vlaneseq
    %v3189 = vshrl.u32 %v3188, 7
    %v3190 = vsub.s32 0, %v3189
    %v3191 = vrot.slane %v2623, %v3190
    %3193 = vmatprep.subr.mxu0 0.0
    %3194 = vmatpush1.msra.mxu0 %v3109
    %3195 = vmatprep.subr.mxu0 0.0
    %3196 = vmatpush1.msra.mxu0 %v3114
    %3197 = vmatprep.subr.mxu0 0.0
    %3198 = vmatpush1.msra.mxu0 %v3119
    %3199 = vmatprep.subr.mxu0 0.0
    %3200 = vmatpush1.msra.mxu0 %v3124
    %3201 = vmatprep.subr.mxu0 0.0
    %3202 = vmatpush1.msra.mxu0 %v3129
    %3203 = vmatprep.subr.mxu0 0.0
    %3204 = vmatpush1.msra.mxu0 %v3134
    %3205 = vmatprep.subr.mxu0 0.0
    %3206 = vmatpush1.msra.mxu0 %v3139
    %3207 = vmatprep.subr.mxu0 0.0
    %3208 = vmatpush1.msra.mxu0 %v3144
    %3209 = vmatprep.subr.mxu0 0.0
    %3210 = vmatpush1.msra.mxu0 %v3149
    %3211 = vmatprep.subr.mxu0 0.0
    %3212 = vmatpush1.msra.mxu0 %v3154
    %3213 = vmatprep.subr.mxu0 0.0
    %3214 = vmatpush1.msra.mxu0 %v3159
    %3215 = vmatprep.subr.mxu0 0.0
    %3216 = vmatpush1.msra.mxu0 %v3164
    %3217 = vmatprep.subr.mxu0 0.0
    %3218 = vmatpush1.msra.mxu0 %v3169
    %3219 = vmatprep.subr.mxu0 0.0
    %3220 = vmatpush1.msra.mxu0 %v3174
    %3221 = vmatprep.subr.mxu0 0.0
    %3222 = vmatpush1.msra.mxu0 %v3179
    %3223 = vmatprep.subr.mxu0 0.0
    %3224 = vmatpush1.msra.mxu0 %v3184
    %3225 = vmatprep.subr.mxu0 0.0
    %3226 = vmatpush1.msra.mxu0 0.0
    %3227 = vmatprep.subr.mxu0 0.0
    %3228 = vmatpush1.msra.mxu0 0.0
    %3229 = vmatprep.subr.mxu0 0.0
    %3230 = vmatpush1.msra.mxu0 0.0
    %3231 = vmatprep.subr.mxu0 0.0
    %3232 = vmatpush1.msra.mxu0 0.0
    %3233 = vmatprep.subr.mxu0 0.0
    %3234 = vmatpush1.msra.mxu0 0.0
    %3235 = vmatprep.subr.mxu0 0.0
    %3236 = vmatpush1.msra.mxu0 0.0
    %3237 = vmatprep.subr.mxu0 0.0
    %3238 = vmatpush1.msra.mxu0 0.0
    %3239 = vmatprep.subr.mxu0 0.0
    %3240 = vmatpush1.msra.mxu0 0.0
    %3241 = vmatprep.subr.mxu0 0.0
    %3242 = vmatpush1.msra.mxu0 0.0
    %3243 = vmatprep.subr.mxu0 0.0
    %3244 = vmatpush1.msra.mxu0 0.0
    %3245 = vmatprep.subr.mxu0 0.0
    %3246 = vmatpush1.msra.mxu0 0.0
    %3247 = vmatprep.subr.mxu0 0.0
    %3248 = vmatpush1.msra.mxu0 0.0
    %3249 = vmatprep.subr.mxu0 0.0
    %3250 = vmatpush1.msra.mxu0 0.0
    %3251 = vmatprep.subr.mxu0 0.0
    %3252 = vmatpush1.msra.mxu0 0.0
    %3253 = vmatprep.subr.mxu0 0.0
    %3254 = vmatpush1.msra.mxu0 0.0
    %3255 = vmatprep.subr.mxu0 0.0
    %3256 = vmatpush1.msra.mxu0 0.0
    %3257 = vmatprep.mubr.f32.mxu0 0.0
    %3258 = vmatmul.mubr.f32.gmra.mrb[0].mxu0 %v98
    %v3259 = vpop.f32.mrb[0].mxu0
    %v3260 = vadd.f32 %v3191, %v3259
    %v3261 = vpop.f32.mrb[0].mxu0
    %3262 = vmatprep.mubr.f32.mxu0 0.0
    %3263 = vmatmul.mubr.f32.gmra.mrb[0].mxu0 %v99
    %v3264 = vpop.f32.mrb[0].mxu0
    %v3265 = vadd.f32 %v3191, %v3264
    %v3266 = vpop.f32.mrb[0].mxu0
    %3267 = vmatprep.mubr.f32.mxu0 0.0
    %3268 = vmatmul.mubr.f32.gmra.mrb[0].mxu0 %v100
    %v3269 = vpop.f32.mrb[0].mxu0
    %v3270 = vadd.f32 %v3191, %v3269
    %v3271 = vpop.f32.mrb[0].mxu0
    %3272 = vmatprep.mubr.f32.mxu0 0.0
    %3273 = vmatmul.mubr.f32.gmra.mrb[0].mxu0 %v101
    %v3274 = vpop.f32.mrb[0].mxu0
    %v3275 = vadd.f32 %v3191, %v3274
    %v3276 = vpop.f32.mrb[0].mxu0
    %3277 = vmatprep.mubr.f32.mxu0 0.0
    %3278 = vmatmul.mubr.f32.gmra.mrb[0].mxu0 %v102
    %v3279 = vpop.f32.mrb[0].mxu0
    %v3280 = vadd.f32 %v3191, %v3279
    %v3281 = vpop.f32.mrb[0].mxu0
    %3282 = vmatprep.mubr.f32.mxu0 0.0
    %3283 = vmatmul.mubr.f32.gmra.mrb[0].mxu0 %v103
    %v3284 = vpop.f32.mrb[0].mxu0
    %v3285 = vadd.f32 %v3191, %v3284
    %v3286 = vpop.f32.mrb[0].mxu0
    %3287 = vmatprep.mubr.f32.mxu0 0.0
    %3288 = vmatmul.mubr.f32.gmra.mrb[0].mxu0 %v104
    %v3289 = vpop.f32.mrb[0].mxu0
    %v3290 = vadd.f32 %v3191, %v3289
    %v3291 = vpop.f32.mrb[0].mxu0
    %3292 = vmatprep.mubr.f32.mxu0 0.0
    %3293 = vmatmul.mubr.f32.gmra.mrb[0].mxu0 %v105
    %v3294 = vpop.f32.mrb[0].mxu0
    %v3295 = vadd.f32 %v3191, %v3294
    %v3296 = vpop.f32.mrb[0].mxu0
    %3297 = vmatprep.mubr.f32.mxu0 0.0
    %3298 = vmatmul.mubr.f32.gmra.mrb[0].mxu0 %v106
    %v3299 = vpop.f32.mrb[0].mxu0
    %v3300 = vadd.f32 %v3191, %v3299
    %v3301 = vpop.f32.mrb[0].mxu0
    %3302 = vmatprep.mubr.f32.mxu0 0.0
    %3303 = vmatmul.mubr.f32.gmra.mrb[0].mxu0 %v107
    %v3304 = vpop.f32.mrb[0].mxu0
    %v3305 = vadd.f32 %v3191, %v3304
    %v3306 = vpop.f32.mrb[0].mxu0
    %3307 = vmatprep.mubr.f32.mxu0 0.0
    %3308 = vmatmul.mubr.f32.gmra.mrb[0].mxu0 %v108
    %v3309 = vpop.f32.mrb[0].mxu0
    %v3310 = vadd.f32 %v3191, %v3309
    %v3311 = vpop.f32.mrb[0].mxu0
    %3312 = vmatprep.mubr.f32.mxu0 0.0
    %3313 = vmatmul.mubr.f32.gmra.mrb[0].mxu0 %v109
    %v3314 = vpop.f32.mrb[0].mxu0
    %v3315 = vadd.f32 %v3191, %v3314
    %v3316 = vpop.f32.mrb[0].mxu0
    %3317 = vmatprep.mubr.f32.mxu0 0.0
    %3318 = vmatmul.mubr.f32.gmra.mrb[0].mxu0 %v110
    %v3319 = vpop.f32.mrb[0].mxu0
    %v3320 = vadd.f32 %v3191, %v3319
    %v3321 = vpop.f32.mrb[0].mxu0
    %3322 = vmatprep.mubr.f32.mxu0 0.0
    %3323 = vmatmul.mubr.f32.gmra.mrb[0].mxu0 %v111
    %v3324 = vpop.f32.mrb[0].mxu0
    %v3325 = vadd.f32 %v3191, %v3324
    %v3326 = vpop.f32.mrb[0].mxu0
    %3327 = vmatprep.mubr.f32.mxu0 0.0
    %3328 = vmatmul.mubr.f32.gmra.mrb[0].mxu0 %v112
    %v3329 = vpop.f32.mrb[0].mxu0
    %v3330 = vadd.f32 %v3191, %v3329
    %v3331 = vpop.f32.mrb[0].mxu0
    %3332 = vmatprep.mubr.f32.mxu0 0.0
    %3333 = vmatmul.mubr.f32.gmra.mrb[0].mxu0 %v113
    %v3334 = vpop.f32.mrb[0].mxu0
    %v3335 = vadd.f32 %v3191, %v3334
    %v3336 = vpop.f32.mrb[0].mxu0
    %3337 = vdwg.mxu0
    %vm3338 = vcmp.ge.f32.partialorder %v3260, 0.0
    %vm3339 = vcmp.ge.f32.partialorder %v3265, 0.0
    %vm3340 = vcmp.ge.f32.partialorder %v3270, 0.0
    %vm3341 = vcmp.ge.f32.partialorder %v3275, 0.0
    %vm3342 = vcmp.ge.f32.partialorder %v3280, 0.0
    %vm3343 = vcmp.ge.f32.partialorder %v3285, 0.0
    %vm3344 = vcmp.ge.f32.partialorder %v3290, 0.0
    %vm3345 = vcmp.ge.f32.partialorder %v3295, 0.0
    %vm3346 = vcmp.ge.f32.partialorder %v3300, 0.0
    %vm3347 = vcmp.ge.f32.partialorder %v3305, 0.0
    %vm3348 = vcmp.ge.f32.partialorder %v3310, 0.0
    %vm3349 = vcmp.ge.f32.partialorder %v3315, 0.0
    %vm3350 = vcmp.ge.f32.partialorder %v3320, 0.0
    %vm3351 = vcmp.ge.f32.partialorder %v3325, 0.0
    %vm3352 = vcmp.ge.f32.partialorder %v3330, 0.0
    %vm3353 = vcmp.ge.f32.partialorder %v3335, 0.0
    %v3354 = vmul.f32 %v3260, 0.01
    %v3355 = vmul.f32 %v3265, 0.01
    %v3356 = vmul.f32 %v3270, 0.01
    %v3357 = vmul.f32 %v3275, 0.01
    %v3358 = vmul.f32 %v3280, 0.01
    %v3359 = vmul.f32 %v3285, 0.01
    %v3360 = vmul.f32 %v3290, 0.01
    %v3361 = vmul.f32 %v3295, 0.01
    %v3362 = vmul.f32 %v3300, 0.01
    %v3363 = vmul.f32 %v3305, 0.01
    %v3364 = vmul.f32 %v3310, 0.01
    %v3365 = vmul.f32 %v3315, 0.01
    %v3366 = vmul.f32 %v3320, 0.01
    %v3367 = vmul.f32 %v3325, 0.01
    %v3368 = vmul.f32 %v3330, 0.01
    %v3369 = vmul.f32 %v3335, 0.01
    %v3370 = vsel %vm3338, %v3260, %v3354
    %v3371 = vsel %vm3339, %v3265, %v3355
    %v3372 = vsel %vm3340, %v3270, %v3356
    %v3373 = vsel %vm3341, %v3275, %v3357
    %v3374 = vsel %vm3342, %v3280, %v3358
    %v3375 = vsel %vm3343, %v3285, %v3359
    %v3376 = vsel %vm3344, %v3290, %v3360
    %v3377 = vsel %vm3345, %v3295, %v3361
    %v3378 = vsel %vm3346, %v3300, %v3362
    %v3379 = vsel %vm3347, %v3305, %v3363
    %v3380 = vsel %vm3348, %v3310, %v3364
    %v3381 = vsel %vm3349, %v3315, %v3365
    %v3382 = vsel %vm3350, %v3320, %v3366
    %v3383 = vsel %vm3351, %v3325, %v3367
    %v3384 = vsel %vm3352, %v3330, %v3368
    %v3385 = vsel %vm3353, %v3335, %v3369
    %3386 = vst [vmem:[#allocation10] sm:$0xff] %v3370
    %3387 = vst [vmem:[#allocation10 + $0x8] sm:$0xff] %v3371
    %3388 = vst [vmem:[#allocation10 + $0x10] sm:$0xff] %v3372
    %3389 = vst [vmem:[#allocation10 + $0x18] sm:$0xff] %v3373
    %3390 = vst [vmem:[#allocation10 + $0x20] sm:$0xff] %v3374
    %3391 = vst [vmem:[#allocation10 + $0x28] sm:$0xff] %v3375
    %3392 = vst [vmem:[#allocation10 + $0x30] sm:$0xff] %v3376
    %3393 = vst [vmem:[#allocation10 + $0x38] sm:$0xff] %v3377
    %3394 = vst [vmem:[#allocation10 + $0x40] sm:$0xff] %v3378
    %3395 = vst [vmem:[#allocation10 + $0x48] sm:$0xff] %v3379
    %3396 = vst [vmem:[#allocation10 + $0x50] sm:$0xff] %v3380
    %3397 = vst [vmem:[#allocation10 + $0x58] sm:$0xff] %v3381
    %3398 = vst [vmem:[#allocation10 + $0x60] sm:$0xff] %v3382
    %3399 = vst [vmem:[#allocation10 + $0x68] sm:$0xff] %v3383
    %3400 = vst [vmem:[#allocation10 + $0x70] sm:$0xff] %v3384
    %3401 = vst [vmem:[#allocation10 + $0x78] sm:$0xff] %v3385
    // Predicated region
    $region46: #{tpu_custom_call.1} parent=1 // pred_check
      _
    $region47: #{tpu_custom_call.1} parent=1 // pred_check_branch
      %3403 = sbr.rel (0) target = $region49
    $region48: #{tpu_custom_call.1} parent=1 // pred_region
      %s3405 = ssub.s32 2048, 2048
      %3406 = vsyncadd [#allocation4], %s3405
      %s3407 = sshll.u32 [#allocation10], 4
      %s3408 = int_to_ptr.vmem [resolvable:$true] %s3407
      %3413 = dma.vmem_to_hbm [thread:$0]  %s3408, 2048, %s7, [#allocation4], 128, 128, 8
    $region49: #{tpu_custom_call.1} parent=1 // pred_fallthru
      _
    // Predicated region
    $region50: #{tpu_custom_call.1} parent=1 // pred_check
      _
    $region51: #{tpu_custom_call.1} parent=1 // pred_check_branch
      %3415 = sbr.rel (0) target = $region53
    $region52: #{tpu_custom_call.1} parent=1 // pred_region
      %3416 = dma.done [#allocation4], 2048
    $region53: #{tpu_custom_call.1} parent=1 // pred_fallthru
      _
    %3417 = vsyncpa [#allocation3], 1
    %3418 = vsyncpa [#allocation6], 1
    %3419 = vsyncpa [#allocation9], 1
    %3420 = vsyncpa [#allocation4], 1

</llo_original>
